<compile_context>
chip_gen: v7x
topology: tpu7x:2x2x1
jax: 0.10.0
libtpu: 0.0.40
codegen_flags: <defaults>
</compile_context>

<pallas_src>
import math

import jax
import jax.numpy as jnp
from jax.experimental import pallas as pl
from jax.experimental.pallas import tpu as pltpu

D_MODEL = 64
N_HEAD = 4
HEAD_DIM = D_MODEL // N_HEAD
DIM_FF = 128
N_LAYERS = 2
LN_EPS = 1e-5
LANE = 128


def _layer_norm(x, w, b):
    mean = jnp.mean(x, axis=-1, keepdims=True)
    var = jnp.mean((x - mean) ** 2, axis=-1, keepdims=True)
    return (x - mean) * jax.lax.rsqrt(var + LN_EPS) * w + b


def _softmax(x):
    m = jnp.max(x, axis=-1, keepdims=True)
    e = jnp.exp(x - m)
    return e / jnp.sum(e, axis=-1, keepdims=True)


def _pad_dim(d, lane=LANE):
    return ((d + lane - 1) // lane) * lane


def mask_generator_kernel(
    x_ref,
    proj_w_ref, proj_b_ref,
    qkv_w_ref, qkv_b_ref,
    out_w_ref,
    ff1_w_ref, ff1_b_ref,
    ff2_w_ref,
    vec64_ref,                      # (L, 6, 64): out_b, ln1_w, ln1_b, ff2_b, ln2_w, ln2_b
    mask_w_ref, mask_b_ref,         # padded to 128 output lanes
    o_ref,
):
    Bt, S, Din = x_ref.shape
    out_pad = o_ref.shape[-1]
    R = Bt * S
    mm = proj_w_ref.dtype           # matmul-operand dtype (float32 or bfloat16)

    # All GEMMs operate on the full (Bt*S, .) row block.
    x2d = x_ref[...].reshape(R, Din).astype(mm)
    h = jnp.dot(x2d, proj_w_ref[...], preferred_element_type=jnp.float32) + proj_b_ref[...]

    for layer in range(N_LAYERS):   # static unroll over the 2 encoder layers
        h_mm = h.astype(mm)

        v64 = vec64_ref[layer]      # (6, 64) f32 packed per-layer vectors
        out_b = v64[0:1]
        ln1_w, ln1_b = v64[1:2], v64[2:3]
        ff2_b = v64[3:4]
        ln2_w, ln2_b = v64[4:5], v64[5:6]

        # Single fused QKV GEMM; Q columns already carry the 1/sqrt(head_dim) scale.
        qkv = (jnp.dot(h_mm, qkv_w_ref[layer], preferred_element_type=jnp.float32)
               + qkv_b_ref[layer])                                   # (R, 192)
        q = qkv[:, :D_MODEL].reshape(Bt, S, D_MODEL)                 # 64-lane slices +
        k = qkv[:, D_MODEL:2 * D_MODEL].reshape(Bt, S, D_MODEL)      # trivial sublane regroup
        v = qkv[:, 2 * D_MODEL:].reshape(Bt, S, D_MODEL)

        # Stack the four 16-lane head slices along the leading axis so attention
        # runs as ONE batched einsum / softmax / einsum over (N_HEAD*Bt, S, .).
        qh = jnp.concatenate(
            [q[:, :, i * HEAD_DIM:(i + 1) * HEAD_DIM] for i in range(N_HEAD)], axis=0)
        kh = jnp.concatenate(
            [k[:, :, i * HEAD_DIM:(i + 1) * HEAD_DIM] for i in range(N_HEAD)], axis=0)
        vh = jnp.concatenate(
            [v[:, :, i * HEAD_DIM:(i + 1) * HEAD_DIM] for i in range(N_HEAD)], axis=0)

        # TODO(synk): if profiling shows XLU saturation, dump MLIR via
        # pl.lower_as_mlir to confirm this einsum does not emit per-batch K
        # transposes; if it does, materialize K once per layer in transposed layout.
        scores = jnp.einsum("bqd,bkd->bqk", qh.astype(mm), kh.astype(mm),
                            preferred_element_type=jnp.float32)      # (H*Bt, S, S)
        p = _softmax(scores)
        ctx_h = jnp.einsum("bqk,bkd->bqd", p.astype(mm), vh.astype(mm),
                           preferred_element_type=jnp.float32)        # (H*Bt, S, 16)
        ctx = jnp.concatenate(
            [ctx_h[i * Bt:(i + 1) * Bt] for i in range(N_HEAD)], axis=-1
        ).reshape(R, D_MODEL)

        attn_out = (jnp.dot(ctx.astype(mm), out_w_ref[layer],
                            preferred_element_type=jnp.float32) + out_b)
        # dropout == identity in eval mode
        h = _layer_norm(h + attn_out, ln1_w, ln1_b)

        ff = (jnp.dot(h.astype(mm), ff1_w_ref[layer],
                      preferred_element_type=jnp.float32) + ff1_b_ref[layer])
        ff = jnp.maximum(ff, 0.0)   # ReLU (PyTorch default activation)
        ff = (jnp.dot(ff.astype(mm), ff2_w_ref[layer],
                      preferred_element_type=jnp.float32) + ff2_b)
        h = _layer_norm(h + ff, ln2_w, ln2_b)

    # mask_fc with 128-lane-padded weights -> full-width, unmasked output store.
    logits = (jnp.dot(h.astype(mm), mask_w_ref[...],
                      preferred_element_type=jnp.float32) + mask_b_ref[...])
    o_ref[...] = jax.nn.sigmoid(logits).reshape(Bt, S, out_pad)


def _weight_spec(shape):
    nd = len(shape)
    return pl.BlockSpec(shape, lambda i, _nd=nd: (0,) * _nd)


def _choose_batch_tile(B, S, max_rows=512):
    """Largest divisor Bt of B with Bt*S <= max_rows, preferring >= 2 grid steps
    (Bt <= B//2) whenever B > 1 so both v7x TensorCores get work.  max_rows=512
    keeps the GEMM M-fill reasonable on v6e/v7x; the per-step activation
    footprint at R=512 is a few hundred KB, far below VMEM on any generation.
    """
    cap = B // 2 if B > 1 else B
    best = 1
    for d in range(1, B + 1):
        if B % d == 0 and d <= cap and d * S <= max_rows:
            best = d
    return best


def prepare_weights(params, mm_dtype=jnp.bfloat16):
    """Host-side, one-time parameter prep.

    Keeps the attention in_proj FUSED as one (D, 3D) matrix with the
    1/sqrt(head_dim) scale folded into the Q (first D_MODEL) columns, packs the
    six per-layer 64-wide bias/LN vectors into one (L, 6, 64) array, zero-pads
    the mask_fc output dim to a 128-lane multiple, and casts matmul weights to
    `mm_dtype` (biases / LayerNorm stay float32).
    """
    scale = 1.0 / math.sqrt(HEAD_DIM)
    col_scale = jnp.concatenate(
        [jnp.full((D_MODEL,), scale, jnp.float32),
         jnp.ones((2 * D_MODEL,), jnp.float32)], axis=0)
    qkv_w = params["attn_in_w"] * col_scale          # (L, D, 3D)
    qkv_b = params["attn_in_b"] * col_scale          # (L, 1, 3D)

    vec64 = jnp.concatenate(
        [params["attn_out_b"],
         params["ln1_w"], params["ln1_b"],
         params["ff2_b"],
         params["ln2_w"], params["ln2_b"]], axis=1)  # (L, 6, 64)

    Din = params["mask_w"].shape[1]
    out_pad = _pad_dim(Din)
    mask_w = jnp.pad(params["mask_w"], ((0, 0), (0, out_pad - Din)))
    mask_b = jnp.pad(params["mask_b"], ((0, 0), (0, out_pad - Din)))

    c = lambda w: w.astype(mm_dtype)
    return [
        c(params["proj_w"]), params["proj_b"],
        c(qkv_w), qkv_b,
        c(params["attn_out_w"]),
        c(params["ff1_w"]), params["ff1_b"],
        c(params["ff2_w"]),
        vec64,
        c(mask_w), mask_b,
    ]


def mask_generator(x, weights):
    """x: (B, S, input_dim) float32; weights: output of prepare_weights()."""
    B, S, Din = x.shape
    Bt = _choose_batch_tile(B, S)
    out_pad = _pad_dim(Din)

    in_specs = [pl.BlockSpec((Bt, S, Din), lambda i: (i, 0, 0))]
    in_specs += [_weight_spec(w.shape) for w in weights]

    out_padded = pl.pallas_call(
        mask_generator_kernel,
        out_shape=jax.ShapeDtypeStruct((B, S, out_pad), jnp.float32),
        grid_spec=pltpu.PrefetchScalarGridSpec(
            num_scalar_prefetch=0,
            grid=(B // Bt,),
            in_specs=in_specs,
            out_specs=pl.BlockSpec((Bt, S, out_pad), lambda i: (i, 0, 0)),
        ),
        compiler_params=pltpu.CompilerParams(
            dimension_semantics=("parallel",),
        ),
    )(x, *weights)
    return out_padded[..., :Din]


def init_params(key, input_dim):
    """Deterministic synthetic parameters (not a checkpoint load)."""
    keys = jax.random.split(key, 12)

    def w(k, shape, fan_in):
        return (jax.random.normal(k, shape, jnp.float32) / math.sqrt(fan_in)).astype(jnp.float32)

    return {
        "proj_w": w(keys[0], (input_dim, D_MODEL), input_dim),
        "proj_b": w(keys[1], (1, D_MODEL), D_MODEL),
        "attn_in_w": w(keys[2], (N_LAYERS, D_MODEL, 3 * D_MODEL), D_MODEL),
        "attn_in_b": w(keys[3], (N_LAYERS, 1, 3 * D_MODEL), D_MODEL),
        "attn_out_w": w(keys[4], (N_LAYERS, D_MODEL, D_MODEL), D_MODEL),
        "attn_out_b": w(keys[5], (N_LAYERS, 1, D_MODEL), D_MODEL),
        "ln1_w": jnp.ones((N_LAYERS, 1, D_MODEL), jnp.float32),
        "ln1_b": jnp.zeros((N_LAYERS, 1, D_MODEL), jnp.float32),
        "ln2_w": jnp.ones((N_LAYERS, 1, D_MODEL), jnp.float32),
        "ln2_b": jnp.zeros((N_LAYERS, 1, D_MODEL), jnp.float32),
        "ff1_w": w(keys[6], (N_LAYERS, D_MODEL, DIM_FF), D_MODEL),
        "ff1_b": w(keys[7], (N_LAYERS, 1, DIM_FF), DIM_FF),
        "ff2_w": w(keys[8], (N_LAYERS, DIM_FF, D_MODEL), DIM_FF),
        "ff2_b": w(keys[9], (N_LAYERS, 1, D_MODEL), D_MODEL),
        "mask_w": w(keys[10], (D_MODEL, input_dim), D_MODEL),
        "mask_b": w(keys[11], (1, input_dim), input_dim),
    }


def mask_generator_ref(x, params):
    """Pure-JAX reference (mirrors PyTorch eval-mode semantics) for validation."""
    def one_seq(xs):
        h = xs @ params["proj_w"] + params["proj_b"]
        scale = 1.0 / math.sqrt(HEAD_DIM)
        for layer in range(N_LAYERS):
            qkv = h @ params["attn_in_w"][layer] + params["attn_in_b"][layer]
            q, k, v = jnp.split(qkv, 3, axis=-1)
            outs = []
            for hh in range(N_HEAD):
                sl = slice(hh * HEAD_DIM, (hh + 1) * HEAD_DIM)
                s = (q[:, sl] @ k[:, sl].T) * scale
                a = jax.nn.softmax(s, axis=-1)
                outs.append(a @ v[:, sl])
            ao = jnp.concatenate(outs, axis=-1)
            ao = ao @ params["attn_out_w"][layer] + params["attn_out_b"][layer]
            h = _layer_norm(h + ao, params["ln1_w"][layer], params["ln1_b"][layer])
            ff = jnp.maximum(h @ params["ff1_w"][layer] + params["ff1_b"][layer], 0.0)
            ff = ff @ params["ff2_w"][layer] + params["ff2_b"][layer]
            h = _layer_norm(h + ff, params["ln2_w"][layer], params["ln2_b"][layer])
        return jax.nn.sigmoid(h @ params["mask_w"] + params["mask_b"])

    return jax.vmap(one_seq)(x)


if __name__ == "__main__":
    key = jax.random.PRNGKey(0)
    B, S, INPUT_DIM = 2, 8, 32  # batch=2, seq_len=8, input_dim=32

    k_x, k_p = jax.random.split(key)
    x = jax.random.normal(k_x, (B, S, INPUT_DIM), jnp.float32)
    params = init_params(k_p, INPUT_DIM)
    ref = mask_generator_ref(x, params)

    # float32 matmul-operand path (bit-faithful correctness check).
    w_f32 = prepare_weights(params, jnp.float32)
    out_f32 = jax.block_until_ready(jax.jit(mask_generator)(x, w_f32))
    assert out_f32.shape == (B, S, INPUT_DIM)
    assert jnp.allclose(out_f32, ref, atol=1e-5, rtol=1e-5), "f32 Pallas output mismatch"

    # bfloat16 matmul-operand path — the recommended default on v5e / v6e / v7x
    # (bf16-native MXU operands, f32 accumulation, f32 LayerNorm/softmax/sigmoid).
    w_bf16 = prepare_weights(params, jnp.bfloat16)
    out_bf16 = jax.block_until_ready(jax.jit(mask_generator)(x, w_bf16))
    assert jnp.allclose(out_bf16, ref, atol=5e-2, rtol=5e-2), "bf16 Pallas output mismatch"

    print("KERNEL_OK")
</pallas_src>

<mosaic_0001>
module attributes {stable_mosaic.version = 11 : i64} {
  func.func @mask_generator_kernel(%arg0: i32, %arg1: memref<1x8x32xf32, #tpu.memory_space<vmem>>, %arg2: memref<32x64xf32, #tpu.memory_space<vmem>>, %arg3: memref<1x64xf32, #tpu.memory_space<vmem>>, %arg4: memref<2x64x192xf32, #tpu.memory_space<vmem>>, %arg5: memref<2x1x192xf32, #tpu.memory_space<vmem>>, %arg6: memref<2x64x64xf32, #tpu.memory_space<vmem>>, %arg7: memref<2x64x128xf32, #tpu.memory_space<vmem>>, %arg8: memref<2x1x128xf32, #tpu.memory_space<vmem>>, %arg9: memref<2x128x64xf32, #tpu.memory_space<vmem>>, %arg10: memref<2x6x64xf32, #tpu.memory_space<vmem>>, %arg11: memref<64x128xf32, #tpu.memory_space<vmem>>, %arg12: memref<1x128xf32, #tpu.memory_space<vmem>>, %arg13: memref<1x8x128xf32, #tpu.memory_space<vmem>>) attributes {dimension_semantics = [#tpu.dimension_semantics<parallel>], iteration_bounds = array<i64: 2>, scalar_prefetch = 0 : i64, scratch_operands = 0 : i64, tpu.core_type = #tpu.core_type<tc>, window_params = [{transform_indices = @transform_0, window_bounds = array<i64: 1, 8, 32>}, {pipeline_mode = #tpu.pipeline_mode<synchronous>, transform_indices = @transform_1, window_bounds = array<i64: 32, 64>}, {pipeline_mode = #tpu.pipeline_mode<synchronous>, transform_indices = @transform_2, window_bounds = array<i64: 1, 64>}, {pipeline_mode = #tpu.pipeline_mode<synchronous>, transform_indices = @transform_3, window_bounds = array<i64: 2, 64, 192>}, {pipeline_mode = #tpu.pipeline_mode<synchronous>, transform_indices = @transform_4, window_bounds = array<i64: 2, 1, 192>}, {pipeline_mode = #tpu.pipeline_mode<synchronous>, transform_indices = @transform_5, window_bounds = array<i64: 2, 64, 64>}, {pipeline_mode = #tpu.pipeline_mode<synchronous>, transform_indices = @transform_6, window_bounds = array<i64: 2, 64, 128>}, {pipeline_mode = #tpu.pipeline_mode<synchronous>, transform_indices = @transform_7, window_bounds = array<i64: 2, 1, 128>}, {pipeline_mode = #tpu.pipeline_mode<synchronous>, transform_indices = @transform_8, window_bounds = array<i64: 2, 128, 64>}, {pipeline_mode = #tpu.pipeline_mode<synchronous>, transform_indices = @transform_9, window_bounds = array<i64: 2, 6, 64>}, {pipeline_mode = #tpu.pipeline_mode<synchronous>, transform_indices = @transform_10, window_bounds = array<i64: 64, 128>}, {pipeline_mode = #tpu.pipeline_mode<synchronous>, transform_indices = @transform_11, window_bounds = array<i64: 1, 128>}, {transform_indices = @transform_12, window_bounds = array<i64: 1, 8, 128>}]} {
    %c0 = arith.constant 0 : index
    %c0_0 = arith.constant 0 : index
    %c0_1 = arith.constant 0 : index
    %0 = vector.load %arg1[%c0, %c0_0, %c0_1] : memref<1x8x32xf32, #tpu.memory_space<vmem>>, vector<1x8x32xf32>
    %1 = vector.shape_cast %0 : vector<1x8x32xf32> to vector<8x32xf32>
    %c0_2 = arith.constant 0 : index
    %c0_3 = arith.constant 0 : index
    %2 = vector.load %arg2[%c0_2, %c0_3] : memref<32x64xf32, #tpu.memory_space<vmem>>, vector<32x64xf32>
    %cst = arith.constant dense<0.000000e+00> : vector<8x64xf32>
    %3 = tpu.matmul %1, %2, %cst {dimension_numbers = #tpu.dot_dimension_numbers<[1], [0], [0], [1], [0, 0, 1, 1], [], []>} : vector<8x32xf32>, vector<32x64xf32>, vector<8x64xf32> -> vector<8x64xf32>
    %c0_4 = arith.constant 0 : index
    %c0_5 = arith.constant 0 : index
    %4 = vector.load %arg3[%c0_4, %c0_5] : memref<1x64xf32, #tpu.memory_space<vmem>>, vector<1x64xf32>
    %5 = vector.broadcast %4 : vector<1x64xf32> to vector<8x64xf32>
    %6 = arith.addf %3, %5 : vector<8x64xf32>
    %c0_6 = arith.constant 0 : index
    %c0_7 = arith.constant 0 : index
    %c0_8 = arith.constant 0 : index
    %7 = vector.load %arg10[%c0_6, %c0_7, %c0_8] : memref<2x6x64xf32, #tpu.memory_space<vmem>>, vector<1x6x64xf32>
    %8 = vector.shape_cast %7 : vector<1x6x64xf32> to vector<6x64xf32>
    %9 = vector.extract_strided_slice %8 {offsets = [0, 0], sizes = [1, 64], strides = [1, 1]} : vector<6x64xf32> to vector<1x64xf32>
    %10 = vector.extract_strided_slice %8 {offsets = [1, 0], sizes = [1, 64], strides = [1, 1]} : vector<6x64xf32> to vector<1x64xf32>
    %11 = vector.extract_strided_slice %8 {offsets = [2, 0], sizes = [1, 64], strides = [1, 1]} : vector<6x64xf32> to vector<1x64xf32>
    %12 = vector.extract_strided_slice %8 {offsets = [3, 0], sizes = [1, 64], strides = [1, 1]} : vector<6x64xf32> to vector<1x64xf32>
    %13 = vector.extract_strided_slice %8 {offsets = [4, 0], sizes = [1, 64], strides = [1, 1]} : vector<6x64xf32> to vector<1x64xf32>
    %14 = vector.extract_strided_slice %8 {offsets = [5, 0], sizes = [1, 64], strides = [1, 1]} : vector<6x64xf32> to vector<1x64xf32>
    %c0_9 = arith.constant 0 : index
    %c0_10 = arith.constant 0 : index
    %c0_11 = arith.constant 0 : index
    %15 = vector.load %arg4[%c0_9, %c0_10, %c0_11] : memref<2x64x192xf32, #tpu.memory_space<vmem>>, vector<1x64x192xf32>
    %16 = vector.shape_cast %15 : vector<1x64x192xf32> to vector<64x192xf32>
    %cst_12 = arith.constant dense<0.000000e+00> : vector<8x192xf32>
    %17 = tpu.matmul %6, %16, %cst_12 {dimension_numbers = #tpu.dot_dimension_numbers<[1], [0], [0], [1], [0, 0, 1, 1], [], []>} : vector<8x64xf32>, vector<64x192xf32>, vector<8x192xf32> -> vector<8x192xf32>
    %c0_13 = arith.constant 0 : index
    %c0_14 = arith.constant 0 : index
    %c0_15 = arith.constant 0 : index
    %18 = vector.load %arg5[%c0_13, %c0_14, %c0_15] : memref<2x1x192xf32, #tpu.memory_space<vmem>>, vector<1x1x192xf32>
    %19 = vector.shape_cast %18 : vector<1x1x192xf32> to vector<1x192xf32>
    %20 = vector.broadcast %19 : vector<1x192xf32> to vector<8x192xf32>
    %21 = arith.addf %17, %20 : vector<8x192xf32>
    %22 = vector.extract_strided_slice %21 {offsets = [0, 0], sizes = [8, 64], strides = [1, 1]} : vector<8x192xf32> to vector<8x64xf32>
    %23 = vector.shape_cast %22 : vector<8x64xf32> to vector<1x8x64xf32>
    %24 = vector.extract_strided_slice %21 {offsets = [0, 64], sizes = [8, 64], strides = [1, 1]} : vector<8x192xf32> to vector<8x64xf32>
    %25 = vector.shape_cast %24 : vector<8x64xf32> to vector<1x8x64xf32>
    %26 = vector.extract_strided_slice %21 {offsets = [0, 128], sizes = [8, 64], strides = [1, 1]} : vector<8x192xf32> to vector<8x64xf32>
    %27 = vector.shape_cast %26 : vector<8x64xf32> to vector<1x8x64xf32>
    %28 = vector.extract_strided_slice %23 {offsets = [0, 0, 0], sizes = [1, 8, 16], strides = [1, 1, 1]} : vector<1x8x64xf32> to vector<1x8x16xf32>
    %29 = vector.extract_strided_slice %23 {offsets = [0, 0, 16], sizes = [1, 8, 16], strides = [1, 1, 1]} : vector<1x8x64xf32> to vector<1x8x16xf32>
    %30 = vector.extract_strided_slice %23 {offsets = [0, 0, 32], sizes = [1, 8, 16], strides = [1, 1, 1]} : vector<1x8x64xf32> to vector<1x8x16xf32>
    %31 = vector.extract_strided_slice %23 {offsets = [0, 0, 48], sizes = [1, 8, 16], strides = [1, 1, 1]} : vector<1x8x64xf32> to vector<1x8x16xf32>
    %32 = tpu.concatenate %28, %29, %30, %31 in 0 : vector<1x8x16xf32>, vector<1x8x16xf32>, vector<1x8x16xf32>, vector<1x8x16xf32> -> vector<4x8x16xf32>
    %33 = vector.extract_strided_slice %25 {offsets = [0, 0, 0], sizes = [1, 8, 16], strides = [1, 1, 1]} : vector<1x8x64xf32> to vector<1x8x16xf32>
    %34 = vector.extract_strided_slice %25 {offsets = [0, 0, 16], sizes = [1, 8, 16], strides = [1, 1, 1]} : vector<1x8x64xf32> to vector<1x8x16xf32>
    %35 = vector.extract_strided_slice %25 {offsets = [0, 0, 32], sizes = [1, 8, 16], strides = [1, 1, 1]} : vector<1x8x64xf32> to vector<1x8x16xf32>
    %36 = vector.extract_strided_slice %25 {offsets = [0, 0, 48], sizes = [1, 8, 16], strides = [1, 1, 1]} : vector<1x8x64xf32> to vector<1x8x16xf32>
    %37 = tpu.concatenate %33, %34, %35, %36 in 0 : vector<1x8x16xf32>, vector<1x8x16xf32>, vector<1x8x16xf32>, vector<1x8x16xf32> -> vector<4x8x16xf32>
    %38 = vector.extract_strided_slice %27 {offsets = [0, 0, 0], sizes = [1, 8, 16], strides = [1, 1, 1]} : vector<1x8x64xf32> to vector<1x8x16xf32>
    %39 = vector.extract_strided_slice %27 {offsets = [0, 0, 16], sizes = [1, 8, 16], strides = [1, 1, 1]} : vector<1x8x64xf32> to vector<1x8x16xf32>
    %40 = vector.extract_strided_slice %27 {offsets = [0, 0, 32], sizes = [1, 8, 16], strides = [1, 1, 1]} : vector<1x8x64xf32> to vector<1x8x16xf32>
    %41 = vector.extract_strided_slice %27 {offsets = [0, 0, 48], sizes = [1, 8, 16], strides = [1, 1, 1]} : vector<1x8x64xf32> to vector<1x8x16xf32>
    %42 = tpu.concatenate %38, %39, %40, %41 in 0 : vector<1x8x16xf32>, vector<1x8x16xf32>, vector<1x8x16xf32>, vector<1x8x16xf32> -> vector<4x8x16xf32>
    "tpu.trace_start"() <{level = 10 : i32, message = "bqd,bkd->bqk"}> : () -> ()
    %cst_16 = arith.constant dense<0.000000e+00> : vector<4x8x8xf32>
    %43 = tpu.matmul %32, %37, %cst_16 {dimension_numbers = #tpu.dot_dimension_numbers<[2], [2], [1], [1], [0, 0, 0, 1, 1, 1], [0], [0]>} : vector<4x8x16xf32>, vector<4x8x16xf32>, vector<4x8x8xf32> -> vector<4x8x8xf32>
    "tpu.trace_stop"() : () -> ()
    %cst_17 = arith.constant dense<0xFF800000> : vector<4x8xf32>
    %44 = vector.multi_reduction <maximumf>, %43, %cst_17 [2] : vector<4x8x8xf32> to vector<4x8xf32>
    %45 = vector.shape_cast %44 : vector<4x8xf32> to vector<4x8x1xf32>
    %46 = vector.broadcast %45 : vector<4x8x1xf32> to vector<4x8x8xf32>
    %47 = arith.subf %43, %46 : vector<4x8x8xf32>
    %48 = math.exp %47 : vector<4x8x8xf32>
    %cst_18 = arith.constant dense<0.000000e+00> : vector<4x8xf32>
    %49 = vector.multi_reduction <add>, %48, %cst_18 [2] : vector<4x8x8xf32> to vector<4x8xf32>
    %50 = vector.shape_cast %49 : vector<4x8xf32> to vector<4x8x1xf32>
    %51 = vector.broadcast %50 : vector<4x8x1xf32> to vector<4x8x8xf32>
    %52 = arith.divf %48, %51 : vector<4x8x8xf32>
    "tpu.trace_start"() <{level = 10 : i32, message = "bqk,bkd->bqd"}> : () -> ()
    %cst_19 = arith.constant dense<0.000000e+00> : vector<4x8x16xf32>
    %53 = tpu.matmul %52, %42, %cst_19 {dimension_numbers = #tpu.dot_dimension_numbers<[2], [1], [1], [2], [0, 0, 0, 1, 1, 2], [0], [0]>} : vector<4x8x8xf32>, vector<4x8x16xf32>, vector<4x8x16xf32> -> vector<4x8x16xf32>
    "tpu.trace_stop"() : () -> ()
    %54 = vector.extract_strided_slice %53 {offsets = [0, 0, 0], sizes = [1, 8, 16], strides = [1, 1, 1]} : vector<4x8x16xf32> to vector<1x8x16xf32>
    %55 = vector.extract_strided_slice %53 {offsets = [1, 0, 0], sizes = [1, 8, 16], strides = [1, 1, 1]} : vector<4x8x16xf32> to vector<1x8x16xf32>
    %56 = vector.extract_strided_slice %53 {offsets = [2, 0, 0], sizes = [1, 8, 16], strides = [1, 1, 1]} : vector<4x8x16xf32> to vector<1x8x16xf32>
    %57 = vector.extract_strided_slice %53 {offsets = [3, 0, 0], sizes = [1, 8, 16], strides = [1, 1, 1]} : vector<4x8x16xf32> to vector<1x8x16xf32>
    %58 = tpu.concatenate %54, %55, %56, %57 in 2 : vector<1x8x16xf32>, vector<1x8x16xf32>, vector<1x8x16xf32>, vector<1x8x16xf32> -> vector<1x8x64xf32>
    %59 = vector.shape_cast %58 : vector<1x8x64xf32> to vector<8x64xf32>
    %c0_20 = arith.constant 0 : index
    %c0_21 = arith.constant 0 : index
    %c0_22 = arith.constant 0 : index
    %60 = vector.load %arg6[%c0_20, %c0_21, %c0_22] : memref<2x64x64xf32, #tpu.memory_space<vmem>>, vector<1x64x64xf32>
    %61 = vector.shape_cast %60 : vector<1x64x64xf32> to vector<64x64xf32>
    %cst_23 = arith.constant dense<0.000000e+00> : vector<8x64xf32>
    %62 = tpu.matmul %59, %61, %cst_23 {dimension_numbers = #tpu.dot_dimension_numbers<[1], [0], [0], [1], [0, 0, 1, 1], [], []>} : vector<8x64xf32>, vector<64x64xf32>, vector<8x64xf32> -> vector<8x64xf32>
    %63 = vector.broadcast %9 : vector<1x64xf32> to vector<8x64xf32>
    %64 = arith.addf %62, %63 : vector<8x64xf32>
    %65 = arith.addf %6, %64 : vector<8x64xf32>
    %cst_24 = arith.constant dense<0.000000e+00> : vector<8xf32>
    %66 = vector.multi_reduction <add>, %65, %cst_24 [1] : vector<8x64xf32> to vector<8xf32>
    %67 = vector.shape_cast %66 : vector<8xf32> to vector<8x1xf32>
    %cst_25 = arith.constant 6.400000e+01 : f32
    %68 = vector.broadcast %cst_25 : f32 to vector<8x1xf32>
    %69 = arith.divf %67, %68 : vector<8x1xf32>
    %70 = vector.broadcast %69 : vector<8x1xf32> to vector<8x64xf32>
    %71 = arith.subf %65, %70 : vector<8x64xf32>
    %72 = arith.mulf %71, %71 : vector<8x64xf32>
    %cst_26 = arith.constant dense<0.000000e+00> : vector<8xf32>
    %73 = vector.multi_reduction <add>, %72, %cst_26 [1] : vector<8x64xf32> to vector<8xf32>
    %74 = vector.shape_cast %73 : vector<8xf32> to vector<8x1xf32>
    %cst_27 = arith.constant 6.400000e+01 : f32
    %75 = vector.broadcast %cst_27 : f32 to vector<8x1xf32>
    %76 = arith.divf %74, %75 : vector<8x1xf32>
    %77 = vector.broadcast %69 : vector<8x1xf32> to vector<8x64xf32>
    %78 = arith.subf %65, %77 : vector<8x64xf32>
    %cst_28 = arith.constant 9.99999974E-6 : f32
    %79 = vector.broadcast %cst_28 : f32 to vector<8x1xf32>
    %80 = arith.addf %76, %79 : vector<8x1xf32>
    %81 = math.rsqrt %80 : vector<8x1xf32>
    %82 = vector.broadcast %81 : vector<8x1xf32> to vector<8x64xf32>
    %83 = arith.mulf %78, %82 : vector<8x64xf32>
    %84 = vector.broadcast %10 : vector<1x64xf32> to vector<8x64xf32>
    %85 = arith.mulf %83, %84 : vector<8x64xf32>
    %86 = vector.broadcast %11 : vector<1x64xf32> to vector<8x64xf32>
    %87 = arith.addf %85, %86 : vector<8x64xf32>
    %c0_29 = arith.constant 0 : index
    %c0_30 = arith.constant 0 : index
    %c0_31 = arith.constant 0 : index
    %88 = vector.load %arg7[%c0_29, %c0_30, %c0_31] : memref<2x64x128xf32, #tpu.memory_space<vmem>>, vector<1x64x128xf32>
    %89 = vector.shape_cast %88 : vector<1x64x128xf32> to vector<64x128xf32>
    %cst_32 = arith.constant dense<0.000000e+00> : vector<8x128xf32>
    %90 = tpu.matmul %87, %89, %cst_32 {dimension_numbers = #tpu.dot_dimension_numbers<[1], [0], [0], [1], [0, 0, 1, 1], [], []>} : vector<8x64xf32>, vector<64x128xf32>, vector<8x128xf32> -> vector<8x128xf32>
    %c0_33 = arith.constant 0 : index
    %c0_34 = arith.constant 0 : index
    %c0_35 = arith.constant 0 : index
    %91 = vector.load %arg8[%c0_33, %c0_34, %c0_35] : memref<2x1x128xf32, #tpu.memory_space<vmem>>, vector<1x1x128xf32>
    %92 = vector.shape_cast %91 : vector<1x1x128xf32> to vector<1x128xf32>
    %93 = vector.broadcast %92 : vector<1x128xf32> to vector<8x128xf32>
    %94 = arith.addf %90, %93 : vector<8x128xf32>
    %cst_36 = arith.constant 0.000000e+00 : f32
    %95 = vector.broadcast %cst_36 : f32 to vector<8x128xf32>
    %96 = arith.maximumf %94, %95 : vector<8x128xf32>
    %c0_37 = arith.constant 0 : index
    %c0_38 = arith.constant 0 : index
    %c0_39 = arith.constant 0 : index
    %97 = vector.load %arg9[%c0_37, %c0_38, %c0_39] : memref<2x128x64xf32, #tpu.memory_space<vmem>>, vector<1x128x64xf32>
    %98 = vector.shape_cast %97 : vector<1x128x64xf32> to vector<128x64xf32>
    %cst_40 = arith.constant dense<0.000000e+00> : vector<8x64xf32>
    %99 = tpu.matmul %96, %98, %cst_40 {dimension_numbers = #tpu.dot_dimension_numbers<[1], [0], [0], [1], [0, 0, 1, 1], [], []>} : vector<8x128xf32>, vector<128x64xf32>, vector<8x64xf32> -> vector<8x64xf32>
    %100 = vector.broadcast %12 : vector<1x64xf32> to vector<8x64xf32>
    %101 = arith.addf %99, %100 : vector<8x64xf32>
    %102 = arith.addf %87, %101 : vector<8x64xf32>
    %cst_41 = arith.constant dense<0.000000e+00> : vector<8xf32>
    %103 = vector.multi_reduction <add>, %102, %cst_41 [1] : vector<8x64xf32> to vector<8xf32>
    %104 = vector.shape_cast %103 : vector<8xf32> to vector<8x1xf32>
    %cst_42 = arith.constant 6.400000e+01 : f32
    %105 = vector.broadcast %cst_42 : f32 to vector<8x1xf32>
    %106 = arith.divf %104, %105 : vector<8x1xf32>
    %107 = vector.broadcast %106 : vector<8x1xf32> to vector<8x64xf32>
    %108 = arith.subf %102, %107 : vector<8x64xf32>
    %109 = arith.mulf %108, %108 : vector<8x64xf32>
    %cst_43 = arith.constant dense<0.000000e+00> : vector<8xf32>
    %110 = vector.multi_reduction <add>, %109, %cst_43 [1] : vector<8x64xf32> to vector<8xf32>
    %111 = vector.shape_cast %110 : vector<8xf32> to vector<8x1xf32>
    %cst_44 = arith.constant 6.400000e+01 : f32
    %112 = vector.broadcast %cst_44 : f32 to vector<8x1xf32>
    %113 = arith.divf %111, %112 : vector<8x1xf32>
    %114 = vector.broadcast %106 : vector<8x1xf32> to vector<8x64xf32>
    %115 = arith.subf %102, %114 : vector<8x64xf32>
    %cst_45 = arith.constant 9.99999974E-6 : f32
    %116 = vector.broadcast %cst_45 : f32 to vector<8x1xf32>
    %117 = arith.addf %113, %116 : vector<8x1xf32>
    %118 = math.rsqrt %117 : vector<8x1xf32>
    %119 = vector.broadcast %118 : vector<8x1xf32> to vector<8x64xf32>
    %120 = arith.mulf %115, %119 : vector<8x64xf32>
    %121 = vector.broadcast %13 : vector<1x64xf32> to vector<8x64xf32>
    %122 = arith.mulf %120, %121 : vector<8x64xf32>
    %123 = vector.broadcast %14 : vector<1x64xf32> to vector<8x64xf32>
    %124 = arith.addf %122, %123 : vector<8x64xf32>
    %c1 = arith.constant 1 : index
    %c0_46 = arith.constant 0 : index
    %c0_47 = arith.constant 0 : index
    %125 = vector.load %arg10[%c1, %c0_46, %c0_47] : memref<2x6x64xf32, #tpu.memory_space<vmem>>, vector<1x6x64xf32>
    %126 = vector.shape_cast %125 : vector<1x6x64xf32> to vector<6x64xf32>
    %127 = vector.extract_strided_slice %126 {offsets = [0, 0], sizes = [1, 64], strides = [1, 1]} : vector<6x64xf32> to vector<1x64xf32>
    %128 = vector.extract_strided_slice %126 {offsets = [1, 0], sizes = [1, 64], strides = [1, 1]} : vector<6x64xf32> to vector<1x64xf32>
    %129 = vector.extract_strided_slice %126 {offsets = [2, 0], sizes = [1, 64], strides = [1, 1]} : vector<6x64xf32> to vector<1x64xf32>
    %130 = vector.extract_strided_slice %126 {offsets = [3, 0], sizes = [1, 64], strides = [1, 1]} : vector<6x64xf32> to vector<1x64xf32>
    %131 = vector.extract_strided_slice %126 {offsets = [4, 0], sizes = [1, 64], strides = [1, 1]} : vector<6x64xf32> to vector<1x64xf32>
    %132 = vector.extract_strided_slice %126 {offsets = [5, 0], sizes = [1, 64], strides = [1, 1]} : vector<6x64xf32> to vector<1x64xf32>
    %c1_48 = arith.constant 1 : index
    %c0_49 = arith.constant 0 : index
    %c0_50 = arith.constant 0 : index
    %133 = vector.load %arg4[%c1_48, %c0_49, %c0_50] : memref<2x64x192xf32, #tpu.memory_space<vmem>>, vector<1x64x192xf32>
    %134 = vector.shape_cast %133 : vector<1x64x192xf32> to vector<64x192xf32>
    %cst_51 = arith.constant dense<0.000000e+00> : vector<8x192xf32>
    %135 = tpu.matmul %124, %134, %cst_51 {dimension_numbers = #tpu.dot_dimension_numbers<[1], [0], [0], [1], [0, 0, 1, 1], [], []>} : vector<8x64xf32>, vector<64x192xf32>, vector<8x192xf32> -> vector<8x192xf32>
    %c1_52 = arith.constant 1 : index
    %c0_53 = arith.constant 0 : index
    %c0_54 = arith.constant 0 : index
    %136 = vector.load %arg5[%c1_52, %c0_53, %c0_54] : memref<2x1x192xf32, #tpu.memory_space<vmem>>, vector<1x1x192xf32>
    %137 = vector.shape_cast %136 : vector<1x1x192xf32> to vector<1x192xf32>
    %138 = vector.broadcast %137 : vector<1x192xf32> to vector<8x192xf32>
    %139 = arith.addf %135, %138 : vector<8x192xf32>
    %140 = vector.extract_strided_slice %139 {offsets = [0, 0], sizes = [8, 64], strides = [1, 1]} : vector<8x192xf32> to vector<8x64xf32>
    %141 = vector.shape_cast %140 : vector<8x64xf32> to vector<1x8x64xf32>
    %142 = vector.extract_strided_slice %139 {offsets = [0, 64], sizes = [8, 64], strides = [1, 1]} : vector<8x192xf32> to vector<8x64xf32>
    %143 = vector.shape_cast %142 : vector<8x64xf32> to vector<1x8x64xf32>
    %144 = vector.extract_strided_slice %139 {offsets = [0, 128], sizes = [8, 64], strides = [1, 1]} : vector<8x192xf32> to vector<8x64xf32>
    %145 = vector.shape_cast %144 : vector<8x64xf32> to vector<1x8x64xf32>
    %146 = vector.extract_strided_slice %141 {offsets = [0, 0, 0], sizes = [1, 8, 16], strides = [1, 1, 1]} : vector<1x8x64xf32> to vector<1x8x16xf32>
    %147 = vector.extract_strided_slice %141 {offsets = [0, 0, 16], sizes = [1, 8, 16], strides = [1, 1, 1]} : vector<1x8x64xf32> to vector<1x8x16xf32>
    %148 = vector.extract_strided_slice %141 {offsets = [0, 0, 32], sizes = [1, 8, 16], strides = [1, 1, 1]} : vector<1x8x64xf32> to vector<1x8x16xf32>
    %149 = vector.extract_strided_slice %141 {offsets = [0, 0, 48], sizes = [1, 8, 16], strides = [1, 1, 1]} : vector<1x8x64xf32> to vector<1x8x16xf32>
    %150 = tpu.concatenate %146, %147, %148, %149 in 0 : vector<1x8x16xf32>, vector<1x8x16xf32>, vector<1x8x16xf32>, vector<1x8x16xf32> -> vector<4x8x16xf32>
    %151 = vector.extract_strided_slice %143 {offsets = [0, 0, 0], sizes = [1, 8, 16], strides = [1, 1, 1]} : vector<1x8x64xf32> to vector<1x8x16xf32>
    %152 = vector.extract_strided_slice %143 {offsets = [0, 0, 16], sizes = [1, 8, 16], strides = [1, 1, 1]} : vector<1x8x64xf32> to vector<1x8x16xf32>
    %153 = vector.extract_strided_slice %143 {offsets = [0, 0, 32], sizes = [1, 8, 16], strides = [1, 1, 1]} : vector<1x8x64xf32> to vector<1x8x16xf32>
    %154 = vector.extract_strided_slice %143 {offsets = [0, 0, 48], sizes = [1, 8, 16], strides = [1, 1, 1]} : vector<1x8x64xf32> to vector<1x8x16xf32>
    %155 = tpu.concatenate %151, %152, %153, %154 in 0 : vector<1x8x16xf32>, vector<1x8x16xf32>, vector<1x8x16xf32>, vector<1x8x16xf32> -> vector<4x8x16xf32>
    %156 = vector.extract_strided_slice %145 {offsets = [0, 0, 0], sizes = [1, 8, 16], strides = [1, 1, 1]} : vector<1x8x64xf32> to vector<1x8x16xf32>
    %157 = vector.extract_strided_slice %145 {offsets = [0, 0, 16], sizes = [1, 8, 16], strides = [1, 1, 1]} : vector<1x8x64xf32> to vector<1x8x16xf32>
    %158 = vector.extract_strided_slice %145 {offsets = [0, 0, 32], sizes = [1, 8, 16], strides = [1, 1, 1]} : vector<1x8x64xf32> to vector<1x8x16xf32>
    %159 = vector.extract_strided_slice %145 {offsets = [0, 0, 48], sizes = [1, 8, 16], strides = [1, 1, 1]} : vector<1x8x64xf32> to vector<1x8x16xf32>
    %160 = tpu.concatenate %156, %157, %158, %159 in 0 : vector<1x8x16xf32>, vector<1x8x16xf32>, vector<1x8x16xf32>, vector<1x8x16xf32> -> vector<4x8x16xf32>
    "tpu.trace_start"() <{level = 10 : i32, message = "bqd,bkd->bqk"}> : () -> ()
    %cst_55 = arith.constant dense<0.000000e+00> : vector<4x8x8xf32>
    %161 = tpu.matmul %150, %155, %cst_55 {dimension_numbers = #tpu.dot_dimension_numbers<[2], [2], [1], [1], [0, 0, 0, 1, 1, 1], [0], [0]>} : vector<4x8x16xf32>, vector<4x8x16xf32>, vector<4x8x8xf32> -> vector<4x8x8xf32>
    "tpu.trace_stop"() : () -> ()
    %cst_56 = arith.constant dense<0xFF800000> : vector<4x8xf32>
    %162 = vector.multi_reduction <maximumf>, %161, %cst_56 [2] : vector<4x8x8xf32> to vector<4x8xf32>
    %163 = vector.shape_cast %162 : vector<4x8xf32> to vector<4x8x1xf32>
    %164 = vector.broadcast %163 : vector<4x8x1xf32> to vector<4x8x8xf32>
    %165 = arith.subf %161, %164 : vector<4x8x8xf32>
    %166 = math.exp %165 : vector<4x8x8xf32>
    %cst_57 = arith.constant dense<0.000000e+00> : vector<4x8xf32>
    %167 = vector.multi_reduction <add>, %166, %cst_57 [2] : vector<4x8x8xf32> to vector<4x8xf32>
    %168 = vector.shape_cast %167 : vector<4x8xf32> to vector<4x8x1xf32>
    %169 = vector.broadcast %168 : vector<4x8x1xf32> to vector<4x8x8xf32>
    %170 = arith.divf %166, %169 : vector<4x8x8xf32>
    "tpu.trace_start"() <{level = 10 : i32, message = "bqk,bkd->bqd"}> : () -> ()
    %cst_58 = arith.constant dense<0.000000e+00> : vector<4x8x16xf32>
    %171 = tpu.matmul %170, %160, %cst_58 {dimension_numbers = #tpu.dot_dimension_numbers<[2], [1], [1], [2], [0, 0, 0, 1, 1, 2], [0], [0]>} : vector<4x8x8xf32>, vector<4x8x16xf32>, vector<4x8x16xf32> -> vector<4x8x16xf32>
    "tpu.trace_stop"() : () -> ()
    %172 = vector.extract_strided_slice %171 {offsets = [0, 0, 0], sizes = [1, 8, 16], strides = [1, 1, 1]} : vector<4x8x16xf32> to vector<1x8x16xf32>
    %173 = vector.extract_strided_slice %171 {offsets = [1, 0, 0], sizes = [1, 8, 16], strides = [1, 1, 1]} : vector<4x8x16xf32> to vector<1x8x16xf32>
    %174 = vector.extract_strided_slice %171 {offsets = [2, 0, 0], sizes = [1, 8, 16], strides = [1, 1, 1]} : vector<4x8x16xf32> to vector<1x8x16xf32>
    %175 = vector.extract_strided_slice %171 {offsets = [3, 0, 0], sizes = [1, 8, 16], strides = [1, 1, 1]} : vector<4x8x16xf32> to vector<1x8x16xf32>
    %176 = tpu.concatenate %172, %173, %174, %175 in 2 : vector<1x8x16xf32>, vector<1x8x16xf32>, vector<1x8x16xf32>, vector<1x8x16xf32> -> vector<1x8x64xf32>
    %177 = vector.shape_cast %176 : vector<1x8x64xf32> to vector<8x64xf32>
    %c1_59 = arith.constant 1 : index
    %c0_60 = arith.constant 0 : index
    %c0_61 = arith.constant 0 : index
    %178 = vector.load %arg6[%c1_59, %c0_60, %c0_61] : memref<2x64x64xf32, #tpu.memory_space<vmem>>, vector<1x64x64xf32>
    %179 = vector.shape_cast %178 : vector<1x64x64xf32> to vector<64x64xf32>
    %cst_62 = arith.constant dense<0.000000e+00> : vector<8x64xf32>
    %180 = tpu.matmul %177, %179, %cst_62 {dimension_numbers = #tpu.dot_dimension_numbers<[1], [0], [0], [1], [0, 0, 1, 1], [], []>} : vector<8x64xf32>, vector<64x64xf32>, vector<8x64xf32> -> vector<8x64xf32>
    %181 = vector.broadcast %127 : vector<1x64xf32> to vector<8x64xf32>
    %182 = arith.addf %180, %181 : vector<8x64xf32>
    %183 = arith.addf %124, %182 : vector<8x64xf32>
    %cst_63 = arith.constant dense<0.000000e+00> : vector<8xf32>
    %184 = vector.multi_reduction <add>, %183, %cst_63 [1] : vector<8x64xf32> to vector<8xf32>
    %185 = vector.shape_cast %184 : vector<8xf32> to vector<8x1xf32>
    %cst_64 = arith.constant 6.400000e+01 : f32
    %186 = vector.broadcast %cst_64 : f32 to vector<8x1xf32>
    %187 = arith.divf %185, %186 : vector<8x1xf32>
    %188 = vector.broadcast %187 : vector<8x1xf32> to vector<8x64xf32>
    %189 = arith.subf %183, %188 : vector<8x64xf32>
    %190 = arith.mulf %189, %189 : vector<8x64xf32>
    %cst_65 = arith.constant dense<0.000000e+00> : vector<8xf32>
    %191 = vector.multi_reduction <add>, %190, %cst_65 [1] : vector<8x64xf32> to vector<8xf32>
    %192 = vector.shape_cast %191 : vector<8xf32> to vector<8x1xf32>
    %cst_66 = arith.constant 6.400000e+01 : f32
    %193 = vector.broadcast %cst_66 : f32 to vector<8x1xf32>
    %194 = arith.divf %192, %193 : vector<8x1xf32>
    %195 = vector.broadcast %187 : vector<8x1xf32> to vector<8x64xf32>
    %196 = arith.subf %183, %195 : vector<8x64xf32>
    %cst_67 = arith.constant 9.99999974E-6 : f32
    %197 = vector.broadcast %cst_67 : f32 to vector<8x1xf32>
    %198 = arith.addf %194, %197 : vector<8x1xf32>
    %199 = math.rsqrt %198 : vector<8x1xf32>
    %200 = vector.broadcast %199 : vector<8x1xf32> to vector<8x64xf32>
    %201 = arith.mulf %196, %200 : vector<8x64xf32>
    %202 = vector.broadcast %128 : vector<1x64xf32> to vector<8x64xf32>
    %203 = arith.mulf %201, %202 : vector<8x64xf32>
    %204 = vector.broadcast %129 : vector<1x64xf32> to vector<8x64xf32>
    %205 = arith.addf %203, %204 : vector<8x64xf32>
    %c1_68 = arith.constant 1 : index
    %c0_69 = arith.constant 0 : index
    %c0_70 = arith.constant 0 : index
    %206 = vector.load %arg7[%c1_68, %c0_69, %c0_70] : memref<2x64x128xf32, #tpu.memory_space<vmem>>, vector<1x64x128xf32>
    %207 = vector.shape_cast %206 : vector<1x64x128xf32> to vector<64x128xf32>
    %cst_71 = arith.constant dense<0.000000e+00> : vector<8x128xf32>
    %208 = tpu.matmul %205, %207, %cst_71 {dimension_numbers = #tpu.dot_dimension_numbers<[1], [0], [0], [1], [0, 0, 1, 1], [], []>} : vector<8x64xf32>, vector<64x128xf32>, vector<8x128xf32> -> vector<8x128xf32>
    %c1_72 = arith.constant 1 : index
    %c0_73 = arith.constant 0 : index
    %c0_74 = arith.constant 0 : index
    %209 = vector.load %arg8[%c1_72, %c0_73, %c0_74] : memref<2x1x128xf32, #tpu.memory_space<vmem>>, vector<1x1x128xf32>
    %210 = vector.shape_cast %209 : vector<1x1x128xf32> to vector<1x128xf32>
    %211 = vector.broadcast %210 : vector<1x128xf32> to vector<8x128xf32>
    %212 = arith.addf %208, %211 : vector<8x128xf32>
    %cst_75 = arith.constant 0.000000e+00 : f32
    %213 = vector.broadcast %cst_75 : f32 to vector<8x128xf32>
    %214 = arith.maximumf %212, %213 : vector<8x128xf32>
    %c1_76 = arith.constant 1 : index
    %c0_77 = arith.constant 0 : index
    %c0_78 = arith.constant 0 : index
    %215 = vector.load %arg9[%c1_76, %c0_77, %c0_78] : memref<2x128x64xf32, #tpu.memory_space<vmem>>, vector<1x128x64xf32>
    %216 = vector.shape_cast %215 : vector<1x128x64xf32> to vector<128x64xf32>
    %cst_79 = arith.constant dense<0.000000e+00> : vector<8x64xf32>
    %217 = tpu.matmul %214, %216, %cst_79 {dimension_numbers = #tpu.dot_dimension_numbers<[1], [0], [0], [1], [0, 0, 1, 1], [], []>} : vector<8x128xf32>, vector<128x64xf32>, vector<8x64xf32> -> vector<8x64xf32>
    %218 = vector.broadcast %130 : vector<1x64xf32> to vector<8x64xf32>
    %219 = arith.addf %217, %218 : vector<8x64xf32>
    %220 = arith.addf %205, %219 : vector<8x64xf32>
    %cst_80 = arith.constant dense<0.000000e+00> : vector<8xf32>
    %221 = vector.multi_reduction <add>, %220, %cst_80 [1] : vector<8x64xf32> to vector<8xf32>
    %222 = vector.shape_cast %221 : vector<8xf32> to vector<8x1xf32>
    %cst_81 = arith.constant 6.400000e+01 : f32
    %223 = vector.broadcast %cst_81 : f32 to vector<8x1xf32>
    %224 = arith.divf %222, %223 : vector<8x1xf32>
    %225 = vector.broadcast %224 : vector<8x1xf32> to vector<8x64xf32>
    %226 = arith.subf %220, %225 : vector<8x64xf32>
    %227 = arith.mulf %226, %226 : vector<8x64xf32>
    %cst_82 = arith.constant dense<0.000000e+00> : vector<8xf32>
    %228 = vector.multi_reduction <add>, %227, %cst_82 [1] : vector<8x64xf32> to vector<8xf32>
    %229 = vector.shape_cast %228 : vector<8xf32> to vector<8x1xf32>
    %cst_83 = arith.constant 6.400000e+01 : f32
    %230 = vector.broadcast %cst_83 : f32 to vector<8x1xf32>
    %231 = arith.divf %229, %230 : vector<8x1xf32>
    %232 = vector.broadcast %224 : vector<8x1xf32> to vector<8x64xf32>
    %233 = arith.subf %220, %232 : vector<8x64xf32>
    %cst_84 = arith.constant 9.99999974E-6 : f32
    %234 = vector.broadcast %cst_84 : f32 to vector<8x1xf32>
    %235 = arith.addf %231, %234 : vector<8x1xf32>
    %236 = math.rsqrt %235 : vector<8x1xf32>
    %237 = vector.broadcast %236 : vector<8x1xf32> to vector<8x64xf32>
    %238 = arith.mulf %233, %237 : vector<8x64xf32>
    %239 = vector.broadcast %131 : vector<1x64xf32> to vector<8x64xf32>
    %240 = arith.mulf %238, %239 : vector<8x64xf32>
    %241 = vector.broadcast %132 : vector<1x64xf32> to vector<8x64xf32>
    %242 = arith.addf %240, %241 : vector<8x64xf32>
    %c0_85 = arith.constant 0 : index
    %c0_86 = arith.constant 0 : index
    %243 = vector.load %arg11[%c0_85, %c0_86] : memref<64x128xf32, #tpu.memory_space<vmem>>, vector<64x128xf32>
    %cst_87 = arith.constant dense<0.000000e+00> : vector<8x128xf32>
    %244 = tpu.matmul %242, %243, %cst_87 {dimension_numbers = #tpu.dot_dimension_numbers<[1], [0], [0], [1], [0, 0, 1, 1], [], []>} : vector<8x64xf32>, vector<64x128xf32>, vector<8x128xf32> -> vector<8x128xf32>
    %c0_88 = arith.constant 0 : index
    %c0_89 = arith.constant 0 : index
    %245 = vector.load %arg12[%c0_88, %c0_89] : memref<1x128xf32, #tpu.memory_space<vmem>>, vector<1x128xf32>
    %246 = vector.broadcast %245 : vector<1x128xf32> to vector<8x128xf32>
    %247 = arith.addf %244, %246 : vector<8x128xf32>
    %248 = arith.negf %247 : vector<8x128xf32>
    %249 = math.exp %248 : vector<8x128xf32>
    %cst_90 = arith.constant 1.000000e+00 : f32
    %250 = vector.broadcast %cst_90 : f32 to vector<8x128xf32>
    %251 = arith.addf %250, %249 : vector<8x128xf32>
    %252 = arith.divf %250, %251 : vector<8x128xf32>
    %253 = vector.shape_cast %252 : vector<8x128xf32> to vector<1x8x128xf32>
    %c0_91 = arith.constant 0 : index
    %c0_92 = arith.constant 0 : index
    %c0_93 = arith.constant 0 : index
    %254 = vector.load %arg13[%c0_91, %c0_92, %c0_93] : memref<1x8x128xf32, #tpu.memory_space<vmem>>, vector<1x8x128xf32>
    tpu.vector_store %arg13[%c0_91, %c0_92, %c0_93], %253 {strides = array<i32>} : memref<1x8x128xf32, #tpu.memory_space<vmem>>, vector<1x8x128xf32>,
    return
  }
  func.func @transform_0(%arg0: i32) -> (i32, i32, i32) {
    %c0_i32 = arith.constant 0 : i32
    %c0_i32_0 = arith.constant 0 : i32
    %c0_i32_1 = arith.constant 0 : i32
    return %arg0, %c0_i32, %c0_i32_0 : i32, i32, i32
  }
  func.func @transform_1(%arg0: i32) -> (i32, i32) {
    %c0_i32 = arith.constant 0 : i32
    %c0_i32_0 = arith.constant 0 : i32
    %c0_i32_1 = arith.constant 0 : i32
    return %c0_i32, %c0_i32_0 : i32, i32
  }
  func.func @transform_2(%arg0: i32) -> (i32, i32) {
    %c0_i32 = arith.constant 0 : i32
    %c0_i32_0 = arith.constant 0 : i32
    %c0_i32_1 = arith.constant 0 : i32
    return %c0_i32, %c0_i32_0 : i32, i32
  }
  func.func @transform_3(%arg0: i32) -> (i32, i32, i32) {
    %c0_i32 = arith.constant 0 : i32
    %c0_i32_0 = arith.constant 0 : i32
    %c0_i32_1 = arith.constant 0 : i32
    %c0_i32_2 = arith.constant 0 : i32
    return %c0_i32, %c0_i32_0, %c0_i32_1 : i32, i32, i32
  }
  func.func @transform_4(%arg0: i32) -> (i32, i32, i32) {
    %c0_i32 = arith.constant 0 : i32
    %c0_i32_0 = arith.constant 0 : i32
    %c0_i32_1 = arith.constant 0 : i32
    %c0_i32_2 = arith.constant 0 : i32
    return %c0_i32, %c0_i32_0, %c0_i32_1 : i32, i32, i32
  }
  func.func @transform_5(%arg0: i32) -> (i32, i32, i32) {
    %c0_i32 = arith.constant 0 : i32
    %c0_i32_0 = arith.constant 0 : i32
    %c0_i32_1 = arith.constant 0 : i32
    %c0_i32_2 = arith.constant 0 : i32
    return %c0_i32, %c0_i32_0, %c0_i32_1 : i32, i32, i32
  }
  func.func @transform_6(%arg0: i32) -> (i32, i32, i32) {
    %c0_i32 = arith.constant 0 : i32
    %c0_i32_0 = arith.constant 0 : i32
    %c0_i32_1 = arith.constant 0 : i32
    %c0_i32_2 = arith.constant 0 : i32
    return %c0_i32, %c0_i32_0, %c0_i32_1 : i32, i32, i32
  }
  func.func @transform_7(%arg0: i32) -> (i32, i32, i32) {
    %c0_i32 = arith.constant 0 : i32
    %c0_i32_0 = arith.constant 0 : i32
    %c0_i32_1 = arith.constant 0 : i32
    %c0_i32_2 = arith.constant 0 : i32
    return %c0_i32, %c0_i32_0, %c0_i32_1 : i32, i32, i32
  }
  func.func @transform_8(%arg0: i32) -> (i32, i32, i32) {
    %c0_i32 = arith.constant 0 : i32
    %c0_i32_0 = arith.constant 0 : i32
    %c0_i32_1 = arith.constant 0 : i32
    %c0_i32_2 = arith.constant 0 : i32
    return %c0_i32, %c0_i32_0, %c0_i32_1 : i32, i32, i32
  }
  func.func @transform_9(%arg0: i32) -> (i32, i32, i32) {
    %c0_i32 = arith.constant 0 : i32
    %c0_i32_0 = arith.constant 0 : i32
    %c0_i32_1 = arith.constant 0 : i32
    %c0_i32_2 = arith.constant 0 : i32
    return %c0_i32, %c0_i32_0, %c0_i32_1 : i32, i32, i32
  }
  func.func @transform_10(%arg0: i32) -> (i32, i32) {
    %c0_i32 = arith.constant 0 : i32
    %c0_i32_0 = arith.constant 0 : i32
    %c0_i32_1 = arith.constant 0 : i32
    return %c0_i32, %c0_i32_0 : i32, i32
  }
  func.func @transform_11(%arg0: i32) -> (i32, i32) {
    %c0_i32 = arith.constant 0 : i32
    %c0_i32_0 = arith.constant 0 : i32
    %c0_i32_1 = arith.constant 0 : i32
    return %c0_i32, %c0_i32_0 : i32, i32
  }
  func.func @transform_12(%arg0: i32) -> (i32, i32, i32) {
    %c0_i32 = arith.constant 0 : i32
    %c0_i32_0 = arith.constant 0 : i32
    %c0_i32_1 = arith.constant 0 : i32
    return %arg0, %c0_i32, %c0_i32_0 : i32, i32, i32
  }
}

</mosaic_0001>

<llo_original>
// kernel: mask_generator.1
$region0: #{mask_generator.1}
  #allocation0 [shape = 'u32[]', space=smem, size = 0x4, offset = 0x4, fixed_abs, tag = 'smem constant byte address 0x4 - core index']
  #allocation1 [shape = 'u32[144,128]{1,0:T(1,128)}', space=vmem, size = 0x12000, scoped, tag = 'internal scratch']
  %s0 = inlined_call_operand.hbm [shape: f32[2,8,32], index: 0, kind: input, shape index: {}]
  %s1 = inlined_call_operand.hbm [shape: f32[32,64], index: 1, kind: input, shape index: {}]
  %s2 = inlined_call_operand.vmem [shape: f32[1,64], index: 2, kind: input, shape index: {}]
  %s3 = inlined_call_operand.vmem [shape: f32[2,64,192], index: 3, kind: input, shape index: {}]
  %s4 = inlined_call_operand.hbm [shape: f32[2,1,192], index: 4, kind: input, shape index: {}]
  %s5 = inlined_call_operand.vmem [shape: f32[2,64,64], index: 5, kind: input, shape index: {}]
  %s6 = inlined_call_operand.hbm [shape: f32[2,64,128], index: 6, kind: input, shape index: {}]
  %s7 = inlined_call_operand.hbm [shape: f32[2,1,128], index: 7, kind: input, shape index: {}]
  %s8 = inlined_call_operand.vmem [shape: f32[2,128,64], index: 8, kind: input, shape index: {}]
  %s9 = inlined_call_operand.vmem [shape: f32[2,6,64], index: 9, kind: input, shape index: {}]
  %s10 = inlined_call_operand.vmem [shape: f32[64,128], index: 10, kind: input, shape index: {}]
  %s11 = inlined_call_operand.hbm [shape: f32[1,128], index: 11, kind: input, shape index: {}]
  %s12 = inlined_call_operand.hbm [shape: f32[2,8,128], index: 12, kind: output, shape index: {}]
  %s13 = sld [smem:[#allocation0]]
  $region105: #{mask_generator.1} parent=0
    _
  %s15 = ssub.s32 1, %s13
  %s16 = scalar_select 0, %s15, %s13
  $region1: #{mask_generator.1} parent=0
    #allocation2 [shape = 'u8[8192]{0}', space=vmem, size = 0x2000, scoped, tag = 'input window, operand 0']
    #allocation3 [shape = 's32[2]{0}', space=sflag, size = 0x8, scoped, tag = 'scoped memory for mask_generator.1']
    #allocation4 [shape = 's32[2]{0}', space=sflag, size = 0x8, scoped, tag = 'scoped memory for mask_generator.1']
    #allocation5 [shape = 'u8[16384]{0}', space=vmem, size = 0x4000, scoped, tag = 'input window, operand 1, single buffered']
    #allocation6 [shape = 's32[1]{0}', space=sflag, size = 0x4, scoped, tag = 'scoped memory for mask_generator.1']
    #allocation7 [shape = 'u8[2048]{0}', space=vmem, size = 0x800, scoped, tag = 'input window, operand 4, single buffered']
    #allocation8 [shape = 'u8[65536]{0}', space=vmem, size = 0x10000, scoped, tag = 'input window, operand 6, single buffered']
    #allocation9 [shape = 's32[1]{0}', space=sflag, size = 0x4, scoped, tag = 'scoped memory for mask_generator.1']
    #allocation10 [shape = 'u8[1024]{0}', space=vmem, size = 0x400, scoped, tag = 'input window, operand 7, single buffered']
    #allocation11 [shape = 'u8[512]{0}', space=vmem, size = 0x400, scoped, tag = 'input window, operand 11, single buffered']
    #allocation12 [shape = 's32[1]{0}', space=sflag, size = 0x4, scoped, tag = 'scoped memory for mask_generator.1']
    #allocation13 [shape = 'u8[8192]{0}', space=vmem, size = 0x2000, scoped, tag = 'output window, operand 0']
    %17 = vsyncpa [#allocation3], 0
    %s18 = scalar_lea.sflag [#allocation3], 1
    %19 = vsyncpa %s18, 0
    %20 = vsyncpa [#allocation6], 0
    %21 = vsyncpa [#allocation9], 0
    %22 = vsyncpa [#allocation12], 0
    %23 = vsyncpa [#allocation4], 0
    %s24 = scalar_lea.sflag [#allocation4], 1
    %25 = vsyncpa %s24, 0
    loop: start=0, step=1, limit=4
    $region2: #{mask_generator.1} parent=1 // loop_pre_header
      _
    $region3: #{mask_generator.1} parent=1 // loop_header
      %s27 = sphi 0, %s31
      %p28 = scmp.ge.s32.totalorder %s27, 4
      %s37 = sphi 0, %s39
      %s40 = sphi 0, %s37
      %s41 = sphi 0, %s40
      %s57 = sphi 0, %s41
      %s61 = sphi 0, %s61
      %s63 = sphi 0, %s61
      %s64 = sphi 0, %s63
      %s78 = sphi 0, %s64
      %s82 = sphi 0, %s82
      %s84 = sphi 0, %s82
      %s85 = sphi 0, %s84
      %s99 = sphi 0, %s85
      %s103 = sphi 0, %s103
      %s105 = sphi 0, %s103
      %s106 = sphi 0, %s105
      %s120 = sphi 0, %s106
      %s124 = sphi 0, %s124
      %s126 = sphi 0, %s124
      %s127 = sphi 0, %s126
      %s141 = sphi 0, %s127
      %s145 = sphi 0, %s145
      %s147 = sphi 0, %s145
      %s148 = sphi 0, %s147
      %s162 = sphi 0, %s148
      %s166 = sphi 0, %s166
      %s168 = sphi 0, %s166
      %s169 = sphi 0, %s168
      %s183 = sphi 0, %s169
      %s187 = sphi 0, %s187
      %s189 = sphi 0, %s187
      %s190 = sphi 0, %s189
      %s204 = sphi 0, %s190
      %s208 = sphi 0, %s208
      %s210 = sphi 0, %s208
      %s211 = sphi 0, %s210
      %s225 = sphi 0, %s211
      %s229 = sphi 0, %s229
      %s231 = sphi 0, %s229
      %s232 = sphi 0, %s231
      %s246 = sphi 0, %s232
      %s250 = sphi 0, %s250
      %s252 = sphi 0, %s250
      %s253 = sphi 0, %s252
      %s267 = sphi 0, %s253
      %s271 = sphi 0, %s271
      %s273 = sphi 0, %s271
      %s274 = sphi 0, %s273
      %s288 = sphi 0, %s274
      %s294 = sphi 0, %s296
      %s297 = sphi 0, %s294
      %s298 = sphi 0, %s297
      %s314 = sphi 0, %s298
    $region4: #{mask_generator.1} parent=1 // loop_header_branch
      %30 = sbr.rel (%p28) target = $region8
    $region5: #{mask_generator.1} parent=1 // loop_body
      %s32 = ssub.s32 %s27, 1
      %s33 = ssub.s32 %s27, 2
      %s34 = sadd.s32 %s27, 1
      %s35 = ssub.s32 %s27, %s34
      %p36 = scmp.eq.s32.totalorder %s35, 0
      %s38 = sadd.s32 %s37, 1
      %s39 = scalar_select %p36, %s37, %s38
      %p42 = pneg %p36
      %p43 = scmp.eq.s32.totalorder %s27, 1
      %p44 = por %p42, %p43
      %p45 = scmp.ne.s32.totalorder %s37, %s40
      %p46 = scmp.eq.s32.totalorder %s27, 0
      %p47 = por %p45, %p46
      %p48 = scmp.ne.s32.totalorder %s37, %s40
      %p49 = scmp.eq.s32.totalorder %s32, 1
      %p50 = por %p48, %p49
      %p51 = scmp.ne.s32.totalorder %s40, %s41
      %p52 = scmp.eq.s32.totalorder %s32, 0
      %p53 = por %p51, %p52
      %p54 = scmp.ne.s32.totalorder %s40, %s41
      %p55 = scmp.eq.s32.totalorder %s33, 1
      %p56 = por %p54, %p55
      %p58 = scmp.ne.s32.totalorder %s41, %s57
      %p59 = scmp.eq.s32.totalorder %s33, 0
      %p60 = por %p58, %p59
      %s62 = sadd.s32 %s61, 1
      %p65 = scmp.eq.s32.totalorder %s27, 1
      %p66 = scmp.ne.s32.totalorder %s61, %s63
      %p67 = scmp.eq.s32.totalorder %s27, 0
      %p68 = por %p66, %p67
      %p69 = scmp.ne.s32.totalorder %s61, %s63
      %p70 = scmp.eq.s32.totalorder %s32, 1
      %p71 = por %p69, %p70
      %p72 = scmp.ne.s32.totalorder %s63, %s64
      %p73 = scmp.eq.s32.totalorder %s32, 0
      %p74 = por %p72, %p73
      %p75 = scmp.ne.s32.totalorder %s63, %s64
      %p76 = scmp.eq.s32.totalorder %s33, 1
      %p77 = por %p75, %p76
      %p79 = scmp.ne.s32.totalorder %s64, %s78
      %p80 = scmp.eq.s32.totalorder %s33, 0
      %p81 = por %p79, %p80
      %s83 = sadd.s32 %s82, 1
      %p86 = scmp.eq.s32.totalorder %s27, 1
      %p87 = scmp.ne.s32.totalorder %s82, %s84
      %p88 = scmp.eq.s32.totalorder %s27, 0
      %p89 = por %p87, %p88
      %p90 = scmp.ne.s32.totalorder %s82, %s84
      %p91 = scmp.eq.s32.totalorder %s32, 1
      %p92 = por %p90, %p91
      %p93 = scmp.ne.s32.totalorder %s84, %s85
      %p94 = scmp.eq.s32.totalorder %s32, 0
      %p95 = por %p93, %p94
      %p96 = scmp.ne.s32.totalorder %s84, %s85
      %p97 = scmp.eq.s32.totalorder %s33, 1
      %p98 = por %p96, %p97
      %p100 = scmp.ne.s32.totalorder %s85, %s99
      %p101 = scmp.eq.s32.totalorder %s33, 0
      %p102 = por %p100, %p101
      %s104 = sadd.s32 %s103, 1
      %p107 = scmp.eq.s32.totalorder %s27, 1
      %p108 = scmp.ne.s32.totalorder %s103, %s105
      %p109 = scmp.eq.s32.totalorder %s27, 0
      %p110 = por %p108, %p109
      %p111 = scmp.ne.s32.totalorder %s103, %s105
      %p112 = scmp.eq.s32.totalorder %s32, 1
      %p113 = por %p111, %p112
      %p114 = scmp.ne.s32.totalorder %s105, %s106
      %p115 = scmp.eq.s32.totalorder %s32, 0
      %p116 = por %p114, %p115
      %p117 = scmp.ne.s32.totalorder %s105, %s106
      %p118 = scmp.eq.s32.totalorder %s33, 1
      %p119 = por %p117, %p118
      %p121 = scmp.ne.s32.totalorder %s106, %s120
      %p122 = scmp.eq.s32.totalorder %s33, 0
      %p123 = por %p121, %p122
      %s125 = sadd.s32 %s124, 1
      %p128 = scmp.eq.s32.totalorder %s27, 1
      %p129 = scmp.ne.s32.totalorder %s124, %s126
      %p130 = scmp.eq.s32.totalorder %s27, 0
      %p131 = por %p129, %p130
      %p132 = scmp.ne.s32.totalorder %s124, %s126
      %p133 = scmp.eq.s32.totalorder %s32, 1
      %p134 = por %p132, %p133
      %p135 = scmp.ne.s32.totalorder %s126, %s127
      %p136 = scmp.eq.s32.totalorder %s32, 0
      %p137 = por %p135, %p136
      %p138 = scmp.ne.s32.totalorder %s126, %s127
      %p139 = scmp.eq.s32.totalorder %s33, 1
      %p140 = por %p138, %p139
      %p142 = scmp.ne.s32.totalorder %s127, %s141
      %p143 = scmp.eq.s32.totalorder %s33, 0
      %p144 = por %p142, %p143
      %s146 = sadd.s32 %s145, 1
      %p149 = scmp.eq.s32.totalorder %s27, 1
      %p150 = scmp.ne.s32.totalorder %s145, %s147
      %p151 = scmp.eq.s32.totalorder %s27, 0
      %p152 = por %p150, %p151
      %p153 = scmp.ne.s32.totalorder %s145, %s147
      %p154 = scmp.eq.s32.totalorder %s32, 1
      %p155 = por %p153, %p154
      %p156 = scmp.ne.s32.totalorder %s147, %s148
      %p157 = scmp.eq.s32.totalorder %s32, 0
      %p158 = por %p156, %p157
      %p159 = scmp.ne.s32.totalorder %s147, %s148
      %p160 = scmp.eq.s32.totalorder %s33, 1
      %p161 = por %p159, %p160
      %p163 = scmp.ne.s32.totalorder %s148, %s162
      %p164 = scmp.eq.s32.totalorder %s33, 0
      %p165 = por %p163, %p164
      %s167 = sadd.s32 %s166, 1
      %p170 = scmp.eq.s32.totalorder %s27, 1
      %p171 = scmp.ne.s32.totalorder %s166, %s168
      %p172 = scmp.eq.s32.totalorder %s27, 0
      %p173 = por %p171, %p172
      %p174 = scmp.ne.s32.totalorder %s166, %s168
      %p175 = scmp.eq.s32.totalorder %s32, 1
      %p176 = por %p174, %p175
      %p177 = scmp.ne.s32.totalorder %s168, %s169
      %p178 = scmp.eq.s32.totalorder %s32, 0
      %p179 = por %p177, %p178
      %p180 = scmp.ne.s32.totalorder %s168, %s169
      %p181 = scmp.eq.s32.totalorder %s33, 1
      %p182 = por %p180, %p181
      %p184 = scmp.ne.s32.totalorder %s169, %s183
      %p185 = scmp.eq.s32.totalorder %s33, 0
      %p186 = por %p184, %p185
      %s188 = sadd.s32 %s187, 1
      %p191 = scmp.eq.s32.totalorder %s27, 1
      %p192 = scmp.ne.s32.totalorder %s187, %s189
      %p193 = scmp.eq.s32.totalorder %s27, 0
      %p194 = por %p192, %p193
      %p195 = scmp.ne.s32.totalorder %s187, %s189
      %p196 = scmp.eq.s32.totalorder %s32, 1
      %p197 = por %p195, %p196
      %p198 = scmp.ne.s32.totalorder %s189, %s190
      %p199 = scmp.eq.s32.totalorder %s32, 0
      %p200 = por %p198, %p199
      %p201 = scmp.ne.s32.totalorder %s189, %s190
      %p202 = scmp.eq.s32.totalorder %s33, 1
      %p203 = por %p201, %p202
      %p205 = scmp.ne.s32.totalorder %s190, %s204
      %p206 = scmp.eq.s32.totalorder %s33, 0
      %p207 = por %p205, %p206
      %s209 = sadd.s32 %s208, 1
      %p212 = scmp.eq.s32.totalorder %s27, 1
      %p213 = scmp.ne.s32.totalorder %s208, %s210
      %p214 = scmp.eq.s32.totalorder %s27, 0
      %p215 = por %p213, %p214
      %p216 = scmp.ne.s32.totalorder %s208, %s210
      %p217 = scmp.eq.s32.totalorder %s32, 1
      %p218 = por %p216, %p217
      %p219 = scmp.ne.s32.totalorder %s210, %s211
      %p220 = scmp.eq.s32.totalorder %s32, 0
      %p221 = por %p219, %p220
      %p222 = scmp.ne.s32.totalorder %s210, %s211
      %p223 = scmp.eq.s32.totalorder %s33, 1
      %p224 = por %p222, %p223
      %p226 = scmp.ne.s32.totalorder %s211, %s225
      %p227 = scmp.eq.s32.totalorder %s33, 0
      %p228 = por %p226, %p227
      %s230 = sadd.s32 %s229, 1
      %p233 = scmp.eq.s32.totalorder %s27, 1
      %p234 = scmp.ne.s32.totalorder %s229, %s231
      %p235 = scmp.eq.s32.totalorder %s27, 0
      %p236 = por %p234, %p235
      %p237 = scmp.ne.s32.totalorder %s229, %s231
      %p238 = scmp.eq.s32.totalorder %s32, 1
      %p239 = por %p237, %p238
      %p240 = scmp.ne.s32.totalorder %s231, %s232
      %p241 = scmp.eq.s32.totalorder %s32, 0
      %p242 = por %p240, %p241
      %p243 = scmp.ne.s32.totalorder %s231, %s232
      %p244 = scmp.eq.s32.totalorder %s33, 1
      %p245 = por %p243, %p244
      %p247 = scmp.ne.s32.totalorder %s232, %s246
      %p248 = scmp.eq.s32.totalorder %s33, 0
      %p249 = por %p247, %p248
      %s251 = sadd.s32 %s250, 1
      %p254 = scmp.eq.s32.totalorder %s27, 1
      %p255 = scmp.ne.s32.totalorder %s250, %s252
      %p256 = scmp.eq.s32.totalorder %s27, 0
      %p257 = por %p255, %p256
      %p258 = scmp.ne.s32.totalorder %s250, %s252
      %p259 = scmp.eq.s32.totalorder %s32, 1
      %p260 = por %p258, %p259
      %p261 = scmp.ne.s32.totalorder %s252, %s253
      %p262 = scmp.eq.s32.totalorder %s32, 0
      %p263 = por %p261, %p262
      %p264 = scmp.ne.s32.totalorder %s252, %s253
      %p265 = scmp.eq.s32.totalorder %s33, 1
      %p266 = por %p264, %p265
      %p268 = scmp.ne.s32.totalorder %s253, %s267
      %p269 = scmp.eq.s32.totalorder %s33, 0
      %p270 = por %p268, %p269
      %s272 = sadd.s32 %s271, 1
      %p275 = scmp.eq.s32.totalorder %s27, 1
      %p276 = scmp.ne.s32.totalorder %s271, %s273
      %p277 = scmp.eq.s32.totalorder %s27, 0
      %p278 = por %p276, %p277
      %p279 = scmp.ne.s32.totalorder %s271, %s273
      %p280 = scmp.eq.s32.totalorder %s32, 1
      %p281 = por %p279, %p280
      %p282 = scmp.ne.s32.totalorder %s273, %s274
      %p283 = scmp.eq.s32.totalorder %s32, 0
      %p284 = por %p282, %p283
      %p285 = scmp.ne.s32.totalorder %s273, %s274
      %p286 = scmp.eq.s32.totalorder %s33, 1
      %p287 = por %p285, %p286
      %p289 = scmp.ne.s32.totalorder %s274, %s288
      %p290 = scmp.eq.s32.totalorder %s33, 0
      %p291 = por %p289, %p290
      %s292 = ssub.s32 %s27, %s34
      %p293 = scmp.eq.s32.totalorder %s292, 0
      %s295 = sadd.s32 %s294, 1
      %s296 = scalar_select %p293, %s294, %s295
      %p299 = pneg %p293
      %p300 = scmp.eq.s32.totalorder %s27, 1
      %p301 = por %p299, %p300
      %p302 = scmp.ne.s32.totalorder %s294, %s297
      %p303 = scmp.eq.s32.totalorder %s27, 0
      %p304 = por %p302, %p303
      %p305 = scmp.ne.s32.totalorder %s294, %s297
      %p306 = scmp.eq.s32.totalorder %s32, 1
      %p307 = por %p305, %p306
      %p308 = scmp.ne.s32.totalorder %s297, %s298
      %p309 = scmp.eq.s32.totalorder %s32, 0
      %p310 = por %p308, %p309
      %p311 = scmp.ne.s32.totalorder %s297, %s298
      %p312 = scmp.eq.s32.totalorder %s33, 1
      %p313 = por %p311, %p312
      %p315 = scmp.ne.s32.totalorder %s298, %s314
      %p316 = scmp.eq.s32.totalorder %s33, 0
      %p317 = por %p315, %p316
      %p318 = scmp.le.s32.totalorder 1, %s27
      %p319 = scmp.lt.s32.totalorder %s27, 3
      %p320 = pnand %p318, %p319
      %p321 = pneg %p320
      // Predicated region
      $region9: #{mask_generator.1} parent=5 // pred_check
        _
      $region10: #{mask_generator.1} parent=5 // pred_check_branch
        %323 = sbr.rel (%p320) target = $region12
      $region11: #{mask_generator.1} parent=5 // pred_region
        %s324 = ssub.s32 %s27, 1
        // Predicated region
        $region13: #{mask_generator.1} parent=11 // pred_check
          %p325 = pneg %p74
        $region14: #{mask_generator.1} parent=11 // pred_check_branch
          %327 = sbr.rel (%p325) target = $region16
        $region15: #{mask_generator.1} parent=11 // pred_region
          %s329 = ssub.s32 512, 512
          %330 = vsyncadd [#allocation6], %s329
          %s331 = sshll.u32 [#allocation5], 4
          %s332 = int_to_ptr.vmem [resolvable:$true] %s331
          %337 = dma.hbm_to_vmem [thread:$0]  %s1, 512, %s332, [#allocation6], 128, 128, 8
        $region16: #{mask_generator.1} parent=11 // pred_fallthru
          _
        // Predicated region
        $region17: #{mask_generator.1} parent=11 // pred_check
          %p338 = pneg %p95
        $region18: #{mask_generator.1} parent=11 // pred_check_branch
          %340 = sbr.rel (%p338) target = $region20
        $region19: #{mask_generator.1} parent=11 // pred_region
          _
        $region20: #{mask_generator.1} parent=11 // pred_fallthru
          _
        // Predicated region
        $region21: #{mask_generator.1} parent=11 // pred_check
          %p341 = pneg %p116
        $region22: #{mask_generator.1} parent=11 // pred_check_branch
          %343 = sbr.rel (%p341) target = $region24
        $region23: #{mask_generator.1} parent=11 // pred_region
          _
        $region24: #{mask_generator.1} parent=11 // pred_fallthru
          _
        // Predicated region
        $region25: #{mask_generator.1} parent=11 // pred_check
          %p344 = pneg %p137
        $region26: #{mask_generator.1} parent=11 // pred_check_branch
          %346 = sbr.rel (%p344) target = $region28
        $region27: #{mask_generator.1} parent=11 // pred_region
          %s348 = ssub.s32 64, 64
          %349 = vsyncadd [#allocation6], %s348
          %s350 = sshll.u32 [#allocation7], 4
          %s351 = int_to_ptr.vmem [resolvable:$true] %s350
          %356 = dma.hbm_to_vmem [thread:$0]  %s4, 64, %s351, [#allocation6], 32, 32, 2
        $region28: #{mask_generator.1} parent=11 // pred_fallthru
          _
        // Predicated region
        $region29: #{mask_generator.1} parent=11 // pred_check
          %p357 = pneg %p158
        $region30: #{mask_generator.1} parent=11 // pred_check_branch
          %359 = sbr.rel (%p357) target = $region32
        $region31: #{mask_generator.1} parent=11 // pred_region
          _
        $region32: #{mask_generator.1} parent=11 // pred_fallthru
          _
        // Predicated region
        $region33: #{mask_generator.1} parent=11 // pred_check
          %p360 = pneg %p179
        $region34: #{mask_generator.1} parent=11 // pred_check_branch
          %362 = sbr.rel (%p360) target = $region36
        $region35: #{mask_generator.1} parent=11 // pred_region
          %s364 = ssub.s32 2048, 2048
          %365 = vsyncadd [#allocation9], %s364
          %s366 = sshll.u32 [#allocation8], 4
          %s367 = int_to_ptr.vmem [resolvable:$true] %s366
          %372 = dma.hbm_to_vmem [thread:$0]  %s6, 2048, %s367, [#allocation9], 128, 128, 8
        $region36: #{mask_generator.1} parent=11 // pred_fallthru
          _
        // Predicated region
        $region37: #{mask_generator.1} parent=11 // pred_check
          %p373 = pneg %p200
        $region38: #{mask_generator.1} parent=11 // pred_check_branch
          %375 = sbr.rel (%p373) target = $region40
        $region39: #{mask_generator.1} parent=11 // pred_region
          %s377 = ssub.s32 32, 32
          %378 = vsyncadd [#allocation9], %s377
          %s379 = sshll.u32 [#allocation10], 4
          %s380 = int_to_ptr.vmem [resolvable:$true] %s379
          %385 = dma.hbm_to_vmem [thread:$0]  %s7, 32, %s380, [#allocation9], 16, 16, 1
        $region40: #{mask_generator.1} parent=11 // pred_fallthru
          _
        // Predicated region
        $region41: #{mask_generator.1} parent=11 // pred_check
          %p386 = pneg %p221
        $region42: #{mask_generator.1} parent=11 // pred_check_branch
          %388 = sbr.rel (%p386) target = $region44
        $region43: #{mask_generator.1} parent=11 // pred_region
          _
        $region44: #{mask_generator.1} parent=11 // pred_fallthru
          _
        // Predicated region
        $region45: #{mask_generator.1} parent=11 // pred_check
          %p389 = pneg %p242
        $region46: #{mask_generator.1} parent=11 // pred_check_branch
          %391 = sbr.rel (%p389) target = $region48
        $region47: #{mask_generator.1} parent=11 // pred_region
          _
        $region48: #{mask_generator.1} parent=11 // pred_fallthru
          _
        // Predicated region
        $region49: #{mask_generator.1} parent=11 // pred_check
          %p392 = pneg %p263
        $region50: #{mask_generator.1} parent=11 // pred_check_branch
          %394 = sbr.rel (%p392) target = $region52
        $region51: #{mask_generator.1} parent=11 // pred_region
          _
        $region52: #{mask_generator.1} parent=11 // pred_fallthru
          _
        // Predicated region
        $region53: #{mask_generator.1} parent=11 // pred_check
          %p395 = pneg %p284
        $region54: #{mask_generator.1} parent=11 // pred_check_branch
          %397 = sbr.rel (%p395) target = $region56
        $region55: #{mask_generator.1} parent=11 // pred_region
          %s399 = ssub.s32 16, 16
          %400 = vsyncadd [#allocation12], %s399
          %s402 = sshll.u32 [#allocation11], 4
          %s403 = int_to_ptr.vmem [resolvable:$true] %s402
          %405 = dma.hbm_to_vmem [thread:$0]  %s11, 16, %s403, [#allocation12]
        $region56: #{mask_generator.1} parent=11 // pred_fallthru
          _
      $region12: #{mask_generator.1} parent=5 // pred_fallthru
        _
      %p406 = scmp.lt.s32.totalorder %s27, 2
      // Predicated region
      $region57: #{mask_generator.1} parent=5 // pred_check
        %p407 = pneg %p406
      $region58: #{mask_generator.1} parent=5 // pred_check_branch
        %409 = sbr.rel (%p407) target = $region60
      $region59: #{mask_generator.1} parent=5 // pred_region
        // Predicated region
        $region61: #{mask_generator.1} parent=59 // pred_check
          %p410 = pneg %p47
        $region62: #{mask_generator.1} parent=59 // pred_check_branch
          %412 = sbr.rel (%p410) target = $region64
        $region63: #{mask_generator.1} parent=59 // pred_region
          %s413 = sand.u32 %s37, 1
          %s414 = scalar_lea.sflag [#allocation3], %s413
          %s415 = sand.u32 %s37, 1
          %s416 = smul.addr %s415, 8
          %s417 = scalar_lea.vmem [#allocation2], %s416
          %s419 = ssub.s32 128, 128
          %420 = vsyncadd %s414, %s419
          %s421 = smul.addr %s27, 128
          %s422 = scalar_lea.hbm %s0, %s421
          %s424 = sshll.u32 %s417, 4
          %s425 = int_to_ptr.vmem [resolvable:$true] %s424
          %427 = dma.hbm_to_vmem [thread:$0]  %s422, 128, %s425, %s414
        $region64: #{mask_generator.1} parent=59 // pred_fallthru
          _
      $region60: #{mask_generator.1} parent=5 // pred_fallthru
        _
      %p428 = scmp.le.s32.totalorder 1, %s27
      %p429 = scmp.lt.s32.totalorder %s27, 3
      %p430 = pnand %p428, %p429
      %p431 = pneg %p430
      // Predicated region
      $region65: #{mask_generator.1} parent=5 // pred_check
        _
      $region66: #{mask_generator.1} parent=5 // pred_check_branch
        %433 = sbr.rel (%p430) target = $region68
      $region67: #{mask_generator.1} parent=5 // pred_region
        %s434 = ssub.s32 %s27, 1
        %s435 = sand.u32 %s40, 1
        %s436 = scalar_lea.sflag [#allocation3], %s435
        %s437 = sand.u32 %s40, 1
        %s438 = smul.addr %s437, 8
        %s439 = scalar_lea.vmem [#allocation2], %s438
        // Predicated region
        $region69: #{mask_generator.1} parent=67 // pred_check
          %p440 = pneg %p53
        $region70: #{mask_generator.1} parent=67 // pred_check_branch
          %442 = sbr.rel (%p440) target = $region72
        $region71: #{mask_generator.1} parent=67 // pred_region
          %443 = dma.done %s436, 128
        $region72: #{mask_generator.1} parent=67 // pred_fallthru
          _
        // Predicated region
        $region73: #{mask_generator.1} parent=67 // pred_check
          %p444 = pneg %p74
        $region74: #{mask_generator.1} parent=67 // pred_check_branch
          %446 = sbr.rel (%p444) target = $region76
        $region75: #{mask_generator.1} parent=67 // pred_region
          %447 = dma.done [#allocation6], 512
        $region76: #{mask_generator.1} parent=67 // pred_fallthru
          _
        // Predicated region
        $region77: #{mask_generator.1} parent=67 // pred_check
          %p448 = pneg %p137
        $region78: #{mask_generator.1} parent=67 // pred_check_branch
          %450 = sbr.rel (%p448) target = $region80
        $region79: #{mask_generator.1} parent=67 // pred_region
          %451 = dma.done [#allocation6], 64
        $region80: #{mask_generator.1} parent=67 // pred_fallthru
          _
        // Predicated region
        $region81: #{mask_generator.1} parent=67 // pred_check
          %p452 = pneg %p179
        $region82: #{mask_generator.1} parent=67 // pred_check_branch
          %454 = sbr.rel (%p452) target = $region84
        $region83: #{mask_generator.1} parent=67 // pred_region
          %455 = dma.done [#allocation9], 2048
        $region84: #{mask_generator.1} parent=67 // pred_fallthru
          _
        // Predicated region
        $region85: #{mask_generator.1} parent=67 // pred_check
          %p456 = pneg %p200
        $region86: #{mask_generator.1} parent=67 // pred_check_branch
          %458 = sbr.rel (%p456) target = $region88
        $region87: #{mask_generator.1} parent=67 // pred_region
          %459 = dma.done [#allocation9], 32
        $region88: #{mask_generator.1} parent=67 // pred_fallthru
          _
        // Predicated region
        $region89: #{mask_generator.1} parent=67 // pred_check
          %p460 = pneg %p284
        $region90: #{mask_generator.1} parent=67 // pred_check_branch
          %462 = sbr.rel (%p460) target = $region92
        $region91: #{mask_generator.1} parent=67 // pred_region
          %463 = dma.done [#allocation12], 16
        $region92: #{mask_generator.1} parent=67 // pred_fallthru
          _
        %s464 = sand.u32 %s40, 1
        %s465 = scalar_lea.sflag [#allocation3], %s464
        %s466 = sand.u32 %s40, 1
        %s467 = smul.addr %s466, 8
        %s468 = scalar_lea.vmem [#allocation2], %s467
        %p469 = pneg %p53
        %p470 = pneg %p50
        %p471 = pneg %p74
        %p472 = pneg %p71
        %p473 = pneg %p95
        %p474 = pneg %p92
        %p475 = pneg %p116
        %p476 = pneg %p113
        %p477 = pneg %p137
        %p478 = pneg %p134
        %p479 = pneg %p158
        %p480 = pneg %p155
        %p481 = pneg %p179
        %p482 = pneg %p176
        %p483 = pneg %p200
        %p484 = pneg %p197
        %p485 = pneg %p221
        %p486 = pneg %p218
        %p487 = pneg %p242
        %p488 = pneg %p239
        %p489 = pneg %p263
        %p490 = pneg %p260
        %p491 = pneg %p284
        %p492 = pneg %p281
        %p493 = pneg %p310
        %p494 = pneg %p307
        %s495 = sand.u32 %s297, 1
        %s496 = scalar_lea.sflag [#allocation4], %s495
        %s497 = sand.u32 %s297, 1
        %s498 = smul.addr %s497, 8
        %s499 = scalar_lea.vmem [#allocation13], %s498
        %v500 = vld [vmem:[%s439] sm:$0xff]
        %v501 = vld [vmem:[#allocation5] sm:$0xff]
        %v502 = vld [vmem:[#allocation5 + $0x8] sm:$0xff]
        %v503 = vld [vmem:[#allocation5 + $0x10] sm:$0xff]
        %v504 = vld [vmem:[#allocation5 + $0x18] sm:$0xff]
        %v505 = vld [vmem:[%s2] sm:$0x1]
        %v507 = vlaneseq
        %v508 = vshrl.u32 %v507, 7
        %v509 = vsub.s32 0, %v508
        %v510 = vrot.slane %v505, %v509
        %vm512 = vcmask 261120
        %v514 = vsel %vm512, %v500, 0
        %516 = vmatprep.subr.mxu0 0.0
        %517 = vmatpush1.msra.mxu0 %v501
        %518 = vmatprep.subr.mxu0 0.0
        %519 = vmatpush1.msra.mxu0 %v502
        %520 = vmatprep.subr.mxu0 0.0
        %521 = vmatpush1.msra.mxu0 %v503
        %522 = vmatprep.subr.mxu0 0.0
        %523 = vmatpush1.msra.mxu0 %v504
        %524 = vmatprep.subr.mxu0 0.0
        %525 = vmatpush1.msra.mxu0 0.0
        %526 = vmatprep.subr.mxu0 0.0
        %527 = vmatpush1.msra.mxu0 0.0
        %528 = vmatprep.subr.mxu0 0.0
        %529 = vmatpush1.msra.mxu0 0.0
        %530 = vmatprep.subr.mxu0 0.0
        %531 = vmatpush1.msra.mxu0 0.0
        %532 = vmatprep.subr.mxu0 0.0
        %533 = vmatpush1.msra.mxu0 0.0
        %534 = vmatprep.subr.mxu0 0.0
        %535 = vmatpush1.msra.mxu0 0.0
        %536 = vmatprep.subr.mxu0 0.0
        %537 = vmatpush1.msra.mxu0 0.0
        %538 = vmatprep.subr.mxu0 0.0
        %539 = vmatpush1.msra.mxu0 0.0
        %540 = vmatprep.subr.mxu0 0.0
        %541 = vmatpush1.msra.mxu0 0.0
        %542 = vmatprep.subr.mxu0 0.0
        %543 = vmatpush1.msra.mxu0 0.0
        %544 = vmatprep.subr.mxu0 0.0
        %545 = vmatpush1.msra.mxu0 0.0
        %546 = vmatprep.subr.mxu0 0.0
        %547 = vmatpush1.msra.mxu0 0.0
        %548 = vmatprep.subr.mxu0 0.0
        %549 = vmatpush1.msra.mxu0 0.0
        %550 = vmatprep.subr.mxu0 0.0
        %551 = vmatpush1.msra.mxu0 0.0
        %552 = vmatprep.subr.mxu0 0.0
        %553 = vmatpush1.msra.mxu0 0.0
        %554 = vmatprep.subr.mxu0 0.0
        %555 = vmatpush1.msra.mxu0 0.0
        %556 = vmatprep.subr.mxu0 0.0
        %557 = vmatpush1.msra.mxu0 0.0
        %558 = vmatprep.subr.mxu0 0.0
        %559 = vmatpush1.msra.mxu0 0.0
        %560 = vmatprep.subr.mxu0 0.0
        %561 = vmatpush1.msra.mxu0 0.0
        %562 = vmatprep.subr.mxu0 0.0
        %563 = vmatpush1.msra.mxu0 0.0
        %564 = vmatprep.subr.mxu0 0.0
        %565 = vmatpush1.msra.mxu0 0.0
        %566 = vmatprep.subr.mxu0 0.0
        %567 = vmatpush1.msra.mxu0 0.0
        %568 = vmatprep.subr.mxu0 0.0
        %569 = vmatpush1.msra.mxu0 0.0
        %570 = vmatprep.subr.mxu0 0.0
        %571 = vmatpush1.msra.mxu0 0.0
        %572 = vmatprep.subr.mxu0 0.0
        %573 = vmatpush1.msra.mxu0 0.0
        %574 = vmatprep.subr.mxu0 0.0
        %575 = vmatpush1.msra.mxu0 0.0
        %576 = vmatprep.subr.mxu0 0.0
        %577 = vmatpush1.msra.mxu0 0.0
        %578 = vmatprep.subr.mxu0 0.0
        %579 = vmatpush1.msra.mxu0 0.0
        %580 = vmatprep.mubr.f32.mxu0 0.0
        %581 = vmatmul.mubr.f32.gmra.mrb[0].mxu0 %v514
        %v582 = vpop.f32.mrb[0].mxu0
        %v583 = vadd.f32 %v510, %v582
        %v584 = vpop.f32.mrb[0].mxu0
        %585 = vdwg.mxu0
        %v586 = vld [vmem:[%s9] sm:$0x3f]
        %v587 = vld [vmem:[%s3] sm:$0xff]
        %v588 = vld [vmem:[%s3 + $0x8] sm:$0xff]
        %v589 = vld [vmem:[%s3 + $0x10] sm:$0xff]
        %v590 = vld [vmem:[%s3 + $0x18] sm:$0xff]
        %v591 = vld [vmem:[%s3 + $0x20] sm:$0xff]
        %v592 = vld [vmem:[%s3 + $0x28] sm:$0xff]
        %v593 = vld [vmem:[%s3 + $0x30] sm:$0xff]
        %v594 = vld [vmem:[%s3 + $0x38] sm:$0xff]
        %v595 = vld [vmem:[%s3 + $0x40] sm:$0xff]
        %v596 = vld [vmem:[%s3 + $0x48] sm:$0xff]
        %v597 = vld [vmem:[%s3 + $0x50] sm:$0xff]
        %v598 = vld [vmem:[%s3 + $0x58] sm:$0xff]
        %v599 = vld [vmem:[%s3 + $0x60] sm:$0xff]
        %v600 = vld [vmem:[%s3 + $0x68] sm:$0xff]
        %v601 = vld [vmem:[%s3 + $0x70] sm:$0xff]
        %v602 = vld [vmem:[%s3 + $0x78] sm:$0xff]
        %v603 = vld [vmem:[#allocation7] sm:$0x3]
        %v605 = vlaneseq
        %v606 = vshrl.u32 %v605, 7
        %v607 = vsub.s32 0, %v606
        %v608 = vrot.slane %v603, %v607
        %v609 = vlaneseq
        %v610 = vshrl.u32 %v609, 7
        %v611 = vsub.s32 1, %v610
        %v612 = vrot.slane %v603, %v611
        %vm615 = vcmask 523264
        %v617 = vsel %vm615, %v583, 0
        %619 = vmatprep.subr.mxu0 %v588
        %620 = vmatpush1.msra.mxu0 %v587
        %621 = vmatprep.subr.mxu0 %v590
        %622 = vmatpush1.msra.mxu0 %v589
        %623 = vmatprep.subr.mxu0 %v592
        %624 = vmatpush1.msra.mxu0 %v591
        %625 = vmatprep.subr.mxu0 %v594
        %626 = vmatpush1.msra.mxu0 %v593
        %627 = vmatprep.subr.mxu0 %v596
        %628 = vmatpush1.msra.mxu0 %v595
        %629 = vmatprep.subr.mxu0 %v598
        %630 = vmatpush1.msra.mxu0 %v597
        %631 = vmatprep.subr.mxu0 %v600
        %632 = vmatpush1.msra.mxu0 %v599
        %633 = vmatprep.subr.mxu0 %v602
        %634 = vmatpush1.msra.mxu0 %v601
        %635 = vmatprep.subr.mxu0 0.0
        %636 = vmatpush1.msra.mxu0 0.0
        %637 = vmatprep.subr.mxu0 0.0
        %638 = vmatpush1.msra.mxu0 0.0
        %639 = vmatprep.subr.mxu0 0.0
        %640 = vmatpush1.msra.mxu0 0.0
        %641 = vmatprep.subr.mxu0 0.0
        %642 = vmatpush1.msra.mxu0 0.0
        %643 = vmatprep.subr.mxu0 0.0
        %644 = vmatpush1.msra.mxu0 0.0
        %645 = vmatprep.subr.mxu0 0.0
        %646 = vmatpush1.msra.mxu0 0.0
        %647 = vmatprep.subr.mxu0 0.0
        %648 = vmatpush1.msra.mxu0 0.0
        %649 = vmatprep.subr.mxu0 0.0
        %650 = vmatpush1.msra.mxu0 0.0
        %651 = vmatprep.subr.mxu0 0.0
        %652 = vmatpush1.msra.mxu0 0.0
        %653 = vmatprep.subr.mxu0 0.0
        %654 = vmatpush1.msra.mxu0 0.0
        %655 = vmatprep.subr.mxu0 0.0
        %656 = vmatpush1.msra.mxu0 0.0
        %657 = vmatprep.subr.mxu0 0.0
        %658 = vmatpush1.msra.mxu0 0.0
        %659 = vmatprep.subr.mxu0 0.0
        %660 = vmatpush1.msra.mxu0 0.0
        %661 = vmatprep.subr.mxu0 0.0
        %662 = vmatpush1.msra.mxu0 0.0
        %663 = vmatprep.subr.mxu0 0.0
        %664 = vmatpush1.msra.mxu0 0.0
        %665 = vmatprep.subr.mxu0 0.0
        %666 = vmatpush1.msra.mxu0 0.0
        %667 = vmatprep.subr.mxu0 0.0
        %668 = vmatpush1.msra.mxu0 0.0
        %669 = vmatprep.subr.mxu0 0.0
        %670 = vmatpush1.msra.mxu0 0.0
        %671 = vmatprep.subr.mxu0 0.0
        %672 = vmatpush1.msra.mxu0 0.0
        %673 = vmatprep.subr.mxu0 0.0
        %674 = vmatpush1.msra.mxu0 0.0
        %675 = vmatprep.subr.mxu0 0.0
        %676 = vmatpush1.msra.mxu0 0.0
        %677 = vmatprep.subr.mxu0 0.0
        %678 = vmatpush1.msra.mxu0 0.0
        %679 = vmatprep.subr.mxu0 0.0
        %680 = vmatpush1.msra.mxu0 0.0
        %681 = vmatprep.subr.mxu0 0.0
        %682 = vmatpush1.msra.mxu0 0.0
        %683 = vmatprep.mubr.f32.mxu0 0.0
        %684 = vmatmul.mubr.f32.gmra.mrb[0].mxu0 %v617
        %v685 = vpop.f32.mrb[0].mxu0
        %v686 = vadd.f32 %v608, %v685
        %v687 = vpop.f32.mrb[0].mxu0
        %v688 = vadd.f32 %v612, %v687
        %689 = vdwg.mxu0
        %691 = vrot.lane.b32.xlu0 %v686, 112
        %v692 = vpop.permute.xlu0 %691
        %693 = vrot.lane.b32.xlu0 %v686, 96
        %v694 = vpop.permute.xlu0 %693
        %695 = vrot.lane.b32.xlu0 %v686, 80
        %v696 = vpop.permute.xlu0 %695
        %698 = vrot.lane.b32.xlu0 %v688, 112
        %v699 = vpop.permute.xlu0 %698
        %701 = vrot.lane.b32.xlu0 %v688, 96
        %v702 = vpop.permute.xlu0 %701
        %704 = vrot.lane.b32.xlu0 %v688, 80
        %v705 = vpop.permute.xlu0 %704
        %707 = vrot.lane.b32.xlu0 %v686, 64
        %v708 = vpop.permute.xlu0 %707
        %vm709 = vcmask 130048
        %v710 = vsel %vm709, %v686, 0
        %v712 = vsel %vm709, %v708, 0
        %714 = vmatprep.subr.mxu0 0.0
        %715 = vmatpush1.xpose.msra.mxu0 %v712
        %716 = vmatprep.subr.mxu0 0.0
        %717 = vmatpush1.xpose.msra.mxu0 0.0
        %718 = vmatprep.subr.mxu0 0.0
        %719 = vmatpush1.xpose.msra.mxu0 0.0
        %720 = vmatprep.subr.mxu0 0.0
        %721 = vmatpush1.xpose.msra.mxu0 0.0
        %722 = vmatprep.subr.mxu0 0.0
        %723 = vmatpush1.xpose.msra.mxu0 0.0
        %724 = vmatprep.subr.mxu0 0.0
        %725 = vmatpush1.xpose.msra.mxu0 0.0
        %726 = vmatprep.subr.mxu0 0.0
        %727 = vmatpush1.xpose.msra.mxu0 0.0
        %728 = vmatprep.subr.mxu0 0.0
        %729 = vmatpush1.xpose.msra.mxu0 0.0
        %730 = vmatprep.subr.mxu0 0.0
        %731 = vmatpush1.xpose.msra.mxu0 0.0
        %732 = vmatprep.subr.mxu0 0.0
        %733 = vmatpush1.xpose.msra.mxu0 0.0
        %734 = vmatprep.subr.mxu0 0.0
        %735 = vmatpush1.xpose.msra.mxu0 0.0
        %736 = vmatprep.subr.mxu0 0.0
        %737 = vmatpush1.xpose.msra.mxu0 0.0
        %738 = vmatprep.subr.mxu0 0.0
        %739 = vmatpush1.xpose.msra.mxu0 0.0
        %740 = vmatprep.subr.mxu0 0.0
        %741 = vmatpush1.xpose.msra.mxu0 0.0
        %742 = vmatprep.subr.mxu0 0.0
        %743 = vmatpush1.xpose.msra.mxu0 0.0
        %744 = vmatprep.subr.mxu0 0.0
        %745 = vmatpush1.xpose.msra.mxu0 0.0
        %746 = vmatprep.subr.mxu0 0.0
        %747 = vmatpush1.xpose.msra.mxu0 0.0
        %748 = vmatprep.subr.mxu0 0.0
        %749 = vmatpush1.xpose.msra.mxu0 0.0
        %750 = vmatprep.subr.mxu0 0.0
        %751 = vmatpush1.xpose.msra.mxu0 0.0
        %752 = vmatprep.subr.mxu0 0.0
        %753 = vmatpush1.xpose.msra.mxu0 0.0
        %754 = vmatprep.subr.mxu0 0.0
        %755 = vmatpush1.xpose.msra.mxu0 0.0
        %756 = vmatprep.subr.mxu0 0.0
        %757 = vmatpush1.xpose.msra.mxu0 0.0
        %758 = vmatprep.subr.mxu0 0.0
        %759 = vmatpush1.xpose.msra.mxu0 0.0
        %760 = vmatprep.subr.mxu0 0.0
        %761 = vmatpush1.xpose.msra.mxu0 0.0
        %762 = vmatprep.subr.mxu0 0.0
        %763 = vmatpush1.xpose.msra.mxu0 0.0
        %764 = vmatprep.subr.mxu0 0.0
        %765 = vmatpush1.xpose.msra.mxu0 0.0
        %766 = vmatprep.subr.mxu0 0.0
        %767 = vmatpush1.xpose.msra.mxu0 0.0
        %768 = vmatprep.subr.mxu0 0.0
        %769 = vmatpush1.xpose.msra.mxu0 0.0
        %770 = vmatprep.subr.mxu0 0.0
        %771 = vmatpush1.xpose.msra.mxu0 0.0
        %772 = vmatprep.subr.mxu0 0.0
        %773 = vmatpush1.xpose.msra.mxu0 0.0
        %774 = vmatprep.subr.mxu0 0.0
        %775 = vmatpush1.xpose.msra.mxu0 0.0
        %776 = vmatprep.subr.mxu0 0.0
        %777 = vmatpush1.xpose.msra.mxu0 0.0
        %778 = vmatprep.mubr.f32.mxu0 0.0
        %779 = vmatmul.mubr.f32.gmra.mrb[0].mxu0 %v710
        %v780 = vpop.f32.mrb[0].mxu0
        %v781 = vadd.f32 0.0, %v780
        %v782 = vpop.f32.mrb[0].mxu0
        %783 = vdwg.mxu0
        %784 = vrot.lane.b32.xlu0 %v692, 64
        %v785 = vpop.permute.xlu0 %784
        %v786 = vsel %vm709, %v692, 0
        %v788 = vsel %vm709, %v785, 0
        %790 = vmatprep.subr.mxu0 0.0
        %791 = vmatpush1.xpose.msra.mxu0 %v788
        %792 = vmatprep.subr.mxu0 0.0
        %793 = vmatpush1.xpose.msra.mxu0 0.0
        %794 = vmatprep.subr.mxu0 0.0
        %795 = vmatpush1.xpose.msra.mxu0 0.0
        %796 = vmatprep.subr.mxu0 0.0
        %797 = vmatpush1.xpose.msra.mxu0 0.0
        %798 = vmatprep.subr.mxu0 0.0
        %799 = vmatpush1.xpose.msra.mxu0 0.0
        %800 = vmatprep.subr.mxu0 0.0
        %801 = vmatpush1.xpose.msra.mxu0 0.0
        %802 = vmatprep.subr.mxu0 0.0
        %803 = vmatpush1.xpose.msra.mxu0 0.0
        %804 = vmatprep.subr.mxu0 0.0
        %805 = vmatpush1.xpose.msra.mxu0 0.0
        %806 = vmatprep.subr.mxu0 0.0
        %807 = vmatpush1.xpose.msra.mxu0 0.0
        %808 = vmatprep.subr.mxu0 0.0
        %809 = vmatpush1.xpose.msra.mxu0 0.0
        %810 = vmatprep.subr.mxu0 0.0
        %811 = vmatpush1.xpose.msra.mxu0 0.0
        %812 = vmatprep.subr.mxu0 0.0
        %813 = vmatpush1.xpose.msra.mxu0 0.0
        %814 = vmatprep.subr.mxu0 0.0
        %815 = vmatpush1.xpose.msra.mxu0 0.0
        %816 = vmatprep.subr.mxu0 0.0
        %817 = vmatpush1.xpose.msra.mxu0 0.0
        %818 = vmatprep.subr.mxu0 0.0
        %819 = vmatpush1.xpose.msra.mxu0 0.0
        %820 = vmatprep.subr.mxu0 0.0
        %821 = vmatpush1.xpose.msra.mxu0 0.0
        %822 = vmatprep.subr.mxu0 0.0
        %823 = vmatpush1.xpose.msra.mxu0 0.0
        %824 = vmatprep.subr.mxu0 0.0
        %825 = vmatpush1.xpose.msra.mxu0 0.0
        %826 = vmatprep.subr.mxu0 0.0
        %827 = vmatpush1.xpose.msra.mxu0 0.0
        %828 = vmatprep.subr.mxu0 0.0
        %829 = vmatpush1.xpose.msra.mxu0 0.0
        %830 = vmatprep.subr.mxu0 0.0
        %831 = vmatpush1.xpose.msra.mxu0 0.0
        %832 = vmatprep.subr.mxu0 0.0
        %833 = vmatpush1.xpose.msra.mxu0 0.0
        %834 = vmatprep.subr.mxu0 0.0
        %835 = vmatpush1.xpose.msra.mxu0 0.0
        %836 = vmatprep.subr.mxu0 0.0
        %837 = vmatpush1.xpose.msra.mxu0 0.0
        %838 = vmatprep.subr.mxu0 0.0
        %839 = vmatpush1.xpose.msra.mxu0 0.0
        %840 = vmatprep.subr.mxu0 0.0
        %841 = vmatpush1.xpose.msra.mxu0 0.0
        %842 = vmatprep.subr.mxu0 0.0
        %843 = vmatpush1.xpose.msra.mxu0 0.0
        %844 = vmatprep.subr.mxu0 0.0
        %845 = vmatpush1.xpose.msra.mxu0 0.0
        %846 = vmatprep.subr.mxu0 0.0
        %847 = vmatpush1.xpose.msra.mxu0 0.0
        %848 = vmatprep.subr.mxu0 0.0
        %849 = vmatpush1.xpose.msra.mxu0 0.0
        %850 = vmatprep.subr.mxu0 0.0
        %851 = vmatpush1.xpose.msra.mxu0 0.0
        %852 = vmatprep.subr.mxu0 0.0
        %853 = vmatpush1.xpose.msra.mxu0 0.0
        %854 = vmatprep.mubr.f32.mxu0 0.0
        %855 = vmatmul.mubr.f32.gmra.mrb[0].mxu0 %v786
        %v856 = vpop.f32.mrb[0].mxu0
        %v857 = vadd.f32 0.0, %v856
        %v858 = vpop.f32.mrb[0].mxu0
        %859 = vdwg.mxu0
        %860 = vrot.lane.b32.xlu0 %v694, 64
        %v861 = vpop.permute.xlu0 %860
        %v862 = vsel %vm709, %v694, 0
        %v864 = vsel %vm709, %v861, 0
        %866 = vmatprep.subr.mxu0 0.0
        %867 = vmatpush1.xpose.msra.mxu0 %v864
        %868 = vmatprep.subr.mxu0 0.0
        %869 = vmatpush1.xpose.msra.mxu0 0.0
        %870 = vmatprep.subr.mxu0 0.0
        %871 = vmatpush1.xpose.msra.mxu0 0.0
        %872 = vmatprep.subr.mxu0 0.0
        %873 = vmatpush1.xpose.msra.mxu0 0.0
        %874 = vmatprep.subr.mxu0 0.0
        %875 = vmatpush1.xpose.msra.mxu0 0.0
        %876 = vmatprep.subr.mxu0 0.0
        %877 = vmatpush1.xpose.msra.mxu0 0.0
        %878 = vmatprep.subr.mxu0 0.0
        %879 = vmatpush1.xpose.msra.mxu0 0.0
        %880 = vmatprep.subr.mxu0 0.0
        %881 = vmatpush1.xpose.msra.mxu0 0.0
        %882 = vmatprep.subr.mxu0 0.0
        %883 = vmatpush1.xpose.msra.mxu0 0.0
        %884 = vmatprep.subr.mxu0 0.0
        %885 = vmatpush1.xpose.msra.mxu0 0.0
        %886 = vmatprep.subr.mxu0 0.0
        %887 = vmatpush1.xpose.msra.mxu0 0.0
        %888 = vmatprep.subr.mxu0 0.0
        %889 = vmatpush1.xpose.msra.mxu0 0.0
        %890 = vmatprep.subr.mxu0 0.0
        %891 = vmatpush1.xpose.msra.mxu0 0.0
        %892 = vmatprep.subr.mxu0 0.0
        %893 = vmatpush1.xpose.msra.mxu0 0.0
        %894 = vmatprep.subr.mxu0 0.0
        %895 = vmatpush1.xpose.msra.mxu0 0.0
        %896 = vmatprep.subr.mxu0 0.0
        %897 = vmatpush1.xpose.msra.mxu0 0.0
        %898 = vmatprep.subr.mxu0 0.0
        %899 = vmatpush1.xpose.msra.mxu0 0.0
        %900 = vmatprep.subr.mxu0 0.0
        %901 = vmatpush1.xpose.msra.mxu0 0.0
        %902 = vmatprep.subr.mxu0 0.0
        %903 = vmatpush1.xpose.msra.mxu0 0.0
        %904 = vmatprep.subr.mxu0 0.0
        %905 = vmatpush1.xpose.msra.mxu0 0.0
        %906 = vmatprep.subr.mxu0 0.0
        %907 = vmatpush1.xpose.msra.mxu0 0.0
        %908 = vmatprep.subr.mxu0 0.0
        %909 = vmatpush1.xpose.msra.mxu0 0.0
        %910 = vmatprep.subr.mxu0 0.0
        %911 = vmatpush1.xpose.msra.mxu0 0.0
        %912 = vmatprep.subr.mxu0 0.0
        %913 = vmatpush1.xpose.msra.mxu0 0.0
        %914 = vmatprep.subr.mxu0 0.0
        %915 = vmatpush1.xpose.msra.mxu0 0.0
        %916 = vmatprep.subr.mxu0 0.0
        %917 = vmatpush1.xpose.msra.mxu0 0.0
        %918 = vmatprep.subr.mxu0 0.0
        %919 = vmatpush1.xpose.msra.mxu0 0.0
        %920 = vmatprep.subr.mxu0 0.0
        %921 = vmatpush1.xpose.msra.mxu0 0.0
        %922 = vmatprep.subr.mxu0 0.0
        %923 = vmatpush1.xpose.msra.mxu0 0.0
        %924 = vmatprep.subr.mxu0 0.0
        %925 = vmatpush1.xpose.msra.mxu0 0.0
        %926 = vmatprep.subr.mxu0 0.0
        %927 = vmatpush1.xpose.msra.mxu0 0.0
        %928 = vmatprep.subr.mxu0 0.0
        %929 = vmatpush1.xpose.msra.mxu0 0.0
        %930 = vmatprep.mubr.f32.mxu0 0.0
        %931 = vmatmul.mubr.f32.gmra.mrb[0].mxu0 %v862
        %v932 = vpop.f32.mrb[0].mxu0
        %v933 = vadd.f32 0.0, %v932
        %v934 = vpop.f32.mrb[0].mxu0
        %935 = vdwg.mxu0
        %936 = vrot.lane.b32.xlu0 %v696, 64
        %v937 = vpop.permute.xlu0 %936
        %v938 = vsel %vm709, %v696, 0
        %v940 = vsel %vm709, %v937, 0
        %942 = vmatprep.subr.mxu0 0.0
        %943 = vmatpush1.xpose.msra.mxu0 %v940
        %944 = vmatprep.subr.mxu0 0.0
        %945 = vmatpush1.xpose.msra.mxu0 0.0
        %946 = vmatprep.subr.mxu0 0.0
        %947 = vmatpush1.xpose.msra.mxu0 0.0
        %948 = vmatprep.subr.mxu0 0.0
        %949 = vmatpush1.xpose.msra.mxu0 0.0
        %950 = vmatprep.subr.mxu0 0.0
        %951 = vmatpush1.xpose.msra.mxu0 0.0
        %952 = vmatprep.subr.mxu0 0.0
        %953 = vmatpush1.xpose.msra.mxu0 0.0
        %954 = vmatprep.subr.mxu0 0.0
        %955 = vmatpush1.xpose.msra.mxu0 0.0
        %956 = vmatprep.subr.mxu0 0.0
        %957 = vmatpush1.xpose.msra.mxu0 0.0
        %958 = vmatprep.subr.mxu0 0.0
        %959 = vmatpush1.xpose.msra.mxu0 0.0
        %960 = vmatprep.subr.mxu0 0.0
        %961 = vmatpush1.xpose.msra.mxu0 0.0
        %962 = vmatprep.subr.mxu0 0.0
        %963 = vmatpush1.xpose.msra.mxu0 0.0
        %964 = vmatprep.subr.mxu0 0.0
        %965 = vmatpush1.xpose.msra.mxu0 0.0
        %966 = vmatprep.subr.mxu0 0.0
        %967 = vmatpush1.xpose.msra.mxu0 0.0
        %968 = vmatprep.subr.mxu0 0.0
        %969 = vmatpush1.xpose.msra.mxu0 0.0
        %970 = vmatprep.subr.mxu0 0.0
        %971 = vmatpush1.xpose.msra.mxu0 0.0
        %972 = vmatprep.subr.mxu0 0.0
        %973 = vmatpush1.xpose.msra.mxu0 0.0
        %974 = vmatprep.subr.mxu0 0.0
        %975 = vmatpush1.xpose.msra.mxu0 0.0
        %976 = vmatprep.subr.mxu0 0.0
        %977 = vmatpush1.xpose.msra.mxu0 0.0
        %978 = vmatprep.subr.mxu0 0.0
        %979 = vmatpush1.xpose.msra.mxu0 0.0
        %980 = vmatprep.subr.mxu0 0.0
        %981 = vmatpush1.xpose.msra.mxu0 0.0
        %982 = vmatprep.subr.mxu0 0.0
        %983 = vmatpush1.xpose.msra.mxu0 0.0
        %984 = vmatprep.subr.mxu0 0.0
        %985 = vmatpush1.xpose.msra.mxu0 0.0
        %986 = vmatprep.subr.mxu0 0.0
        %987 = vmatpush1.xpose.msra.mxu0 0.0
        %988 = vmatprep.subr.mxu0 0.0
        %989 = vmatpush1.xpose.msra.mxu0 0.0
        %990 = vmatprep.subr.mxu0 0.0
        %991 = vmatpush1.xpose.msra.mxu0 0.0
        %992 = vmatprep.subr.mxu0 0.0
        %993 = vmatpush1.xpose.msra.mxu0 0.0
        %994 = vmatprep.subr.mxu0 0.0
        %995 = vmatpush1.xpose.msra.mxu0 0.0
        %996 = vmatprep.subr.mxu0 0.0
        %997 = vmatpush1.xpose.msra.mxu0 0.0
        %998 = vmatprep.subr.mxu0 0.0
        %999 = vmatpush1.xpose.msra.mxu0 0.0
        %1000 = vmatprep.subr.mxu0 0.0
        %1001 = vmatpush1.xpose.msra.mxu0 0.0
        %1002 = vmatprep.subr.mxu0 0.0
        %1003 = vmatpush1.xpose.msra.mxu0 0.0
        %1004 = vmatprep.subr.mxu0 0.0
        %1005 = vmatpush1.xpose.msra.mxu0 0.0
        %1006 = vmatprep.mubr.f32.mxu0 0.0
        %1007 = vmatmul.mubr.f32.gmra.mrb[0].mxu0 %v938
        %v1008 = vpop.f32.mrb[0].mxu0
        %v1009 = vadd.f32 0.0, %v1008
        %v1010 = vpop.f32.mrb[0].mxu0
        %1011 = vdwg.mxu0
        %vm1012 = vcmask 64512
        %v1013 = vsel %vm1012, %v781, -inf
        %1014 = vmax.xlane.f32.xlu0 %v1013
        %v1015 = vpop.xlane.xlu0 %1014
        %v1016 = vsel %vm1012, %v857, -inf
        %1017 = vmax.xlane.f32.xlu0 %v1016
        %v1018 = vpop.xlane.xlu0 %1017
        %v1019 = vsel %vm1012, %v933, -inf
        %1020 = vmax.xlane.f32.xlu0 %v1019
        %v1021 = vpop.xlane.xlu0 %1020
        %v1022 = vsel %vm1012, %v1009, -inf
        %1023 = vmax.xlane.f32.xlu0 %v1022
        %v1024 = vpop.xlane.xlu0 %1023
        %v1025 = vsub.f32 %v781, %v1015
        %v1026 = vsub.f32 %v857, %v1018
        %v1027 = vsub.f32 %v933, %v1021
        %v1028 = vsub.f32 %v1009, %v1024
        %v1029 = vmul.f32 %v1025, 1.442695
        %v1030 = vpow.pop %v1029
        %v1031 = vmul.f32 %v1026, 1.442695
        %v1032 = vpow.pop %v1031
        %v1033 = vmul.f32 %v1027, 1.442695
        %v1034 = vpow.pop %v1033
        %v1035 = vmul.f32 %v1028, 1.442695
        %v1036 = vpow.pop %v1035
        %v1037 = vsel %vm1012, %v1030, 0.0
        %1038 = vadd.xlane.f32.xlu0 %v1037
        %v1039 = vpop.xlane.xlu0 %1038
        %v1040 = vsel %vm1012, %v1032, 0.0
        %1041 = vadd.xlane.f32.xlu0 %v1040
        %v1042 = vpop.xlane.xlu0 %1041
        %v1043 = vsel %vm1012, %v1034, 0.0
        %1044 = vadd.xlane.f32.xlu0 %v1043
        %v1045 = vpop.xlane.xlu0 %1044
        %v1046 = vsel %vm1012, %v1036, 0.0
        %1047 = vadd.xlane.f32.xlu0 %v1046
        %v1048 = vpop.xlane.xlu0 %1047
        %v1049 = vrcp.pop %v1039
        %v1050 = vmul.f32 %v1030, %v1049
        %v1051 = vrcp.pop %v1042
        %v1052 = vmul.f32 %v1032, %v1051
        %v1053 = vrcp.pop %v1045
        %v1054 = vmul.f32 %v1034, %v1053
        %v1055 = vrcp.pop %v1048
        %v1056 = vmul.f32 %v1036, %v1055
        %v1058 = vsel %vm1012, %v1050, 0
        %1060 = vmatprep.subr.mxu0 0.0
        %1061 = vmatpush1.msra.mxu0 %v688
        %1062 = vmatprep.subr.mxu0 0.0
        %1063 = vmatpush1.msra.mxu0 0.0
        %1064 = vmatprep.subr.mxu0 0.0
        %1065 = vmatpush1.msra.mxu0 0.0
        %1066 = vmatprep.subr.mxu0 0.0
        %1067 = vmatpush1.msra.mxu0 0.0
        %1068 = vmatprep.subr.mxu0 0.0
        %1069 = vmatpush1.msra.mxu0 0.0
        %1070 = vmatprep.subr.mxu0 0.0
        %1071 = vmatpush1.msra.mxu0 0.0
        %1072 = vmatprep.subr.mxu0 0.0
        %1073 = vmatpush1.msra.mxu0 0.0
        %1074 = vmatprep.subr.mxu0 0.0
        %1075 = vmatpush1.msra.mxu0 0.0
        %1076 = vmatprep.subr.mxu0 0.0
        %1077 = vmatpush1.msra.mxu0 0.0
        %1078 = vmatprep.subr.mxu0 0.0
        %1079 = vmatpush1.msra.mxu0 0.0
        %1080 = vmatprep.subr.mxu0 0.0
        %1081 = vmatpush1.msra.mxu0 0.0
        %1082 = vmatprep.subr.mxu0 0.0
        %1083 = vmatpush1.msra.mxu0 0.0
        %1084 = vmatprep.subr.mxu0 0.0
        %1085 = vmatpush1.msra.mxu0 0.0
        %1086 = vmatprep.subr.mxu0 0.0
        %1087 = vmatpush1.msra.mxu0 0.0
        %1088 = vmatprep.subr.mxu0 0.0
        %1089 = vmatpush1.msra.mxu0 0.0
        %1090 = vmatprep.subr.mxu0 0.0
        %1091 = vmatpush1.msra.mxu0 0.0
        %1092 = vmatprep.subr.mxu0 0.0
        %1093 = vmatpush1.msra.mxu0 0.0
        %1094 = vmatprep.subr.mxu0 0.0
        %1095 = vmatpush1.msra.mxu0 0.0
        %1096 = vmatprep.subr.mxu0 0.0
        %1097 = vmatpush1.msra.mxu0 0.0
        %1098 = vmatprep.subr.mxu0 0.0
        %1099 = vmatpush1.msra.mxu0 0.0
        %1100 = vmatprep.subr.mxu0 0.0
        %1101 = vmatpush1.msra.mxu0 0.0
        %1102 = vmatprep.subr.mxu0 0.0
        %1103 = vmatpush1.msra.mxu0 0.0
        %1104 = vmatprep.subr.mxu0 0.0
        %1105 = vmatpush1.msra.mxu0 0.0
        %1106 = vmatprep.subr.mxu0 0.0
        %1107 = vmatpush1.msra.mxu0 0.0
        %1108 = vmatprep.subr.mxu0 0.0
        %1109 = vmatpush1.msra.mxu0 0.0
        %1110 = vmatprep.subr.mxu0 0.0
        %1111 = vmatpush1.msra.mxu0 0.0
        %1112 = vmatprep.subr.mxu0 0.0
        %1113 = vmatpush1.msra.mxu0 0.0
        %1114 = vmatprep.subr.mxu0 0.0
        %1115 = vmatpush1.msra.mxu0 0.0
        %1116 = vmatprep.subr.mxu0 0.0
        %1117 = vmatpush1.msra.mxu0 0.0
        %1118 = vmatprep.subr.mxu0 0.0
        %1119 = vmatpush1.msra.mxu0 0.0
        %1120 = vmatprep.subr.mxu0 0.0
        %1121 = vmatpush1.msra.mxu0 0.0
        %1122 = vmatprep.subr.mxu0 0.0
        %1123 = vmatpush1.msra.mxu0 0.0
        %1124 = vmatprep.mubr.f32.mxu0 0.0
        %1125 = vmatmul.mubr.f32.gmra.mrb[0].mxu0 %v1058
        %v1126 = vpop.f32.mrb[0].mxu0
        %v1127 = vadd.f32 0.0, %v1126
        %v1128 = vpop.f32.mrb[0].mxu0
        %1129 = vdwg.mxu0
        %v1131 = vsel %vm1012, %v1052, 0
        %1133 = vmatprep.subr.mxu0 0.0
        %1134 = vmatpush1.msra.mxu0 %v699
        %1135 = vmatprep.subr.mxu0 0.0
        %1136 = vmatpush1.msra.mxu0 0.0
        %1137 = vmatprep.subr.mxu0 0.0
        %1138 = vmatpush1.msra.mxu0 0.0
        %1139 = vmatprep.subr.mxu0 0.0
        %1140 = vmatpush1.msra.mxu0 0.0
        %1141 = vmatprep.subr.mxu0 0.0
        %1142 = vmatpush1.msra.mxu0 0.0
        %1143 = vmatprep.subr.mxu0 0.0
        %1144 = vmatpush1.msra.mxu0 0.0
        %1145 = vmatprep.subr.mxu0 0.0
        %1146 = vmatpush1.msra.mxu0 0.0
        %1147 = vmatprep.subr.mxu0 0.0
        %1148 = vmatpush1.msra.mxu0 0.0
        %1149 = vmatprep.subr.mxu0 0.0
        %1150 = vmatpush1.msra.mxu0 0.0
        %1151 = vmatprep.subr.mxu0 0.0
        %1152 = vmatpush1.msra.mxu0 0.0
        %1153 = vmatprep.subr.mxu0 0.0
        %1154 = vmatpush1.msra.mxu0 0.0
        %1155 = vmatprep.subr.mxu0 0.0
        %1156 = vmatpush1.msra.mxu0 0.0
        %1157 = vmatprep.subr.mxu0 0.0
        %1158 = vmatpush1.msra.mxu0 0.0
        %1159 = vmatprep.subr.mxu0 0.0
        %1160 = vmatpush1.msra.mxu0 0.0
        %1161 = vmatprep.subr.mxu0 0.0
        %1162 = vmatpush1.msra.mxu0 0.0
        %1163 = vmatprep.subr.mxu0 0.0
        %1164 = vmatpush1.msra.mxu0 0.0
        %1165 = vmatprep.subr.mxu0 0.0
        %1166 = vmatpush1.msra.mxu0 0.0
        %1167 = vmatprep.subr.mxu0 0.0
        %1168 = vmatpush1.msra.mxu0 0.0
        %1169 = vmatprep.subr.mxu0 0.0
        %1170 = vmatpush1.msra.mxu0 0.0
        %1171 = vmatprep.subr.mxu0 0.0
        %1172 = vmatpush1.msra.mxu0 0.0
        %1173 = vmatprep.subr.mxu0 0.0
        %1174 = vmatpush1.msra.mxu0 0.0
        %1175 = vmatprep.subr.mxu0 0.0
        %1176 = vmatpush1.msra.mxu0 0.0
        %1177 = vmatprep.subr.mxu0 0.0
        %1178 = vmatpush1.msra.mxu0 0.0
        %1179 = vmatprep.subr.mxu0 0.0
        %1180 = vmatpush1.msra.mxu0 0.0
        %1181 = vmatprep.subr.mxu0 0.0
        %1182 = vmatpush1.msra.mxu0 0.0
        %1183 = vmatprep.subr.mxu0 0.0
        %1184 = vmatpush1.msra.mxu0 0.0
        %1185 = vmatprep.subr.mxu0 0.0
        %1186 = vmatpush1.msra.mxu0 0.0
        %1187 = vmatprep.subr.mxu0 0.0
        %1188 = vmatpush1.msra.mxu0 0.0
        %1189 = vmatprep.subr.mxu0 0.0
        %1190 = vmatpush1.msra.mxu0 0.0
        %1191 = vmatprep.subr.mxu0 0.0
        %1192 = vmatpush1.msra.mxu0 0.0
        %1193 = vmatprep.subr.mxu0 0.0
        %1194 = vmatpush1.msra.mxu0 0.0
        %1195 = vmatprep.subr.mxu0 0.0
        %1196 = vmatpush1.msra.mxu0 0.0
        %1197 = vmatprep.mubr.f32.mxu0 0.0
        %1198 = vmatmul.mubr.f32.gmra.mrb[0].mxu0 %v1131
        %v1199 = vpop.f32.mrb[0].mxu0
        %v1200 = vadd.f32 0.0, %v1199
        %v1201 = vpop.f32.mrb[0].mxu0
        %1202 = vdwg.mxu0
        %v1204 = vsel %vm1012, %v1054, 0
        %1206 = vmatprep.subr.mxu0 0.0
        %1207 = vmatpush1.msra.mxu0 %v702
        %1208 = vmatprep.subr.mxu0 0.0
        %1209 = vmatpush1.msra.mxu0 0.0
        %1210 = vmatprep.subr.mxu0 0.0
        %1211 = vmatpush1.msra.mxu0 0.0
        %1212 = vmatprep.subr.mxu0 0.0
        %1213 = vmatpush1.msra.mxu0 0.0
        %1214 = vmatprep.subr.mxu0 0.0
        %1215 = vmatpush1.msra.mxu0 0.0
        %1216 = vmatprep.subr.mxu0 0.0
        %1217 = vmatpush1.msra.mxu0 0.0
        %1218 = vmatprep.subr.mxu0 0.0
        %1219 = vmatpush1.msra.mxu0 0.0
        %1220 = vmatprep.subr.mxu0 0.0
        %1221 = vmatpush1.msra.mxu0 0.0
        %1222 = vmatprep.subr.mxu0 0.0
        %1223 = vmatpush1.msra.mxu0 0.0
        %1224 = vmatprep.subr.mxu0 0.0
        %1225 = vmatpush1.msra.mxu0 0.0
        %1226 = vmatprep.subr.mxu0 0.0
        %1227 = vmatpush1.msra.mxu0 0.0
        %1228 = vmatprep.subr.mxu0 0.0
        %1229 = vmatpush1.msra.mxu0 0.0
        %1230 = vmatprep.subr.mxu0 0.0
        %1231 = vmatpush1.msra.mxu0 0.0
        %1232 = vmatprep.subr.mxu0 0.0
        %1233 = vmatpush1.msra.mxu0 0.0
        %1234 = vmatprep.subr.mxu0 0.0
        %1235 = vmatpush1.msra.mxu0 0.0
        %1236 = vmatprep.subr.mxu0 0.0
        %1237 = vmatpush1.msra.mxu0 0.0
        %1238 = vmatprep.subr.mxu0 0.0
        %1239 = vmatpush1.msra.mxu0 0.0
        %1240 = vmatprep.subr.mxu0 0.0
        %1241 = vmatpush1.msra.mxu0 0.0
        %1242 = vmatprep.subr.mxu0 0.0
        %1243 = vmatpush1.msra.mxu0 0.0
        %1244 = vmatprep.subr.mxu0 0.0
        %1245 = vmatpush1.msra.mxu0 0.0
        %1246 = vmatprep.subr.mxu0 0.0
        %1247 = vmatpush1.msra.mxu0 0.0
        %1248 = vmatprep.subr.mxu0 0.0
        %1249 = vmatpush1.msra.mxu0 0.0
        %1250 = vmatprep.subr.mxu0 0.0
        %1251 = vmatpush1.msra.mxu0 0.0
        %1252 = vmatprep.subr.mxu0 0.0
        %1253 = vmatpush1.msra.mxu0 0.0
        %1254 = vmatprep.subr.mxu0 0.0
        %1255 = vmatpush1.msra.mxu0 0.0
        %1256 = vmatprep.subr.mxu0 0.0
        %1257 = vmatpush1.msra.mxu0 0.0
        %1258 = vmatprep.subr.mxu0 0.0
        %1259 = vmatpush1.msra.mxu0 0.0
        %1260 = vmatprep.subr.mxu0 0.0
        %1261 = vmatpush1.msra.mxu0 0.0
        %1262 = vmatprep.subr.mxu0 0.0
        %1263 = vmatpush1.msra.mxu0 0.0
        %1264 = vmatprep.subr.mxu0 0.0
        %1265 = vmatpush1.msra.mxu0 0.0
        %1266 = vmatprep.subr.mxu0 0.0
        %1267 = vmatpush1.msra.mxu0 0.0
        %1268 = vmatprep.subr.mxu0 0.0
        %1269 = vmatpush1.msra.mxu0 0.0
        %1270 = vmatprep.mubr.f32.mxu0 0.0
        %1271 = vmatmul.mubr.f32.gmra.mrb[0].mxu0 %v1204
        %v1272 = vpop.f32.mrb[0].mxu0
        %v1273 = vadd.f32 0.0, %v1272
        %v1274 = vpop.f32.mrb[0].mxu0
        %1275 = vdwg.mxu0
        %v1277 = vsel %vm1012, %v1056, 0
        %1279 = vmatprep.subr.mxu0 0.0
        %1280 = vmatpush1.msra.mxu0 %v705
        %1281 = vmatprep.subr.mxu0 0.0
        %1282 = vmatpush1.msra.mxu0 0.0
        %1283 = vmatprep.subr.mxu0 0.0
        %1284 = vmatpush1.msra.mxu0 0.0
        %1285 = vmatprep.subr.mxu0 0.0
        %1286 = vmatpush1.msra.mxu0 0.0
        %1287 = vmatprep.subr.mxu0 0.0
        %1288 = vmatpush1.msra.mxu0 0.0
        %1289 = vmatprep.subr.mxu0 0.0
        %1290 = vmatpush1.msra.mxu0 0.0
        %1291 = vmatprep.subr.mxu0 0.0
        %1292 = vmatpush1.msra.mxu0 0.0
        %1293 = vmatprep.subr.mxu0 0.0
        %1294 = vmatpush1.msra.mxu0 0.0
        %1295 = vmatprep.subr.mxu0 0.0
        %1296 = vmatpush1.msra.mxu0 0.0
        %1297 = vmatprep.subr.mxu0 0.0
        %1298 = vmatpush1.msra.mxu0 0.0
        %1299 = vmatprep.subr.mxu0 0.0
        %1300 = vmatpush1.msra.mxu0 0.0
        %1301 = vmatprep.subr.mxu0 0.0
        %1302 = vmatpush1.msra.mxu0 0.0
        %1303 = vmatprep.subr.mxu0 0.0
        %1304 = vmatpush1.msra.mxu0 0.0
        %1305 = vmatprep.subr.mxu0 0.0
        %1306 = vmatpush1.msra.mxu0 0.0
        %1307 = vmatprep.subr.mxu0 0.0
        %1308 = vmatpush1.msra.mxu0 0.0
        %1309 = vmatprep.subr.mxu0 0.0
        %1310 = vmatpush1.msra.mxu0 0.0
        %1311 = vmatprep.subr.mxu0 0.0
        %1312 = vmatpush1.msra.mxu0 0.0
        %1313 = vmatprep.subr.mxu0 0.0
        %1314 = vmatpush1.msra.mxu0 0.0
        %1315 = vmatprep.subr.mxu0 0.0
        %1316 = vmatpush1.msra.mxu0 0.0
        %1317 = vmatprep.subr.mxu0 0.0
        %1318 = vmatpush1.msra.mxu0 0.0
        %1319 = vmatprep.subr.mxu0 0.0
        %1320 = vmatpush1.msra.mxu0 0.0
        %1321 = vmatprep.subr.mxu0 0.0
        %1322 = vmatpush1.msra.mxu0 0.0
        %1323 = vmatprep.subr.mxu0 0.0
        %1324 = vmatpush1.msra.mxu0 0.0
        %1325 = vmatprep.subr.mxu0 0.0
        %1326 = vmatpush1.msra.mxu0 0.0
        %1327 = vmatprep.subr.mxu0 0.0
        %1328 = vmatpush1.msra.mxu0 0.0
        %1329 = vmatprep.subr.mxu0 0.0
        %1330 = vmatpush1.msra.mxu0 0.0
        %1331 = vmatprep.subr.mxu0 0.0
        %1332 = vmatpush1.msra.mxu0 0.0
        %1333 = vmatprep.subr.mxu0 0.0
        %1334 = vmatpush1.msra.mxu0 0.0
        %1335 = vmatprep.subr.mxu0 0.0
        %1336 = vmatpush1.msra.mxu0 0.0
        %1337 = vmatprep.subr.mxu0 0.0
        %1338 = vmatpush1.msra.mxu0 0.0
        %1339 = vmatprep.subr.mxu0 0.0
        %1340 = vmatpush1.msra.mxu0 0.0
        %1341 = vmatprep.subr.mxu0 0.0
        %1342 = vmatpush1.msra.mxu0 0.0
        %1343 = vmatprep.mubr.f32.mxu0 0.0
        %1344 = vmatmul.mubr.f32.gmra.mrb[0].mxu0 %v1277
        %v1345 = vpop.f32.mrb[0].mxu0
        %v1346 = vadd.f32 0.0, %v1345
        %v1347 = vpop.f32.mrb[0].mxu0
        %1348 = vdwg.mxu0
        %1350 = vrot.lane.b32.xlu0 %v1200, 16
        %v1351 = vpop.permute.xlu0 %1350
        %1354 = vrot.lane.b32.xlu0 %v1273, 32
        %v1355 = vpop.permute.xlu0 %1354
        %1358 = vrot.lane.b32.xlu0 %v1346, 48
        %v1359 = vpop.permute.xlu0 %1358
        %v1361 = vsel %vm709, %v1127, %v1351
        %v1362 = vsel %vm512, %v1361, %v1355
        %vm1363 = vcmask 392192
        %v1364 = vsel %vm1363, %v1362, %v1359
        %v1365 = vld [vmem:[%s5] sm:$0xff]
        %v1366 = vld [vmem:[%s5 + $0x8] sm:$0xff]
        %v1367 = vld [vmem:[%s5 + $0x10] sm:$0xff]
        %v1368 = vld [vmem:[%s5 + $0x18] sm:$0xff]
        %v1369 = vld [vmem:[%s5 + $0x20] sm:$0xff]
        %v1370 = vld [vmem:[%s5 + $0x28] sm:$0xff]
        %v1371 = vld [vmem:[%s5 + $0x30] sm:$0xff]
        %v1372 = vld [vmem:[%s5 + $0x38] sm:$0xff]
        %v1373 = vlaneseq
        %v1374 = vshrl.u32 %v1373, 7
        %v1375 = vsub.s32 0, %v1374
        %v1376 = vrot.slane %v586, %v1375
        %v1378 = vsel %vm615, %v1364, 0
        %1380 = vmatprep.subr.mxu0 0.0
        %1381 = vmatpush1.msra.mxu0 %v1365
        %1382 = vmatprep.subr.mxu0 0.0
        %1383 = vmatpush1.msra.mxu0 %v1366
        %1384 = vmatprep.subr.mxu0 0.0
        %1385 = vmatpush1.msra.mxu0 %v1367
        %1386 = vmatprep.subr.mxu0 0.0
        %1387 = vmatpush1.msra.mxu0 %v1368
        %1388 = vmatprep.subr.mxu0 0.0
        %1389 = vmatpush1.msra.mxu0 %v1369
        %1390 = vmatprep.subr.mxu0 0.0
        %1391 = vmatpush1.msra.mxu0 %v1370
        %1392 = vmatprep.subr.mxu0 0.0
        %1393 = vmatpush1.msra.mxu0 %v1371
        %1394 = vmatprep.subr.mxu0 0.0
        %1395 = vmatpush1.msra.mxu0 %v1372
        %1396 = vmatprep.subr.mxu0 0.0
        %1397 = vmatpush1.msra.mxu0 0.0
        %1398 = vmatprep.subr.mxu0 0.0
        %1399 = vmatpush1.msra.mxu0 0.0
        %1400 = vmatprep.subr.mxu0 0.0
        %1401 = vmatpush1.msra.mxu0 0.0
        %1402 = vmatprep.subr.mxu0 0.0
        %1403 = vmatpush1.msra.mxu0 0.0
        %1404 = vmatprep.subr.mxu0 0.0
        %1405 = vmatpush1.msra.mxu0 0.0
        %1406 = vmatprep.subr.mxu0 0.0
        %1407 = vmatpush1.msra.mxu0 0.0
        %1408 = vmatprep.subr.mxu0 0.0
        %1409 = vmatpush1.msra.mxu0 0.0
        %1410 = vmatprep.subr.mxu0 0.0
        %1411 = vmatpush1.msra.mxu0 0.0
        %1412 = vmatprep.subr.mxu0 0.0
        %1413 = vmatpush1.msra.mxu0 0.0
        %1414 = vmatprep.subr.mxu0 0.0
        %1415 = vmatpush1.msra.mxu0 0.0
        %1416 = vmatprep.subr.mxu0 0.0
        %1417 = vmatpush1.msra.mxu0 0.0
        %1418 = vmatprep.subr.mxu0 0.0
        %1419 = vmatpush1.msra.mxu0 0.0
        %1420 = vmatprep.subr.mxu0 0.0
        %1421 = vmatpush1.msra.mxu0 0.0
        %1422 = vmatprep.subr.mxu0 0.0
        %1423 = vmatpush1.msra.mxu0 0.0
        %1424 = vmatprep.subr.mxu0 0.0
        %1425 = vmatpush1.msra.mxu0 0.0
        %1426 = vmatprep.subr.mxu0 0.0
        %1427 = vmatpush1.msra.mxu0 0.0
        %1428 = vmatprep.subr.mxu0 0.0
        %1429 = vmatpush1.msra.mxu0 0.0
        %1430 = vmatprep.subr.mxu0 0.0
        %1431 = vmatpush1.msra.mxu0 0.0
        %1432 = vmatprep.subr.mxu0 0.0
        %1433 = vmatpush1.msra.mxu0 0.0
        %1434 = vmatprep.subr.mxu0 0.0
        %1435 = vmatpush1.msra.mxu0 0.0
        %1436 = vmatprep.subr.mxu0 0.0
        %1437 = vmatpush1.msra.mxu0 0.0
        %1438 = vmatprep.subr.mxu0 0.0
        %1439 = vmatpush1.msra.mxu0 0.0
        %1440 = vmatprep.subr.mxu0 0.0
        %1441 = vmatpush1.msra.mxu0 0.0
        %1442 = vmatprep.subr.mxu0 0.0
        %1443 = vmatpush1.msra.mxu0 0.0
        %1444 = vmatprep.mubr.f32.mxu0 0.0
        %1445 = vmatmul.mubr.f32.gmra.mrb[0].mxu0 %v1378
        %v1446 = vpop.f32.mrb[0].mxu0
        %v1447 = vadd.f32 %v1376, %v1446
        %v1448 = vpop.f32.mrb[0].mxu0
        %1449 = vdwg.mxu0
        %v1450 = vadd.f32 %v583, %v1447
        %v1451 = vsel %vm615, %v1450, 0.0
        %1452 = vadd.xlane.f32.xlu0 %v1451
        %v1453 = vpop.xlane.xlu0 %1452
        %v1454 = vrcp.pop 64.0
        %v1455 = vmul.f32 %v1453, %v1454
        %v1456 = vsub.f32 %v1450, %v1455
        %v1457 = vmul.f32 %v1456, %v1456
        %v1458 = vsel %vm615, %v1457, 0.0
        %1459 = vadd.xlane.f32.xlu0 %v1458
        %v1460 = vpop.xlane.xlu0 %1459
        %v1461 = vmul.f32 %v1460, %v1454
        %v1462 = vadd.f32 %v1461, 1e-05
        %v1463 = vrsqrt.pop %v1462
        %v1464 = vmul.f32 %v1456, %v1463
        %v1465 = vlaneseq
        %v1466 = vshrl.u32 %v1465, 7
        %v1467 = vsub.s32 1, %v1466
        %v1468 = vrot.slane %v586, %v1467
        %v1469 = vmul.f32 %v1464, %v1468
        %v1470 = vlaneseq
        %v1471 = vshrl.u32 %v1470, 7
        %v1472 = vsub.s32 2, %v1471
        %v1473 = vrot.slane %v586, %v1472
        %v1474 = vadd.f32 %v1469, %v1473
        %v1475 = vld [vmem:[#allocation8] sm:$0xff]
        %v1476 = vld [vmem:[#allocation8 + $0x8] sm:$0xff]
        %v1477 = vld [vmem:[#allocation8 + $0x10] sm:$0xff]
        %v1478 = vld [vmem:[#allocation8 + $0x18] sm:$0xff]
        %v1479 = vld [vmem:[#allocation8 + $0x20] sm:$0xff]
        %v1480 = vld [vmem:[#allocation8 + $0x28] sm:$0xff]
        %v1481 = vld [vmem:[#allocation8 + $0x30] sm:$0xff]
        %v1482 = vld [vmem:[#allocation8 + $0x38] sm:$0xff]
        %v1483 = vld [vmem:[#allocation10] sm:$0x1]
        %v1485 = vlaneseq
        %v1486 = vshrl.u32 %v1485, 7
        %v1487 = vsub.s32 0, %v1486
        %v1488 = vrot.slane %v1483, %v1487
        %v1491 = vsel %vm615, %v1474, 0
        %1493 = vmatprep.subr.mxu0 0.0
        %1494 = vmatpush1.msra.mxu0 %v1475
        %1495 = vmatprep.subr.mxu0 0.0
        %1496 = vmatpush1.msra.mxu0 %v1476
        %1497 = vmatprep.subr.mxu0 0.0
        %1498 = vmatpush1.msra.mxu0 %v1477
        %1499 = vmatprep.subr.mxu0 0.0
        %1500 = vmatpush1.msra.mxu0 %v1478
        %1501 = vmatprep.subr.mxu0 0.0
        %1502 = vmatpush1.msra.mxu0 %v1479
        %1503 = vmatprep.subr.mxu0 0.0
        %1504 = vmatpush1.msra.mxu0 %v1480
        %1505 = vmatprep.subr.mxu0 0.0
        %1506 = vmatpush1.msra.mxu0 %v1481
        %1507 = vmatprep.subr.mxu0 0.0
        %1508 = vmatpush1.msra.mxu0 %v1482
        %1509 = vmatprep.subr.mxu0 0.0
        %1510 = vmatpush1.msra.mxu0 0.0
        %1511 = vmatprep.subr.mxu0 0.0
        %1512 = vmatpush1.msra.mxu0 0.0
        %1513 = vmatprep.subr.mxu0 0.0
        %1514 = vmatpush1.msra.mxu0 0.0
        %1515 = vmatprep.subr.mxu0 0.0
        %1516 = vmatpush1.msra.mxu0 0.0
        %1517 = vmatprep.subr.mxu0 0.0
        %1518 = vmatpush1.msra.mxu0 0.0
        %1519 = vmatprep.subr.mxu0 0.0
        %1520 = vmatpush1.msra.mxu0 0.0
        %1521 = vmatprep.subr.mxu0 0.0
        %1522 = vmatpush1.msra.mxu0 0.0
        %1523 = vmatprep.subr.mxu0 0.0
        %1524 = vmatpush1.msra.mxu0 0.0
        %1525 = vmatprep.subr.mxu0 0.0
        %1526 = vmatpush1.msra.mxu0 0.0
        %1527 = vmatprep.subr.mxu0 0.0
        %1528 = vmatpush1.msra.mxu0 0.0
        %1529 = vmatprep.subr.mxu0 0.0
        %1530 = vmatpush1.msra.mxu0 0.0
        %1531 = vmatprep.subr.mxu0 0.0
        %1532 = vmatpush1.msra.mxu0 0.0
        %1533 = vmatprep.subr.mxu0 0.0
        %1534 = vmatpush1.msra.mxu0 0.0
        %1535 = vmatprep.subr.mxu0 0.0
        %1536 = vmatpush1.msra.mxu0 0.0
        %1537 = vmatprep.subr.mxu0 0.0
        %1538 = vmatpush1.msra.mxu0 0.0
        %1539 = vmatprep.subr.mxu0 0.0
        %1540 = vmatpush1.msra.mxu0 0.0
        %1541 = vmatprep.subr.mxu0 0.0
        %1542 = vmatpush1.msra.mxu0 0.0
        %1543 = vmatprep.subr.mxu0 0.0
        %1544 = vmatpush1.msra.mxu0 0.0
        %1545 = vmatprep.subr.mxu0 0.0
        %1546 = vmatpush1.msra.mxu0 0.0
        %1547 = vmatprep.subr.mxu0 0.0
        %1548 = vmatpush1.msra.mxu0 0.0
        %1549 = vmatprep.subr.mxu0 0.0
        %1550 = vmatpush1.msra.mxu0 0.0
        %1551 = vmatprep.subr.mxu0 0.0
        %1552 = vmatpush1.msra.mxu0 0.0
        %1553 = vmatprep.subr.mxu0 0.0
        %1554 = vmatpush1.msra.mxu0 0.0
        %1555 = vmatprep.subr.mxu0 0.0
        %1556 = vmatpush1.msra.mxu0 0.0
        %1557 = vmatprep.mubr.f32.mxu0 0.0
        %1558 = vmatmul.mubr.f32.gmra.mrb[0].mxu0 %v1491
        %v1559 = vpop.f32.mrb[0].mxu0
        %v1560 = vadd.f32 %v1488, %v1559
        %v1561 = vpop.f32.mrb[0].mxu0
        %1562 = vdwg.mxu0
        %v1563 = vmax.f32 %v1560, 0.0
        %v1564 = vld [vmem:[%s8] sm:$0xff]
        %v1565 = vld [vmem:[%s8 + $0x8] sm:$0xff]
        %v1566 = vld [vmem:[%s8 + $0x10] sm:$0xff]
        %v1567 = vld [vmem:[%s8 + $0x18] sm:$0xff]
        %v1568 = vld [vmem:[%s8 + $0x20] sm:$0xff]
        %v1569 = vld [vmem:[%s8 + $0x28] sm:$0xff]
        %v1570 = vld [vmem:[%s8 + $0x30] sm:$0xff]
        %v1571 = vld [vmem:[%s8 + $0x38] sm:$0xff]
        %v1572 = vld [vmem:[%s8 + $0x40] sm:$0xff]
        %v1573 = vld [vmem:[%s8 + $0x48] sm:$0xff]
        %v1574 = vld [vmem:[%s8 + $0x50] sm:$0xff]
        %v1575 = vld [vmem:[%s8 + $0x58] sm:$0xff]
        %v1576 = vld [vmem:[%s8 + $0x60] sm:$0xff]
        %v1577 = vld [vmem:[%s8 + $0x68] sm:$0xff]
        %v1578 = vld [vmem:[%s8 + $0x70] sm:$0xff]
        %v1579 = vld [vmem:[%s8 + $0x78] sm:$0xff]
        %v1580 = vlaneseq
        %v1581 = vshrl.u32 %v1580, 7
        %v1582 = vsub.s32 3, %v1581
        %v1583 = vrot.slane %v586, %v1582
        %1584 = vmatprep.subr.mxu0 0.0
        %1585 = vmatpush1.msra.mxu0 %v1564
        %1586 = vmatprep.subr.mxu0 0.0
        %1587 = vmatpush1.msra.mxu0 %v1565
        %1588 = vmatprep.subr.mxu0 0.0
        %1589 = vmatpush1.msra.mxu0 %v1566
        %1590 = vmatprep.subr.mxu0 0.0
        %1591 = vmatpush1.msra.mxu0 %v1567
        %1592 = vmatprep.subr.mxu0 0.0
        %1593 = vmatpush1.msra.mxu0 %v1568
        %1594 = vmatprep.subr.mxu0 0.0
        %1595 = vmatpush1.msra.mxu0 %v1569
        %1596 = vmatprep.subr.mxu0 0.0
        %1597 = vmatpush1.msra.mxu0 %v1570
        %1598 = vmatprep.subr.mxu0 0.0
        %1599 = vmatpush1.msra.mxu0 %v1571
        %1600 = vmatprep.subr.mxu0 0.0
        %1601 = vmatpush1.msra.mxu0 %v1572
        %1602 = vmatprep.subr.mxu0 0.0
        %1603 = vmatpush1.msra.mxu0 %v1573
        %1604 = vmatprep.subr.mxu0 0.0
        %1605 = vmatpush1.msra.mxu0 %v1574
        %1606 = vmatprep.subr.mxu0 0.0
        %1607 = vmatpush1.msra.mxu0 %v1575
        %1608 = vmatprep.subr.mxu0 0.0
        %1609 = vmatpush1.msra.mxu0 %v1576
        %1610 = vmatprep.subr.mxu0 0.0
        %1611 = vmatpush1.msra.mxu0 %v1577
        %1612 = vmatprep.subr.mxu0 0.0
        %1613 = vmatpush1.msra.mxu0 %v1578
        %1614 = vmatprep.subr.mxu0 0.0
        %1615 = vmatpush1.msra.mxu0 %v1579
        %1616 = vmatprep.subr.mxu0 0.0
        %1617 = vmatpush1.msra.mxu0 0.0
        %1618 = vmatprep.subr.mxu0 0.0
        %1619 = vmatpush1.msra.mxu0 0.0
        %1620 = vmatprep.subr.mxu0 0.0
        %1621 = vmatpush1.msra.mxu0 0.0
        %1622 = vmatprep.subr.mxu0 0.0
        %1623 = vmatpush1.msra.mxu0 0.0
        %1624 = vmatprep.subr.mxu0 0.0
        %1625 = vmatpush1.msra.mxu0 0.0
        %1626 = vmatprep.subr.mxu0 0.0
        %1627 = vmatpush1.msra.mxu0 0.0
        %1628 = vmatprep.subr.mxu0 0.0
        %1629 = vmatpush1.msra.mxu0 0.0
        %1630 = vmatprep.subr.mxu0 0.0
        %1631 = vmatpush1.msra.mxu0 0.0
        %1632 = vmatprep.subr.mxu0 0.0
        %1633 = vmatpush1.msra.mxu0 0.0
        %1634 = vmatprep.subr.mxu0 0.0
        %1635 = vmatpush1.msra.mxu0 0.0
        %1636 = vmatprep.subr.mxu0 0.0
        %1637 = vmatpush1.msra.mxu0 0.0
        %1638 = vmatprep.subr.mxu0 0.0
        %1639 = vmatpush1.msra.mxu0 0.0
        %1640 = vmatprep.subr.mxu0 0.0
        %1641 = vmatpush1.msra.mxu0 0.0
        %1642 = vmatprep.subr.mxu0 0.0
        %1643 = vmatpush1.msra.mxu0 0.0
        %1644 = vmatprep.subr.mxu0 0.0
        %1645 = vmatpush1.msra.mxu0 0.0
        %1646 = vmatprep.subr.mxu0 0.0
        %1647 = vmatpush1.msra.mxu0 0.0
        %1648 = vmatprep.mubr.f32.mxu0 0.0
        %1649 = vmatmul.mubr.f32.gmra.mrb[0].mxu0 %v1563
        %v1650 = vpop.f32.mrb[0].mxu0
        %v1651 = vadd.f32 %v1583, %v1650
        %v1652 = vpop.f32.mrb[0].mxu0
        %1653 = vdwg.mxu0
        %v1654 = vadd.f32 %v1474, %v1651
        %v1655 = vsel %vm615, %v1654, 0.0
        %1656 = vadd.xlane.f32.xlu0 %v1655
        %v1657 = vpop.xlane.xlu0 %1656
        %v1658 = vmul.f32 %v1657, %v1454
        %v1659 = vsub.f32 %v1654, %v1658
        %v1660 = vmul.f32 %v1659, %v1659
        %v1661 = vsel %vm615, %v1660, 0.0
        %1662 = vadd.xlane.f32.xlu0 %v1661
        %v1663 = vpop.xlane.xlu0 %1662
        %v1664 = vmul.f32 %v1663, %v1454
        %v1665 = vadd.f32 %v1664, 1e-05
        %v1666 = vrsqrt.pop %v1665
        %v1667 = vmul.f32 %v1659, %v1666
        %v1668 = vlaneseq
        %v1669 = vshrl.u32 %v1668, 7
        %v1670 = vsub.s32 4, %v1669
        %v1671 = vrot.slane %v586, %v1670
        %v1672 = vmul.f32 %v1667, %v1671
        %v1673 = vlaneseq
        %v1674 = vshrl.u32 %v1673, 7
        %v1675 = vsub.s32 5, %v1674
        %v1676 = vrot.slane %v586, %v1675
        %v1677 = vadd.f32 %v1672, %v1676
        %s1678 = scalar_lea.vmem %s9, 8
        %v1679 = vld [vmem:[%s1678] sm:$0x3f]
        %s1680 = scalar_lea.vmem %s3, 128
        %v1681 = vld [vmem:[%s1680] sm:$0xff]
        %v1682 = vld [vmem:[%s1680 + $0x8] sm:$0xff]
        %v1683 = vld [vmem:[%s1680 + $0x10] sm:$0xff]
        %v1684 = vld [vmem:[%s1680 + $0x18] sm:$0xff]
        %v1685 = vld [vmem:[%s1680 + $0x20] sm:$0xff]
        %v1686 = vld [vmem:[%s1680 + $0x28] sm:$0xff]
        %v1687 = vld [vmem:[%s1680 + $0x30] sm:$0xff]
        %v1688 = vld [vmem:[%s1680 + $0x38] sm:$0xff]
        %v1689 = vld [vmem:[%s1680 + $0x40] sm:$0xff]
        %v1690 = vld [vmem:[%s1680 + $0x48] sm:$0xff]
        %v1691 = vld [vmem:[%s1680 + $0x50] sm:$0xff]
        %v1692 = vld [vmem:[%s1680 + $0x58] sm:$0xff]
        %v1693 = vld [vmem:[%s1680 + $0x60] sm:$0xff]
        %v1694 = vld [vmem:[%s1680 + $0x68] sm:$0xff]
        %v1695 = vld [vmem:[%s1680 + $0x70] sm:$0xff]
        %v1696 = vld [vmem:[%s1680 + $0x78] sm:$0xff]
        %s1697 = scalar_lea.vmem [#allocation7], 2
        %v1698 = vld [vmem:[%s1697] sm:$0x3]
        %v1700 = vlaneseq
        %v1701 = vshrl.u32 %v1700, 7
        %v1702 = vsub.s32 0, %v1701
        %v1703 = vrot.slane %v1698, %v1702
        %v1704 = vlaneseq
        %v1705 = vshrl.u32 %v1704, 7
        %v1706 = vsub.s32 1, %v1705
        %v1707 = vrot.slane %v1698, %v1706
        %v1711 = vsel %vm615, %v1677, 0
        %1713 = vmatprep.subr.mxu0 %v1682
        %1714 = vmatpush1.msra.mxu0 %v1681
        %1715 = vmatprep.subr.mxu0 %v1684
        %1716 = vmatpush1.msra.mxu0 %v1683
        %1717 = vmatprep.subr.mxu0 %v1686
        %1718 = vmatpush1.msra.mxu0 %v1685
        %1719 = vmatprep.subr.mxu0 %v1688
        %1720 = vmatpush1.msra.mxu0 %v1687
        %1721 = vmatprep.subr.mxu0 %v1690
        %1722 = vmatpush1.msra.mxu0 %v1689
        %1723 = vmatprep.subr.mxu0 %v1692
        %1724 = vmatpush1.msra.mxu0 %v1691
        %1725 = vmatprep.subr.mxu0 %v1694
        %1726 = vmatpush1.msra.mxu0 %v1693
        %1727 = vmatprep.subr.mxu0 %v1696
        %1728 = vmatpush1.msra.mxu0 %v1695
        %1729 = vmatprep.subr.mxu0 0.0
        %1730 = vmatpush1.msra.mxu0 0.0
        %1731 = vmatprep.subr.mxu0 0.0
        %1732 = vmatpush1.msra.mxu0 0.0
        %1733 = vmatprep.subr.mxu0 0.0
        %1734 = vmatpush1.msra.mxu0 0.0
        %1735 = vmatprep.subr.mxu0 0.0
        %1736 = vmatpush1.msra.mxu0 0.0
        %1737 = vmatprep.subr.mxu0 0.0
        %1738 = vmatpush1.msra.mxu0 0.0
        %1739 = vmatprep.subr.mxu0 0.0
        %1740 = vmatpush1.msra.mxu0 0.0
        %1741 = vmatprep.subr.mxu0 0.0
        %1742 = vmatpush1.msra.mxu0 0.0
        %1743 = vmatprep.subr.mxu0 0.0
        %1744 = vmatpush1.msra.mxu0 0.0
        %1745 = vmatprep.subr.mxu0 0.0
        %1746 = vmatpush1.msra.mxu0 0.0
        %1747 = vmatprep.subr.mxu0 0.0
        %1748 = vmatpush1.msra.mxu0 0.0
        %1749 = vmatprep.subr.mxu0 0.0
        %1750 = vmatpush1.msra.mxu0 0.0
        %1751 = vmatprep.subr.mxu0 0.0
        %1752 = vmatpush1.msra.mxu0 0.0
        %1753 = vmatprep.subr.mxu0 0.0
        %1754 = vmatpush1.msra.mxu0 0.0
        %1755 = vmatprep.subr.mxu0 0.0
        %1756 = vmatpush1.msra.mxu0 0.0
        %1757 = vmatprep.subr.mxu0 0.0
        %1758 = vmatpush1.msra.mxu0 0.0
        %1759 = vmatprep.subr.mxu0 0.0
        %1760 = vmatpush1.msra.mxu0 0.0
        %1761 = vmatprep.subr.mxu0 0.0
        %1762 = vmatpush1.msra.mxu0 0.0
        %1763 = vmatprep.subr.mxu0 0.0
        %1764 = vmatpush1.msra.mxu0 0.0
        %1765 = vmatprep.subr.mxu0 0.0
        %1766 = vmatpush1.msra.mxu0 0.0
        %1767 = vmatprep.subr.mxu0 0.0
        %1768 = vmatpush1.msra.mxu0 0.0
        %1769 = vmatprep.subr.mxu0 0.0
        %1770 = vmatpush1.msra.mxu0 0.0
        %1771 = vmatprep.subr.mxu0 0.0
        %1772 = vmatpush1.msra.mxu0 0.0
        %1773 = vmatprep.subr.mxu0 0.0
        %1774 = vmatpush1.msra.mxu0 0.0
        %1775 = vmatprep.subr.mxu0 0.0
        %1776 = vmatpush1.msra.mxu0 0.0
        %1777 = vmatprep.mubr.f32.mxu0 0.0
        %1778 = vmatmul.mubr.f32.gmra.mrb[0].mxu0 %v1711
        %v1779 = vpop.f32.mrb[0].mxu0
        %v1780 = vadd.f32 %v1703, %v1779
        %v1781 = vpop.f32.mrb[0].mxu0
        %v1782 = vadd.f32 %v1707, %v1781
        %1783 = vdwg.mxu0
        %1785 = vrot.lane.b32.xlu0 %v1780, 112
        %v1786 = vpop.permute.xlu0 %1785
        %1787 = vrot.lane.b32.xlu0 %v1780, 96
        %v1788 = vpop.permute.xlu0 %1787
        %1789 = vrot.lane.b32.xlu0 %v1780, 80
        %v1790 = vpop.permute.xlu0 %1789
        %1792 = vrot.lane.b32.xlu0 %v1782, 112
        %v1793 = vpop.permute.xlu0 %1792
        %1795 = vrot.lane.b32.xlu0 %v1782, 96
        %v1796 = vpop.permute.xlu0 %1795
        %1798 = vrot.lane.b32.xlu0 %v1782, 80
        %v1799 = vpop.permute.xlu0 %1798
        %1801 = vrot.lane.b32.xlu0 %v1780, 64
        %v1802 = vpop.permute.xlu0 %1801
        %v1803 = vsel %vm709, %v1780, 0
        %v1805 = vsel %vm709, %v1802, 0
        %1807 = vmatprep.subr.mxu0 0.0
        %1808 = vmatpush1.xpose.msra.mxu0 %v1805
        %1809 = vmatprep.subr.mxu0 0.0
        %1810 = vmatpush1.xpose.msra.mxu0 0.0
        %1811 = vmatprep.subr.mxu0 0.0
        %1812 = vmatpush1.xpose.msra.mxu0 0.0
        %1813 = vmatprep.subr.mxu0 0.0
        %1814 = vmatpush1.xpose.msra.mxu0 0.0
        %1815 = vmatprep.subr.mxu0 0.0
        %1816 = vmatpush1.xpose.msra.mxu0 0.0
        %1817 = vmatprep.subr.mxu0 0.0
        %1818 = vmatpush1.xpose.msra.mxu0 0.0
        %1819 = vmatprep.subr.mxu0 0.0
        %1820 = vmatpush1.xpose.msra.mxu0 0.0
        %1821 = vmatprep.subr.mxu0 0.0
        %1822 = vmatpush1.xpose.msra.mxu0 0.0
        %1823 = vmatprep.subr.mxu0 0.0
        %1824 = vmatpush1.xpose.msra.mxu0 0.0
        %1825 = vmatprep.subr.mxu0 0.0
        %1826 = vmatpush1.xpose.msra.mxu0 0.0
        %1827 = vmatprep.subr.mxu0 0.0
        %1828 = vmatpush1.xpose.msra.mxu0 0.0
        %1829 = vmatprep.subr.mxu0 0.0
        %1830 = vmatpush1.xpose.msra.mxu0 0.0
        %1831 = vmatprep.subr.mxu0 0.0
        %1832 = vmatpush1.xpose.msra.mxu0 0.0
        %1833 = vmatprep.subr.mxu0 0.0
        %1834 = vmatpush1.xpose.msra.mxu0 0.0
        %1835 = vmatprep.subr.mxu0 0.0
        %1836 = vmatpush1.xpose.msra.mxu0 0.0
        %1837 = vmatprep.subr.mxu0 0.0
        %1838 = vmatpush1.xpose.msra.mxu0 0.0
        %1839 = vmatprep.subr.mxu0 0.0
        %1840 = vmatpush1.xpose.msra.mxu0 0.0
        %1841 = vmatprep.subr.mxu0 0.0
        %1842 = vmatpush1.xpose.msra.mxu0 0.0
        %1843 = vmatprep.subr.mxu0 0.0
        %1844 = vmatpush1.xpose.msra.mxu0 0.0
        %1845 = vmatprep.subr.mxu0 0.0
        %1846 = vmatpush1.xpose.msra.mxu0 0.0
        %1847 = vmatprep.subr.mxu0 0.0
        %1848 = vmatpush1.xpose.msra.mxu0 0.0
        %1849 = vmatprep.subr.mxu0 0.0
        %1850 = vmatpush1.xpose.msra.mxu0 0.0
        %1851 = vmatprep.subr.mxu0 0.0
        %1852 = vmatpush1.xpose.msra.mxu0 0.0
        %1853 = vmatprep.subr.mxu0 0.0
        %1854 = vmatpush1.xpose.msra.mxu0 0.0
        %1855 = vmatprep.subr.mxu0 0.0
        %1856 = vmatpush1.xpose.msra.mxu0 0.0
        %1857 = vmatprep.subr.mxu0 0.0
        %1858 = vmatpush1.xpose.msra.mxu0 0.0
        %1859 = vmatprep.subr.mxu0 0.0
        %1860 = vmatpush1.xpose.msra.mxu0 0.0
        %1861 = vmatprep.subr.mxu0 0.0
        %1862 = vmatpush1.xpose.msra.mxu0 0.0
        %1863 = vmatprep.subr.mxu0 0.0
        %1864 = vmatpush1.xpose.msra.mxu0 0.0
        %1865 = vmatprep.subr.mxu0 0.0
        %1866 = vmatpush1.xpose.msra.mxu0 0.0
        %1867 = vmatprep.subr.mxu0 0.0
        %1868 = vmatpush1.xpose.msra.mxu0 0.0
        %1869 = vmatprep.subr.mxu0 0.0
        %1870 = vmatpush1.xpose.msra.mxu0 0.0
        %1871 = vmatprep.mubr.f32.mxu0 0.0
        %1872 = vmatmul.mubr.f32.gmra.mrb[0].mxu0 %v1803
        %v1873 = vpop.f32.mrb[0].mxu0
        %v1874 = vadd.f32 0.0, %v1873
        %v1875 = vpop.f32.mrb[0].mxu0
        %1876 = vdwg.mxu0
        %1877 = vrot.lane.b32.xlu0 %v1786, 64
        %v1878 = vpop.permute.xlu0 %1877
        %v1879 = vsel %vm709, %v1786, 0
        %v1881 = vsel %vm709, %v1878, 0
        %1883 = vmatprep.subr.mxu0 0.0
        %1884 = vmatpush1.xpose.msra.mxu0 %v1881
        %1885 = vmatprep.subr.mxu0 0.0
        %1886 = vmatpush1.xpose.msra.mxu0 0.0
        %1887 = vmatprep.subr.mxu0 0.0
        %1888 = vmatpush1.xpose.msra.mxu0 0.0
        %1889 = vmatprep.subr.mxu0 0.0
        %1890 = vmatpush1.xpose.msra.mxu0 0.0
        %1891 = vmatprep.subr.mxu0 0.0
        %1892 = vmatpush1.xpose.msra.mxu0 0.0
        %1893 = vmatprep.subr.mxu0 0.0
        %1894 = vmatpush1.xpose.msra.mxu0 0.0
        %1895 = vmatprep.subr.mxu0 0.0
        %1896 = vmatpush1.xpose.msra.mxu0 0.0
        %1897 = vmatprep.subr.mxu0 0.0
        %1898 = vmatpush1.xpose.msra.mxu0 0.0
        %1899 = vmatprep.subr.mxu0 0.0
        %1900 = vmatpush1.xpose.msra.mxu0 0.0
        %1901 = vmatprep.subr.mxu0 0.0
        %1902 = vmatpush1.xpose.msra.mxu0 0.0
        %1903 = vmatprep.subr.mxu0 0.0
        %1904 = vmatpush1.xpose.msra.mxu0 0.0
        %1905 = vmatprep.subr.mxu0 0.0
        %1906 = vmatpush1.xpose.msra.mxu0 0.0
        %1907 = vmatprep.subr.mxu0 0.0
        %1908 = vmatpush1.xpose.msra.mxu0 0.0
        %1909 = vmatprep.subr.mxu0 0.0
        %1910 = vmatpush1.xpose.msra.mxu0 0.0
        %1911 = vmatprep.subr.mxu0 0.0
        %1912 = vmatpush1.xpose.msra.mxu0 0.0
        %1913 = vmatprep.subr.mxu0 0.0
        %1914 = vmatpush1.xpose.msra.mxu0 0.0
        %1915 = vmatprep.subr.mxu0 0.0
        %1916 = vmatpush1.xpose.msra.mxu0 0.0
        %1917 = vmatprep.subr.mxu0 0.0
        %1918 = vmatpush1.xpose.msra.mxu0 0.0
        %1919 = vmatprep.subr.mxu0 0.0
        %1920 = vmatpush1.xpose.msra.mxu0 0.0
        %1921 = vmatprep.subr.mxu0 0.0
        %1922 = vmatpush1.xpose.msra.mxu0 0.0
        %1923 = vmatprep.subr.mxu0 0.0
        %1924 = vmatpush1.xpose.msra.mxu0 0.0
        %1925 = vmatprep.subr.mxu0 0.0
        %1926 = vmatpush1.xpose.msra.mxu0 0.0
        %1927 = vmatprep.subr.mxu0 0.0
        %1928 = vmatpush1.xpose.msra.mxu0 0.0
        %1929 = vmatprep.subr.mxu0 0.0
        %1930 = vmatpush1.xpose.msra.mxu0 0.0
        %1931 = vmatprep.subr.mxu0 0.0
        %1932 = vmatpush1.xpose.msra.mxu0 0.0
        %1933 = vmatprep.subr.mxu0 0.0
        %1934 = vmatpush1.xpose.msra.mxu0 0.0
        %1935 = vmatprep.subr.mxu0 0.0
        %1936 = vmatpush1.xpose.msra.mxu0 0.0
        %1937 = vmatprep.subr.mxu0 0.0
        %1938 = vmatpush1.xpose.msra.mxu0 0.0
        %1939 = vmatprep.subr.mxu0 0.0
        %1940 = vmatpush1.xpose.msra.mxu0 0.0
        %1941 = vmatprep.subr.mxu0 0.0
        %1942 = vmatpush1.xpose.msra.mxu0 0.0
        %1943 = vmatprep.subr.mxu0 0.0
        %1944 = vmatpush1.xpose.msra.mxu0 0.0
        %1945 = vmatprep.subr.mxu0 0.0
        %1946 = vmatpush1.xpose.msra.mxu0 0.0
        %1947 = vmatprep.mubr.f32.mxu0 0.0
        %1948 = vmatmul.mubr.f32.gmra.mrb[0].mxu0 %v1879
        %v1949 = vpop.f32.mrb[0].mxu0
        %v1950 = vadd.f32 0.0, %v1949
        %v1951 = vpop.f32.mrb[0].mxu0
        %1952 = vdwg.mxu0
        %1953 = vrot.lane.b32.xlu0 %v1788, 64
        %v1954 = vpop.permute.xlu0 %1953
        %v1955 = vsel %vm709, %v1788, 0
        %v1957 = vsel %vm709, %v1954, 0
        %1959 = vmatprep.subr.mxu0 0.0
        %1960 = vmatpush1.xpose.msra.mxu0 %v1957
        %1961 = vmatprep.subr.mxu0 0.0
        %1962 = vmatpush1.xpose.msra.mxu0 0.0
        %1963 = vmatprep.subr.mxu0 0.0
        %1964 = vmatpush1.xpose.msra.mxu0 0.0
        %1965 = vmatprep.subr.mxu0 0.0
        %1966 = vmatpush1.xpose.msra.mxu0 0.0
        %1967 = vmatprep.subr.mxu0 0.0
        %1968 = vmatpush1.xpose.msra.mxu0 0.0
        %1969 = vmatprep.subr.mxu0 0.0
        %1970 = vmatpush1.xpose.msra.mxu0 0.0
        %1971 = vmatprep.subr.mxu0 0.0
        %1972 = vmatpush1.xpose.msra.mxu0 0.0
        %1973 = vmatprep.subr.mxu0 0.0
        %1974 = vmatpush1.xpose.msra.mxu0 0.0
        %1975 = vmatprep.subr.mxu0 0.0
        %1976 = vmatpush1.xpose.msra.mxu0 0.0
        %1977 = vmatprep.subr.mxu0 0.0
        %1978 = vmatpush1.xpose.msra.mxu0 0.0
        %1979 = vmatprep.subr.mxu0 0.0
        %1980 = vmatpush1.xpose.msra.mxu0 0.0
        %1981 = vmatprep.subr.mxu0 0.0
        %1982 = vmatpush1.xpose.msra.mxu0 0.0
        %1983 = vmatprep.subr.mxu0 0.0
        %1984 = vmatpush1.xpose.msra.mxu0 0.0
        %1985 = vmatprep.subr.mxu0 0.0
        %1986 = vmatpush1.xpose.msra.mxu0 0.0
        %1987 = vmatprep.subr.mxu0 0.0
        %1988 = vmatpush1.xpose.msra.mxu0 0.0
        %1989 = vmatprep.subr.mxu0 0.0
        %1990 = vmatpush1.xpose.msra.mxu0 0.0
        %1991 = vmatprep.subr.mxu0 0.0
        %1992 = vmatpush1.xpose.msra.mxu0 0.0
        %1993 = vmatprep.subr.mxu0 0.0
        %1994 = vmatpush1.xpose.msra.mxu0 0.0
        %1995 = vmatprep.subr.mxu0 0.0
        %1996 = vmatpush1.xpose.msra.mxu0 0.0
        %1997 = vmatprep.subr.mxu0 0.0
        %1998 = vmatpush1.xpose.msra.mxu0 0.0
        %1999 = vmatprep.subr.mxu0 0.0
        %2000 = vmatpush1.xpose.msra.mxu0 0.0
        %2001 = vmatprep.subr.mxu0 0.0
        %2002 = vmatpush1.xpose.msra.mxu0 0.0
        %2003 = vmatprep.subr.mxu0 0.0
        %2004 = vmatpush1.xpose.msra.mxu0 0.0
        %2005 = vmatprep.subr.mxu0 0.0
        %2006 = vmatpush1.xpose.msra.mxu0 0.0
        %2007 = vmatprep.subr.mxu0 0.0
        %2008 = vmatpush1.xpose.msra.mxu0 0.0
        %2009 = vmatprep.subr.mxu0 0.0
        %2010 = vmatpush1.xpose.msra.mxu0 0.0
        %2011 = vmatprep.subr.mxu0 0.0
        %2012 = vmatpush1.xpose.msra.mxu0 0.0
        %2013 = vmatprep.subr.mxu0 0.0
        %2014 = vmatpush1.xpose.msra.mxu0 0.0
        %2015 = vmatprep.subr.mxu0 0.0
        %2016 = vmatpush1.xpose.msra.mxu0 0.0
        %2017 = vmatprep.subr.mxu0 0.0
        %2018 = vmatpush1.xpose.msra.mxu0 0.0
        %2019 = vmatprep.subr.mxu0 0.0
        %2020 = vmatpush1.xpose.msra.mxu0 0.0
        %2021 = vmatprep.subr.mxu0 0.0
        %2022 = vmatpush1.xpose.msra.mxu0 0.0
        %2023 = vmatprep.mubr.f32.mxu0 0.0
        %2024 = vmatmul.mubr.f32.gmra.mrb[0].mxu0 %v1955
        %v2025 = vpop.f32.mrb[0].mxu0
        %v2026 = vadd.f32 0.0, %v2025
        %v2027 = vpop.f32.mrb[0].mxu0
        %2028 = vdwg.mxu0
        %2029 = vrot.lane.b32.xlu0 %v1790, 64
        %v2030 = vpop.permute.xlu0 %2029
        %v2031 = vsel %vm709, %v1790, 0
        %v2033 = vsel %vm709, %v2030, 0
        %2035 = vmatprep.subr.mxu0 0.0
        %2036 = vmatpush1.xpose.msra.mxu0 %v2033
        %2037 = vmatprep.subr.mxu0 0.0
        %2038 = vmatpush1.xpose.msra.mxu0 0.0
        %2039 = vmatprep.subr.mxu0 0.0
        %2040 = vmatpush1.xpose.msra.mxu0 0.0
        %2041 = vmatprep.subr.mxu0 0.0
        %2042 = vmatpush1.xpose.msra.mxu0 0.0
        %2043 = vmatprep.subr.mxu0 0.0
        %2044 = vmatpush1.xpose.msra.mxu0 0.0
        %2045 = vmatprep.subr.mxu0 0.0
        %2046 = vmatpush1.xpose.msra.mxu0 0.0
        %2047 = vmatprep.subr.mxu0 0.0
        %2048 = vmatpush1.xpose.msra.mxu0 0.0
        %2049 = vmatprep.subr.mxu0 0.0
        %2050 = vmatpush1.xpose.msra.mxu0 0.0
        %2051 = vmatprep.subr.mxu0 0.0
        %2052 = vmatpush1.xpose.msra.mxu0 0.0
        %2053 = vmatprep.subr.mxu0 0.0
        %2054 = vmatpush1.xpose.msra.mxu0 0.0
        %2055 = vmatprep.subr.mxu0 0.0
        %2056 = vmatpush1.xpose.msra.mxu0 0.0
        %2057 = vmatprep.subr.mxu0 0.0
        %2058 = vmatpush1.xpose.msra.mxu0 0.0
        %2059 = vmatprep.subr.mxu0 0.0
        %2060 = vmatpush1.xpose.msra.mxu0 0.0
        %2061 = vmatprep.subr.mxu0 0.0
        %2062 = vmatpush1.xpose.msra.mxu0 0.0
        %2063 = vmatprep.subr.mxu0 0.0
        %2064 = vmatpush1.xpose.msra.mxu0 0.0
        %2065 = vmatprep.subr.mxu0 0.0
        %2066 = vmatpush1.xpose.msra.mxu0 0.0
        %2067 = vmatprep.subr.mxu0 0.0
        %2068 = vmatpush1.xpose.msra.mxu0 0.0
        %2069 = vmatprep.subr.mxu0 0.0
        %2070 = vmatpush1.xpose.msra.mxu0 0.0
        %2071 = vmatprep.subr.mxu0 0.0
        %2072 = vmatpush1.xpose.msra.mxu0 0.0
        %2073 = vmatprep.subr.mxu0 0.0
        %2074 = vmatpush1.xpose.msra.mxu0 0.0
        %2075 = vmatprep.subr.mxu0 0.0
        %2076 = vmatpush1.xpose.msra.mxu0 0.0
        %2077 = vmatprep.subr.mxu0 0.0
        %2078 = vmatpush1.xpose.msra.mxu0 0.0
        %2079 = vmatprep.subr.mxu0 0.0
        %2080 = vmatpush1.xpose.msra.mxu0 0.0
        %2081 = vmatprep.subr.mxu0 0.0
        %2082 = vmatpush1.xpose.msra.mxu0 0.0
        %2083 = vmatprep.subr.mxu0 0.0
        %2084 = vmatpush1.xpose.msra.mxu0 0.0
        %2085 = vmatprep.subr.mxu0 0.0
        %2086 = vmatpush1.xpose.msra.mxu0 0.0
        %2087 = vmatprep.subr.mxu0 0.0
        %2088 = vmatpush1.xpose.msra.mxu0 0.0
        %2089 = vmatprep.subr.mxu0 0.0
        %2090 = vmatpush1.xpose.msra.mxu0 0.0
        %2091 = vmatprep.subr.mxu0 0.0
        %2092 = vmatpush1.xpose.msra.mxu0 0.0
        %2093 = vmatprep.subr.mxu0 0.0
        %2094 = vmatpush1.xpose.msra.mxu0 0.0
        %2095 = vmatprep.subr.mxu0 0.0
        %2096 = vmatpush1.xpose.msra.mxu0 0.0
        %2097 = vmatprep.subr.mxu0 0.0
        %2098 = vmatpush1.xpose.msra.mxu0 0.0
        %2099 = vmatprep.mubr.f32.mxu0 0.0
        %2100 = vmatmul.mubr.f32.gmra.mrb[0].mxu0 %v2031
        %v2101 = vpop.f32.mrb[0].mxu0
        %v2102 = vadd.f32 0.0, %v2101
        %v2103 = vpop.f32.mrb[0].mxu0
        %2104 = vdwg.mxu0
        %v2105 = vsel %vm1012, %v1874, -inf
        %2106 = vmax.xlane.f32.xlu0 %v2105
        %v2107 = vpop.xlane.xlu0 %2106
        %v2108 = vsel %vm1012, %v1950, -inf
        %2109 = vmax.xlane.f32.xlu0 %v2108
        %v2110 = vpop.xlane.xlu0 %2109
        %v2111 = vsel %vm1012, %v2026, -inf
        %2112 = vmax.xlane.f32.xlu0 %v2111
        %v2113 = vpop.xlane.xlu0 %2112
        %v2114 = vsel %vm1012, %v2102, -inf
        %2115 = vmax.xlane.f32.xlu0 %v2114
        %v2116 = vpop.xlane.xlu0 %2115
        %v2117 = vsub.f32 %v1874, %v2107
        %v2118 = vsub.f32 %v1950, %v2110
        %v2119 = vsub.f32 %v2026, %v2113
        %v2120 = vsub.f32 %v2102, %v2116
        %v2121 = vmul.f32 %v2117, 1.442695
        %v2122 = vpow.pop %v2121
        %v2123 = vmul.f32 %v2118, 1.442695
        %v2124 = vpow.pop %v2123
        %v2125 = vmul.f32 %v2119, 1.442695
        %v2126 = vpow.pop %v2125
        %v2127 = vmul.f32 %v2120, 1.442695
        %v2128 = vpow.pop %v2127
        %v2129 = vsel %vm1012, %v2122, 0.0
        %2130 = vadd.xlane.f32.xlu0 %v2129
        %v2131 = vpop.xlane.xlu0 %2130
        %v2132 = vsel %vm1012, %v2124, 0.0
        %2133 = vadd.xlane.f32.xlu0 %v2132
        %v2134 = vpop.xlane.xlu0 %2133
        %v2135 = vsel %vm1012, %v2126, 0.0
        %2136 = vadd.xlane.f32.xlu0 %v2135
        %v2137 = vpop.xlane.xlu0 %2136
        %v2138 = vsel %vm1012, %v2128, 0.0
        %2139 = vadd.xlane.f32.xlu0 %v2138
        %v2140 = vpop.xlane.xlu0 %2139
        %v2141 = vrcp.pop %v2131
        %v2142 = vmul.f32 %v2122, %v2141
        %v2143 = vrcp.pop %v2134
        %v2144 = vmul.f32 %v2124, %v2143
        %v2145 = vrcp.pop %v2137
        %v2146 = vmul.f32 %v2126, %v2145
        %v2147 = vrcp.pop %v2140
        %v2148 = vmul.f32 %v2128, %v2147
        %v2150 = vsel %vm1012, %v2142, 0
        %2152 = vmatprep.subr.mxu0 0.0
        %2153 = vmatpush1.msra.mxu0 %v1782
        %2154 = vmatprep.subr.mxu0 0.0
        %2155 = vmatpush1.msra.mxu0 0.0
        %2156 = vmatprep.subr.mxu0 0.0
        %2157 = vmatpush1.msra.mxu0 0.0
        %2158 = vmatprep.subr.mxu0 0.0
        %2159 = vmatpush1.msra.mxu0 0.0
        %2160 = vmatprep.subr.mxu0 0.0
        %2161 = vmatpush1.msra.mxu0 0.0
        %2162 = vmatprep.subr.mxu0 0.0
        %2163 = vmatpush1.msra.mxu0 0.0
        %2164 = vmatprep.subr.mxu0 0.0
        %2165 = vmatpush1.msra.mxu0 0.0
        %2166 = vmatprep.subr.mxu0 0.0
        %2167 = vmatpush1.msra.mxu0 0.0
        %2168 = vmatprep.subr.mxu0 0.0
        %2169 = vmatpush1.msra.mxu0 0.0
        %2170 = vmatprep.subr.mxu0 0.0
        %2171 = vmatpush1.msra.mxu0 0.0
        %2172 = vmatprep.subr.mxu0 0.0
        %2173 = vmatpush1.msra.mxu0 0.0
        %2174 = vmatprep.subr.mxu0 0.0
        %2175 = vmatpush1.msra.mxu0 0.0
        %2176 = vmatprep.subr.mxu0 0.0
        %2177 = vmatpush1.msra.mxu0 0.0
        %2178 = vmatprep.subr.mxu0 0.0
        %2179 = vmatpush1.msra.mxu0 0.0
        %2180 = vmatprep.subr.mxu0 0.0
        %2181 = vmatpush1.msra.mxu0 0.0
        %2182 = vmatprep.subr.mxu0 0.0
        %2183 = vmatpush1.msra.mxu0 0.0
        %2184 = vmatprep.subr.mxu0 0.0
        %2185 = vmatpush1.msra.mxu0 0.0
        %2186 = vmatprep.subr.mxu0 0.0
        %2187 = vmatpush1.msra.mxu0 0.0
        %2188 = vmatprep.subr.mxu0 0.0
        %2189 = vmatpush1.msra.mxu0 0.0
        %2190 = vmatprep.subr.mxu0 0.0
        %2191 = vmatpush1.msra.mxu0 0.0
        %2192 = vmatprep.subr.mxu0 0.0
        %2193 = vmatpush1.msra.mxu0 0.0
        %2194 = vmatprep.subr.mxu0 0.0
        %2195 = vmatpush1.msra.mxu0 0.0
        %2196 = vmatprep.subr.mxu0 0.0
        %2197 = vmatpush1.msra.mxu0 0.0
        %2198 = vmatprep.subr.mxu0 0.0
        %2199 = vmatpush1.msra.mxu0 0.0
        %2200 = vmatprep.subr.mxu0 0.0
        %2201 = vmatpush1.msra.mxu0 0.0
        %2202 = vmatprep.subr.mxu0 0.0
        %2203 = vmatpush1.msra.mxu0 0.0
        %2204 = vmatprep.subr.mxu0 0.0
        %2205 = vmatpush1.msra.mxu0 0.0
        %2206 = vmatprep.subr.mxu0 0.0
        %2207 = vmatpush1.msra.mxu0 0.0
        %2208 = vmatprep.subr.mxu0 0.0
        %2209 = vmatpush1.msra.mxu0 0.0
        %2210 = vmatprep.subr.mxu0 0.0
        %2211 = vmatpush1.msra.mxu0 0.0
        %2212 = vmatprep.subr.mxu0 0.0
        %2213 = vmatpush1.msra.mxu0 0.0
        %2214 = vmatprep.subr.mxu0 0.0
        %2215 = vmatpush1.msra.mxu0 0.0
        %2216 = vmatprep.mubr.f32.mxu0 0.0
        %2217 = vmatmul.mubr.f32.gmra.mrb[0].mxu0 %v2150
        %v2218 = vpop.f32.mrb[0].mxu0
        %v2219 = vadd.f32 0.0, %v2218
        %v2220 = vpop.f32.mrb[0].mxu0
        %2221 = vdwg.mxu0
        %v2223 = vsel %vm1012, %v2144, 0
        %2225 = vmatprep.subr.mxu0 0.0
        %2226 = vmatpush1.msra.mxu0 %v1793
        %2227 = vmatprep.subr.mxu0 0.0
        %2228 = vmatpush1.msra.mxu0 0.0
        %2229 = vmatprep.subr.mxu0 0.0
        %2230 = vmatpush1.msra.mxu0 0.0
        %2231 = vmatprep.subr.mxu0 0.0
        %2232 = vmatpush1.msra.mxu0 0.0
        %2233 = vmatprep.subr.mxu0 0.0
        %2234 = vmatpush1.msra.mxu0 0.0
        %2235 = vmatprep.subr.mxu0 0.0
        %2236 = vmatpush1.msra.mxu0 0.0
        %2237 = vmatprep.subr.mxu0 0.0
        %2238 = vmatpush1.msra.mxu0 0.0
        %2239 = vmatprep.subr.mxu0 0.0
        %2240 = vmatpush1.msra.mxu0 0.0
        %2241 = vmatprep.subr.mxu0 0.0
        %2242 = vmatpush1.msra.mxu0 0.0
        %2243 = vmatprep.subr.mxu0 0.0
        %2244 = vmatpush1.msra.mxu0 0.0
        %2245 = vmatprep.subr.mxu0 0.0
        %2246 = vmatpush1.msra.mxu0 0.0
        %2247 = vmatprep.subr.mxu0 0.0
        %2248 = vmatpush1.msra.mxu0 0.0
        %2249 = vmatprep.subr.mxu0 0.0
        %2250 = vmatpush1.msra.mxu0 0.0
        %2251 = vmatprep.subr.mxu0 0.0
        %2252 = vmatpush1.msra.mxu0 0.0
        %2253 = vmatprep.subr.mxu0 0.0
        %2254 = vmatpush1.msra.mxu0 0.0
        %2255 = vmatprep.subr.mxu0 0.0
        %2256 = vmatpush1.msra.mxu0 0.0
        %2257 = vmatprep.subr.mxu0 0.0
        %2258 = vmatpush1.msra.mxu0 0.0
        %2259 = vmatprep.subr.mxu0 0.0
        %2260 = vmatpush1.msra.mxu0 0.0
        %2261 = vmatprep.subr.mxu0 0.0
        %2262 = vmatpush1.msra.mxu0 0.0
        %2263 = vmatprep.subr.mxu0 0.0
        %2264 = vmatpush1.msra.mxu0 0.0
        %2265 = vmatprep.subr.mxu0 0.0
        %2266 = vmatpush1.msra.mxu0 0.0
        %2267 = vmatprep.subr.mxu0 0.0
        %2268 = vmatpush1.msra.mxu0 0.0
        %2269 = vmatprep.subr.mxu0 0.0
        %2270 = vmatpush1.msra.mxu0 0.0
        %2271 = vmatprep.subr.mxu0 0.0
        %2272 = vmatpush1.msra.mxu0 0.0
        %2273 = vmatprep.subr.mxu0 0.0
        %2274 = vmatpush1.msra.mxu0 0.0
        %2275 = vmatprep.subr.mxu0 0.0
        %2276 = vmatpush1.msra.mxu0 0.0
        %2277 = vmatprep.subr.mxu0 0.0
        %2278 = vmatpush1.msra.mxu0 0.0
        %2279 = vmatprep.subr.mxu0 0.0
        %2280 = vmatpush1.msra.mxu0 0.0
        %2281 = vmatprep.subr.mxu0 0.0
        %2282 = vmatpush1.msra.mxu0 0.0
        %2283 = vmatprep.subr.mxu0 0.0
        %2284 = vmatpush1.msra.mxu0 0.0
        %2285 = vmatprep.subr.mxu0 0.0
        %2286 = vmatpush1.msra.mxu0 0.0
        %2287 = vmatprep.subr.mxu0 0.0
        %2288 = vmatpush1.msra.mxu0 0.0
        %2289 = vmatprep.mubr.f32.mxu0 0.0
        %2290 = vmatmul.mubr.f32.gmra.mrb[0].mxu0 %v2223
        %v2291 = vpop.f32.mrb[0].mxu0
        %v2292 = vadd.f32 0.0, %v2291
        %v2293 = vpop.f32.mrb[0].mxu0
        %2294 = vdwg.mxu0
        %v2296 = vsel %vm1012, %v2146, 0
        %2298 = vmatprep.subr.mxu0 0.0
        %2299 = vmatpush1.msra.mxu0 %v1796
        %2300 = vmatprep.subr.mxu0 0.0
        %2301 = vmatpush1.msra.mxu0 0.0
        %2302 = vmatprep.subr.mxu0 0.0
        %2303 = vmatpush1.msra.mxu0 0.0
        %2304 = vmatprep.subr.mxu0 0.0
        %2305 = vmatpush1.msra.mxu0 0.0
        %2306 = vmatprep.subr.mxu0 0.0
        %2307 = vmatpush1.msra.mxu0 0.0
        %2308 = vmatprep.subr.mxu0 0.0
        %2309 = vmatpush1.msra.mxu0 0.0
        %2310 = vmatprep.subr.mxu0 0.0
        %2311 = vmatpush1.msra.mxu0 0.0
        %2312 = vmatprep.subr.mxu0 0.0
        %2313 = vmatpush1.msra.mxu0 0.0
        %2314 = vmatprep.subr.mxu0 0.0
        %2315 = vmatpush1.msra.mxu0 0.0
        %2316 = vmatprep.subr.mxu0 0.0
        %2317 = vmatpush1.msra.mxu0 0.0
        %2318 = vmatprep.subr.mxu0 0.0
        %2319 = vmatpush1.msra.mxu0 0.0
        %2320 = vmatprep.subr.mxu0 0.0
        %2321 = vmatpush1.msra.mxu0 0.0
        %2322 = vmatprep.subr.mxu0 0.0
        %2323 = vmatpush1.msra.mxu0 0.0
        %2324 = vmatprep.subr.mxu0 0.0
        %2325 = vmatpush1.msra.mxu0 0.0
        %2326 = vmatprep.subr.mxu0 0.0
        %2327 = vmatpush1.msra.mxu0 0.0
        %2328 = vmatprep.subr.mxu0 0.0
        %2329 = vmatpush1.msra.mxu0 0.0
        %2330 = vmatprep.subr.mxu0 0.0
        %2331 = vmatpush1.msra.mxu0 0.0
        %2332 = vmatprep.subr.mxu0 0.0
        %2333 = vmatpush1.msra.mxu0 0.0
        %2334 = vmatprep.subr.mxu0 0.0
        %2335 = vmatpush1.msra.mxu0 0.0
        %2336 = vmatprep.subr.mxu0 0.0
        %2337 = vmatpush1.msra.mxu0 0.0
        %2338 = vmatprep.subr.mxu0 0.0
        %2339 = vmatpush1.msra.mxu0 0.0
        %2340 = vmatprep.subr.mxu0 0.0
        %2341 = vmatpush1.msra.mxu0 0.0
        %2342 = vmatprep.subr.mxu0 0.0
        %2343 = vmatpush1.msra.mxu0 0.0
        %2344 = vmatprep.subr.mxu0 0.0
        %2345 = vmatpush1.msra.mxu0 0.0
        %2346 = vmatprep.subr.mxu0 0.0
        %2347 = vmatpush1.msra.mxu0 0.0
        %2348 = vmatprep.subr.mxu0 0.0
        %2349 = vmatpush1.msra.mxu0 0.0
        %2350 = vmatprep.subr.mxu0 0.0
        %2351 = vmatpush1.msra.mxu0 0.0
        %2352 = vmatprep.subr.mxu0 0.0
        %2353 = vmatpush1.msra.mxu0 0.0
        %2354 = vmatprep.subr.mxu0 0.0
        %2355 = vmatpush1.msra.mxu0 0.0
        %2356 = vmatprep.subr.mxu0 0.0
        %2357 = vmatpush1.msra.mxu0 0.0
        %2358 = vmatprep.subr.mxu0 0.0
        %2359 = vmatpush1.msra.mxu0 0.0
        %2360 = vmatprep.subr.mxu0 0.0
        %2361 = vmatpush1.msra.mxu0 0.0
        %2362 = vmatprep.mubr.f32.mxu0 0.0
        %2363 = vmatmul.mubr.f32.gmra.mrb[0].mxu0 %v2296
        %v2364 = vpop.f32.mrb[0].mxu0
        %v2365 = vadd.f32 0.0, %v2364
        %v2366 = vpop.f32.mrb[0].mxu0
        %2367 = vdwg.mxu0
        %v2369 = vsel %vm1012, %v2148, 0
        %2371 = vmatprep.subr.mxu0 0.0
        %2372 = vmatpush1.msra.mxu0 %v1799
        %2373 = vmatprep.subr.mxu0 0.0
        %2374 = vmatpush1.msra.mxu0 0.0
        %2375 = vmatprep.subr.mxu0 0.0
        %2376 = vmatpush1.msra.mxu0 0.0
        %2377 = vmatprep.subr.mxu0 0.0
        %2378 = vmatpush1.msra.mxu0 0.0
        %2379 = vmatprep.subr.mxu0 0.0
        %2380 = vmatpush1.msra.mxu0 0.0
        %2381 = vmatprep.subr.mxu0 0.0
        %2382 = vmatpush1.msra.mxu0 0.0
        %2383 = vmatprep.subr.mxu0 0.0
        %2384 = vmatpush1.msra.mxu0 0.0
        %2385 = vmatprep.subr.mxu0 0.0
        %2386 = vmatpush1.msra.mxu0 0.0
        %2387 = vmatprep.subr.mxu0 0.0
        %2388 = vmatpush1.msra.mxu0 0.0
        %2389 = vmatprep.subr.mxu0 0.0
        %2390 = vmatpush1.msra.mxu0 0.0
        %2391 = vmatprep.subr.mxu0 0.0
        %2392 = vmatpush1.msra.mxu0 0.0
        %2393 = vmatprep.subr.mxu0 0.0
        %2394 = vmatpush1.msra.mxu0 0.0
        %2395 = vmatprep.subr.mxu0 0.0
        %2396 = vmatpush1.msra.mxu0 0.0
        %2397 = vmatprep.subr.mxu0 0.0
        %2398 = vmatpush1.msra.mxu0 0.0
        %2399 = vmatprep.subr.mxu0 0.0
        %2400 = vmatpush1.msra.mxu0 0.0
        %2401 = vmatprep.subr.mxu0 0.0
        %2402 = vmatpush1.msra.mxu0 0.0
        %2403 = vmatprep.subr.mxu0 0.0
        %2404 = vmatpush1.msra.mxu0 0.0
        %2405 = vmatprep.subr.mxu0 0.0
        %2406 = vmatpush1.msra.mxu0 0.0
        %2407 = vmatprep.subr.mxu0 0.0
        %2408 = vmatpush1.msra.mxu0 0.0
        %2409 = vmatprep.subr.mxu0 0.0
        %2410 = vmatpush1.msra.mxu0 0.0
        %2411 = vmatprep.subr.mxu0 0.0
        %2412 = vmatpush1.msra.mxu0 0.0
        %2413 = vmatprep.subr.mxu0 0.0
        %2414 = vmatpush1.msra.mxu0 0.0
        %2415 = vmatprep.subr.mxu0 0.0
        %2416 = vmatpush1.msra.mxu0 0.0
        %2417 = vmatprep.subr.mxu0 0.0
        %2418 = vmatpush1.msra.mxu0 0.0
        %2419 = vmatprep.subr.mxu0 0.0
        %2420 = vmatpush1.msra.mxu0 0.0
        %2421 = vmatprep.subr.mxu0 0.0
        %2422 = vmatpush1.msra.mxu0 0.0
        %2423 = vmatprep.subr.mxu0 0.0
        %2424 = vmatpush1.msra.mxu0 0.0
        %2425 = vmatprep.subr.mxu0 0.0
        %2426 = vmatpush1.msra.mxu0 0.0
        %2427 = vmatprep.subr.mxu0 0.0
        %2428 = vmatpush1.msra.mxu0 0.0
        %2429 = vmatprep.subr.mxu0 0.0
        %2430 = vmatpush1.msra.mxu0 0.0
        %2431 = vmatprep.subr.mxu0 0.0
        %2432 = vmatpush1.msra.mxu0 0.0
        %2433 = vmatprep.subr.mxu0 0.0
        %2434 = vmatpush1.msra.mxu0 0.0
        %2435 = vmatprep.mubr.f32.mxu0 0.0
        %2436 = vmatmul.mubr.f32.gmra.mrb[0].mxu0 %v2369
        %v2437 = vpop.f32.mrb[0].mxu0
        %v2438 = vadd.f32 0.0, %v2437
        %v2439 = vpop.f32.mrb[0].mxu0
        %2440 = vdwg.mxu0
        %2442 = vrot.lane.b32.xlu0 %v2292, 16
        %v2443 = vpop.permute.xlu0 %2442
        %2446 = vrot.lane.b32.xlu0 %v2365, 32
        %v2447 = vpop.permute.xlu0 %2446
        %2450 = vrot.lane.b32.xlu0 %v2438, 48
        %v2451 = vpop.permute.xlu0 %2450
        %v2453 = vsel %vm709, %v2219, %v2443
        %v2454 = vsel %vm512, %v2453, %v2447
        %v2455 = vsel %vm1363, %v2454, %v2451
        %s2456 = scalar_lea.vmem %s5, 64
        %v2457 = vld [vmem:[%s2456] sm:$0xff]
        %v2458 = vld [vmem:[%s2456 + $0x8] sm:$0xff]
        %v2459 = vld [vmem:[%s2456 + $0x10] sm:$0xff]
        %v2460 = vld [vmem:[%s2456 + $0x18] sm:$0xff]
        %v2461 = vld [vmem:[%s2456 + $0x20] sm:$0xff]
        %v2462 = vld [vmem:[%s2456 + $0x28] sm:$0xff]
        %v2463 = vld [vmem:[%s2456 + $0x30] sm:$0xff]
        %v2464 = vld [vmem:[%s2456 + $0x38] sm:$0xff]
        %v2465 = vlaneseq
        %v2466 = vshrl.u32 %v2465, 7
        %v2467 = vsub.s32 0, %v2466
        %v2468 = vrot.slane %v1679, %v2467
        %v2470 = vsel %vm615, %v2455, 0
        %2472 = vmatprep.subr.mxu0 0.0
        %2473 = vmatpush1.msra.mxu0 %v2457
        %2474 = vmatprep.subr.mxu0 0.0
        %2475 = vmatpush1.msra.mxu0 %v2458
        %2476 = vmatprep.subr.mxu0 0.0
        %2477 = vmatpush1.msra.mxu0 %v2459
        %2478 = vmatprep.subr.mxu0 0.0
        %2479 = vmatpush1.msra.mxu0 %v2460
        %2480 = vmatprep.subr.mxu0 0.0
        %2481 = vmatpush1.msra.mxu0 %v2461
        %2482 = vmatprep.subr.mxu0 0.0
        %2483 = vmatpush1.msra.mxu0 %v2462
        %2484 = vmatprep.subr.mxu0 0.0
        %2485 = vmatpush1.msra.mxu0 %v2463
        %2486 = vmatprep.subr.mxu0 0.0
        %2487 = vmatpush1.msra.mxu0 %v2464
        %2488 = vmatprep.subr.mxu0 0.0
        %2489 = vmatpush1.msra.mxu0 0.0
        %2490 = vmatprep.subr.mxu0 0.0
        %2491 = vmatpush1.msra.mxu0 0.0
        %2492 = vmatprep.subr.mxu0 0.0
        %2493 = vmatpush1.msra.mxu0 0.0
        %2494 = vmatprep.subr.mxu0 0.0
        %2495 = vmatpush1.msra.mxu0 0.0
        %2496 = vmatprep.subr.mxu0 0.0
        %2497 = vmatpush1.msra.mxu0 0.0
        %2498 = vmatprep.subr.mxu0 0.0
        %2499 = vmatpush1.msra.mxu0 0.0
        %2500 = vmatprep.subr.mxu0 0.0
        %2501 = vmatpush1.msra.mxu0 0.0
        %2502 = vmatprep.subr.mxu0 0.0
        %2503 = vmatpush1.msra.mxu0 0.0
        %2504 = vmatprep.subr.mxu0 0.0
        %2505 = vmatpush1.msra.mxu0 0.0
        %2506 = vmatprep.subr.mxu0 0.0
        %2507 = vmatpush1.msra.mxu0 0.0
        %2508 = vmatprep.subr.mxu0 0.0
        %2509 = vmatpush1.msra.mxu0 0.0
        %2510 = vmatprep.subr.mxu0 0.0
        %2511 = vmatpush1.msra.mxu0 0.0
        %2512 = vmatprep.subr.mxu0 0.0
        %2513 = vmatpush1.msra.mxu0 0.0
        %2514 = vmatprep.subr.mxu0 0.0
        %2515 = vmatpush1.msra.mxu0 0.0
        %2516 = vmatprep.subr.mxu0 0.0
        %2517 = vmatpush1.msra.mxu0 0.0
        %2518 = vmatprep.subr.mxu0 0.0
        %2519 = vmatpush1.msra.mxu0 0.0
        %2520 = vmatprep.subr.mxu0 0.0
        %2521 = vmatpush1.msra.mxu0 0.0
        %2522 = vmatprep.subr.mxu0 0.0
        %2523 = vmatpush1.msra.mxu0 0.0
        %2524 = vmatprep.subr.mxu0 0.0
        %2525 = vmatpush1.msra.mxu0 0.0
        %2526 = vmatprep.subr.mxu0 0.0
        %2527 = vmatpush1.msra.mxu0 0.0
        %2528 = vmatprep.subr.mxu0 0.0
        %2529 = vmatpush1.msra.mxu0 0.0
        %2530 = vmatprep.subr.mxu0 0.0
        %2531 = vmatpush1.msra.mxu0 0.0
        %2532 = vmatprep.subr.mxu0 0.0
        %2533 = vmatpush1.msra.mxu0 0.0
        %2534 = vmatprep.subr.mxu0 0.0
        %2535 = vmatpush1.msra.mxu0 0.0
        %2536 = vmatprep.mubr.f32.mxu0 0.0
        %2537 = vmatmul.mubr.f32.gmra.mrb[0].mxu0 %v2470
        %v2538 = vpop.f32.mrb[0].mxu0
        %v2539 = vadd.f32 %v2468, %v2538
        %v2540 = vpop.f32.mrb[0].mxu0
        %2541 = vdwg.mxu0
        %v2542 = vadd.f32 %v1677, %v2539
        %v2543 = vsel %vm615, %v2542, 0.0
        %2544 = vadd.xlane.f32.xlu0 %v2543
        %v2545 = vpop.xlane.xlu0 %2544
        %v2546 = vmul.f32 %v2545, %v1454
        %v2547 = vsub.f32 %v2542, %v2546
        %v2548 = vmul.f32 %v2547, %v2547
        %v2549 = vsel %vm615, %v2548, 0.0
        %2550 = vadd.xlane.f32.xlu0 %v2549
        %v2551 = vpop.xlane.xlu0 %2550
        %v2552 = vmul.f32 %v2551, %v1454
        %v2553 = vadd.f32 %v2552, 1e-05
        %v2554 = vrsqrt.pop %v2553
        %v2555 = vmul.f32 %v2547, %v2554
        %v2556 = vlaneseq
        %v2557 = vshrl.u32 %v2556, 7
        %v2558 = vsub.s32 1, %v2557
        %v2559 = vrot.slane %v1679, %v2558
        %v2560 = vmul.f32 %v2555, %v2559
        %v2561 = vlaneseq
        %v2562 = vshrl.u32 %v2561, 7
        %v2563 = vsub.s32 2, %v2562
        %v2564 = vrot.slane %v1679, %v2563
        %v2565 = vadd.f32 %v2560, %v2564
        %s2566 = scalar_lea.vmem [#allocation8], 64
        %v2567 = vld [vmem:[%s2566] sm:$0xff]
        %v2568 = vld [vmem:[%s2566 + $0x8] sm:$0xff]
        %v2569 = vld [vmem:[%s2566 + $0x10] sm:$0xff]
        %v2570 = vld [vmem:[%s2566 + $0x18] sm:$0xff]
        %v2571 = vld [vmem:[%s2566 + $0x20] sm:$0xff]
        %v2572 = vld [vmem:[%s2566 + $0x28] sm:$0xff]
        %v2573 = vld [vmem:[%s2566 + $0x30] sm:$0xff]
        %v2574 = vld [vmem:[%s2566 + $0x38] sm:$0xff]
        %s2575 = scalar_lea.vmem [#allocation10], 1
        %v2576 = vld [vmem:[%s2575] sm:$0x1]
        %v2578 = vlaneseq
        %v2579 = vshrl.u32 %v2578, 7
        %v2580 = vsub.s32 0, %v2579
        %v2581 = vrot.slane %v2576, %v2580
        %v2584 = vsel %vm615, %v2565, 0
        %2586 = vmatprep.subr.mxu0 0.0
        %2587 = vmatpush1.msra.mxu0 %v2567
        %2588 = vmatprep.subr.mxu0 0.0
        %2589 = vmatpush1.msra.mxu0 %v2568
        %2590 = vmatprep.subr.mxu0 0.0
        %2591 = vmatpush1.msra.mxu0 %v2569
        %2592 = vmatprep.subr.mxu0 0.0
        %2593 = vmatpush1.msra.mxu0 %v2570
        %2594 = vmatprep.subr.mxu0 0.0
        %2595 = vmatpush1.msra.mxu0 %v2571
        %2596 = vmatprep.subr.mxu0 0.0
        %2597 = vmatpush1.msra.mxu0 %v2572
        %2598 = vmatprep.subr.mxu0 0.0
        %2599 = vmatpush1.msra.mxu0 %v2573
        %2600 = vmatprep.subr.mxu0 0.0
        %2601 = vmatpush1.msra.mxu0 %v2574
        %2602 = vmatprep.subr.mxu0 0.0
        %2603 = vmatpush1.msra.mxu0 0.0
        %2604 = vmatprep.subr.mxu0 0.0
        %2605 = vmatpush1.msra.mxu0 0.0
        %2606 = vmatprep.subr.mxu0 0.0
        %2607 = vmatpush1.msra.mxu0 0.0
        %2608 = vmatprep.subr.mxu0 0.0
        %2609 = vmatpush1.msra.mxu0 0.0
        %2610 = vmatprep.subr.mxu0 0.0
        %2611 = vmatpush1.msra.mxu0 0.0
        %2612 = vmatprep.subr.mxu0 0.0
        %2613 = vmatpush1.msra.mxu0 0.0
        %2614 = vmatprep.subr.mxu0 0.0
        %2615 = vmatpush1.msra.mxu0 0.0
        %2616 = vmatprep.subr.mxu0 0.0
        %2617 = vmatpush1.msra.mxu0 0.0
        %2618 = vmatprep.subr.mxu0 0.0
        %2619 = vmatpush1.msra.mxu0 0.0
        %2620 = vmatprep.subr.mxu0 0.0
        %2621 = vmatpush1.msra.mxu0 0.0
        %2622 = vmatprep.subr.mxu0 0.0
        %2623 = vmatpush1.msra.mxu0 0.0
        %2624 = vmatprep.subr.mxu0 0.0
        %2625 = vmatpush1.msra.mxu0 0.0
        %2626 = vmatprep.subr.mxu0 0.0
        %2627 = vmatpush1.msra.mxu0 0.0
        %2628 = vmatprep.subr.mxu0 0.0
        %2629 = vmatpush1.msra.mxu0 0.0
        %2630 = vmatprep.subr.mxu0 0.0
        %2631 = vmatpush1.msra.mxu0 0.0
        %2632 = vmatprep.subr.mxu0 0.0
        %2633 = vmatpush1.msra.mxu0 0.0
        %2634 = vmatprep.subr.mxu0 0.0
        %2635 = vmatpush1.msra.mxu0 0.0
        %2636 = vmatprep.subr.mxu0 0.0
        %2637 = vmatpush1.msra.mxu0 0.0
        %2638 = vmatprep.subr.mxu0 0.0
        %2639 = vmatpush1.msra.mxu0 0.0
        %2640 = vmatprep.subr.mxu0 0.0
        %2641 = vmatpush1.msra.mxu0 0.0
        %2642 = vmatprep.subr.mxu0 0.0
        %2643 = vmatpush1.msra.mxu0 0.0
        %2644 = vmatprep.subr.mxu0 0.0
        %2645 = vmatpush1.msra.mxu0 0.0
        %2646 = vmatprep.subr.mxu0 0.0
        %2647 = vmatpush1.msra.mxu0 0.0
        %2648 = vmatprep.subr.mxu0 0.0
        %2649 = vmatpush1.msra.mxu0 0.0
        %2650 = vmatprep.mubr.f32.mxu0 0.0
        %2651 = vmatmul.mubr.f32.gmra.mrb[0].mxu0 %v2584
        %v2652 = vpop.f32.mrb[0].mxu0
        %v2653 = vadd.f32 %v2581, %v2652
        %v2654 = vpop.f32.mrb[0].mxu0
        %2655 = vdwg.mxu0
        %v2656 = vmax.f32 %v2653, 0.0
        %s2657 = scalar_lea.vmem %s8, 128
        %v2658 = vld [vmem:[%s2657] sm:$0xff]
        %v2659 = vld [vmem:[%s2657 + $0x8] sm:$0xff]
        %v2660 = vld [vmem:[%s2657 + $0x10] sm:$0xff]
        %v2661 = vld [vmem:[%s2657 + $0x18] sm:$0xff]
        %v2662 = vld [vmem:[%s2657 + $0x20] sm:$0xff]
        %v2663 = vld [vmem:[%s2657 + $0x28] sm:$0xff]
        %v2664 = vld [vmem:[%s2657 + $0x30] sm:$0xff]
        %v2665 = vld [vmem:[%s2657 + $0x38] sm:$0xff]
        %v2666 = vld [vmem:[%s2657 + $0x40] sm:$0xff]
        %v2667 = vld [vmem:[%s2657 + $0x48] sm:$0xff]
        %v2668 = vld [vmem:[%s2657 + $0x50] sm:$0xff]
        %v2669 = vld [vmem:[%s2657 + $0x58] sm:$0xff]
        %v2670 = vld [vmem:[%s2657 + $0x60] sm:$0xff]
        %v2671 = vld [vmem:[%s2657 + $0x68] sm:$0xff]
        %v2672 = vld [vmem:[%s2657 + $0x70] sm:$0xff]
        %v2673 = vld [vmem:[%s2657 + $0x78] sm:$0xff]
        %v2674 = vlaneseq
        %v2675 = vshrl.u32 %v2674, 7
        %v2676 = vsub.s32 3, %v2675
        %v2677 = vrot.slane %v1679, %v2676
        %2678 = vmatprep.subr.mxu0 0.0
        %2679 = vmatpush1.msra.mxu0 %v2658
        %2680 = vmatprep.subr.mxu0 0.0
        %2681 = vmatpush1.msra.mxu0 %v2659
        %2682 = vmatprep.subr.mxu0 0.0
        %2683 = vmatpush1.msra.mxu0 %v2660
        %2684 = vmatprep.subr.mxu0 0.0
        %2685 = vmatpush1.msra.mxu0 %v2661
        %2686 = vmatprep.subr.mxu0 0.0
        %2687 = vmatpush1.msra.mxu0 %v2662
        %2688 = vmatprep.subr.mxu0 0.0
        %2689 = vmatpush1.msra.mxu0 %v2663
        %2690 = vmatprep.subr.mxu0 0.0
        %2691 = vmatpush1.msra.mxu0 %v2664
        %2692 = vmatprep.subr.mxu0 0.0
        %2693 = vmatpush1.msra.mxu0 %v2665
        %2694 = vmatprep.subr.mxu0 0.0
        %2695 = vmatpush1.msra.mxu0 %v2666
        %2696 = vmatprep.subr.mxu0 0.0
        %2697 = vmatpush1.msra.mxu0 %v2667
        %2698 = vmatprep.subr.mxu0 0.0
        %2699 = vmatpush1.msra.mxu0 %v2668
        %2700 = vmatprep.subr.mxu0 0.0
        %2701 = vmatpush1.msra.mxu0 %v2669
        %2702 = vmatprep.subr.mxu0 0.0
        %2703 = vmatpush1.msra.mxu0 %v2670
        %2704 = vmatprep.subr.mxu0 0.0
        %2705 = vmatpush1.msra.mxu0 %v2671
        %2706 = vmatprep.subr.mxu0 0.0
        %2707 = vmatpush1.msra.mxu0 %v2672
        %2708 = vmatprep.subr.mxu0 0.0
        %2709 = vmatpush1.msra.mxu0 %v2673
        %2710 = vmatprep.subr.mxu0 0.0
        %2711 = vmatpush1.msra.mxu0 0.0
        %2712 = vmatprep.subr.mxu0 0.0
        %2713 = vmatpush1.msra.mxu0 0.0
        %2714 = vmatprep.subr.mxu0 0.0
        %2715 = vmatpush1.msra.mxu0 0.0
        %2716 = vmatprep.subr.mxu0 0.0
        %2717 = vmatpush1.msra.mxu0 0.0
        %2718 = vmatprep.subr.mxu0 0.0
        %2719 = vmatpush1.msra.mxu0 0.0
        %2720 = vmatprep.subr.mxu0 0.0
        %2721 = vmatpush1.msra.mxu0 0.0
        %2722 = vmatprep.subr.mxu0 0.0
        %2723 = vmatpush1.msra.mxu0 0.0
        %2724 = vmatprep.subr.mxu0 0.0
        %2725 = vmatpush1.msra.mxu0 0.0
        %2726 = vmatprep.subr.mxu0 0.0
        %2727 = vmatpush1.msra.mxu0 0.0
        %2728 = vmatprep.subr.mxu0 0.0
        %2729 = vmatpush1.msra.mxu0 0.0
        %2730 = vmatprep.subr.mxu0 0.0
        %2731 = vmatpush1.msra.mxu0 0.0
        %2732 = vmatprep.subr.mxu0 0.0
        %2733 = vmatpush1.msra.mxu0 0.0
        %2734 = vmatprep.subr.mxu0 0.0
        %2735 = vmatpush1.msra.mxu0 0.0
        %2736 = vmatprep.subr.mxu0 0.0
        %2737 = vmatpush1.msra.mxu0 0.0
        %2738 = vmatprep.subr.mxu0 0.0
        %2739 = vmatpush1.msra.mxu0 0.0
        %2740 = vmatprep.subr.mxu0 0.0
        %2741 = vmatpush1.msra.mxu0 0.0
        %2742 = vmatprep.mubr.f32.mxu0 0.0
        %2743 = vmatmul.mubr.f32.gmra.mrb[0].mxu0 %v2656
        %v2744 = vpop.f32.mrb[0].mxu0
        %v2745 = vadd.f32 %v2677, %v2744
        %v2746 = vpop.f32.mrb[0].mxu0
        %2747 = vdwg.mxu0
        %v2748 = vadd.f32 %v2565, %v2745
        %v2749 = vsel %vm615, %v2748, 0.0
        %2750 = vadd.xlane.f32.xlu0 %v2749
        %v2751 = vpop.xlane.xlu0 %2750
        %v2752 = vmul.f32 %v2751, %v1454
        %v2753 = vsub.f32 %v2748, %v2752
        %v2754 = vmul.f32 %v2753, %v2753
        %v2755 = vsel %vm615, %v2754, 0.0
        %2756 = vadd.xlane.f32.xlu0 %v2755
        %v2757 = vpop.xlane.xlu0 %2756
        %v2758 = vmul.f32 %v2757, %v1454
        %v2759 = vadd.f32 %v2758, 1e-05
        %v2760 = vrsqrt.pop %v2759
        %v2761 = vmul.f32 %v2753, %v2760
        %v2762 = vlaneseq
        %v2763 = vshrl.u32 %v2762, 7
        %v2764 = vsub.s32 4, %v2763
        %v2765 = vrot.slane %v1679, %v2764
        %v2766 = vmul.f32 %v2761, %v2765
        %v2767 = vlaneseq
        %v2768 = vshrl.u32 %v2767, 7
        %v2769 = vsub.s32 5, %v2768
        %v2770 = vrot.slane %v1679, %v2769
        %v2771 = vadd.f32 %v2766, %v2770
        %v2772 = vld [vmem:[%s10] sm:$0xff]
        %v2773 = vld [vmem:[%s10 + $0x8] sm:$0xff]
        %v2774 = vld [vmem:[%s10 + $0x10] sm:$0xff]
        %v2775 = vld [vmem:[%s10 + $0x18] sm:$0xff]
        %v2776 = vld [vmem:[%s10 + $0x20] sm:$0xff]
        %v2777 = vld [vmem:[%s10 + $0x28] sm:$0xff]
        %v2778 = vld [vmem:[%s10 + $0x30] sm:$0xff]
        %v2779 = vld [vmem:[%s10 + $0x38] sm:$0xff]
        %v2780 = vld [vmem:[#allocation11] sm:$0x1]
        %v2782 = vlaneseq
        %v2783 = vshrl.u32 %v2782, 7
        %v2784 = vsub.s32 0, %v2783
        %v2785 = vrot.slane %v2780, %v2784
        %v2788 = vsel %vm615, %v2771, 0
        %2790 = vmatprep.subr.mxu0 0.0
        %2791 = vmatpush1.msra.mxu0 %v2772
        %2792 = vmatprep.subr.mxu0 0.0
        %2793 = vmatpush1.msra.mxu0 %v2773
        %2794 = vmatprep.subr.mxu0 0.0
        %2795 = vmatpush1.msra.mxu0 %v2774
        %2796 = vmatprep.subr.mxu0 0.0
        %2797 = vmatpush1.msra.mxu0 %v2775
        %2798 = vmatprep.subr.mxu0 0.0
        %2799 = vmatpush1.msra.mxu0 %v2776
        %2800 = vmatprep.subr.mxu0 0.0
        %2801 = vmatpush1.msra.mxu0 %v2777
        %2802 = vmatprep.subr.mxu0 0.0
        %2803 = vmatpush1.msra.mxu0 %v2778
        %2804 = vmatprep.subr.mxu0 0.0
        %2805 = vmatpush1.msra.mxu0 %v2779
        %2806 = vmatprep.subr.mxu0 0.0
        %2807 = vmatpush1.msra.mxu0 0.0
        %2808 = vmatprep.subr.mxu0 0.0
        %2809 = vmatpush1.msra.mxu0 0.0
        %2810 = vmatprep.subr.mxu0 0.0
        %2811 = vmatpush1.msra.mxu0 0.0
        %2812 = vmatprep.subr.mxu0 0.0
        %2813 = vmatpush1.msra.mxu0 0.0
        %2814 = vmatprep.subr.mxu0 0.0
        %2815 = vmatpush1.msra.mxu0 0.0
        %2816 = vmatprep.subr.mxu0 0.0
        %2817 = vmatpush1.msra.mxu0 0.0
        %2818 = vmatprep.subr.mxu0 0.0
        %2819 = vmatpush1.msra.mxu0 0.0
        %2820 = vmatprep.subr.mxu0 0.0
        %2821 = vmatpush1.msra.mxu0 0.0
        %2822 = vmatprep.subr.mxu0 0.0
        %2823 = vmatpush1.msra.mxu0 0.0
        %2824 = vmatprep.subr.mxu0 0.0
        %2825 = vmatpush1.msra.mxu0 0.0
        %2826 = vmatprep.subr.mxu0 0.0
        %2827 = vmatpush1.msra.mxu0 0.0
        %2828 = vmatprep.subr.mxu0 0.0
        %2829 = vmatpush1.msra.mxu0 0.0
        %2830 = vmatprep.subr.mxu0 0.0
        %2831 = vmatpush1.msra.mxu0 0.0
        %2832 = vmatprep.subr.mxu0 0.0
        %2833 = vmatpush1.msra.mxu0 0.0
        %2834 = vmatprep.subr.mxu0 0.0
        %2835 = vmatpush1.msra.mxu0 0.0
        %2836 = vmatprep.subr.mxu0 0.0
        %2837 = vmatpush1.msra.mxu0 0.0
        %2838 = vmatprep.subr.mxu0 0.0
        %2839 = vmatpush1.msra.mxu0 0.0
        %2840 = vmatprep.subr.mxu0 0.0
        %2841 = vmatpush1.msra.mxu0 0.0
        %2842 = vmatprep.subr.mxu0 0.0
        %2843 = vmatpush1.msra.mxu0 0.0
        %2844 = vmatprep.subr.mxu0 0.0
        %2845 = vmatpush1.msra.mxu0 0.0
        %2846 = vmatprep.subr.mxu0 0.0
        %2847 = vmatpush1.msra.mxu0 0.0
        %2848 = vmatprep.subr.mxu0 0.0
        %2849 = vmatpush1.msra.mxu0 0.0
        %2850 = vmatprep.subr.mxu0 0.0
        %2851 = vmatpush1.msra.mxu0 0.0
        %2852 = vmatprep.subr.mxu0 0.0
        %2853 = vmatpush1.msra.mxu0 0.0
        %2854 = vmatprep.mubr.f32.mxu0 0.0
        %2855 = vmatmul.mubr.f32.gmra.mrb[0].mxu0 %v2788
        %v2856 = vpop.f32.mrb[0].mxu0
        %v2857 = vadd.f32 %v2785, %v2856
        %v2858 = vpop.f32.mrb[0].mxu0
        %2859 = vdwg.mxu0
        %v2860 = vxor.u32 %v2857, 2147483648
        %v2861 = vmul.f32 %v2860, 1.442695
        %v2862 = vpow.pop %v2861
        %v2863 = vadd.f32 %v2862, 1.0
        %v2864 = vrcp.pop %v2863
        %v2865 = vmul.f32 1.0, %v2864
        %2866 = vst [vmem:[%s499] sm:$0xff] %v2865
        %s2867 = sand.u32 %s297, 1
        %s2868 = scalar_lea.sflag [#allocation4], %s2867
        %s2869 = sand.u32 %s297, 1
        %s2870 = smul.addr %s2869, 8
        %s2871 = scalar_lea.vmem [#allocation13], %s2870
        // Predicated region
        $region93: #{mask_generator.1} parent=67 // pred_check
          %p2872 = pneg %p307
        $region94: #{mask_generator.1} parent=67 // pred_check_branch
          %2874 = sbr.rel (%p2872) target = $region96
        $region95: #{mask_generator.1} parent=67 // pred_region
          %s2876 = ssub.s32 128, 128
          %2877 = vsyncadd %s2868, %s2876
          %s2878 = smul.addr %s32, 128
          %s2879 = scalar_lea.hbm %s12, %s2878
          %s2881 = sshll.u32 %s2871, 4
          %s2882 = int_to_ptr.vmem [resolvable:$true] %s2881
          %2884 = dma.vmem_to_hbm [thread:$0]  %s2882, 128, %s2879, %s2868
        $region96: #{mask_generator.1} parent=67 // pred_fallthru
          _
      $region68: #{mask_generator.1} parent=5 // pred_fallthru
        _
      %p2885 = scmp.le.s32.totalorder 2, %s27
      // Predicated region
      $region97: #{mask_generator.1} parent=5 // pred_check
        %p2886 = pneg %p2885
      $region98: #{mask_generator.1} parent=5 // pred_check_branch
        %2888 = sbr.rel (%p2886) target = $region100
      $region99: #{mask_generator.1} parent=5 // pred_region
        %s2889 = ssub.s32 %s27, 2
        // Predicated region
        $region101: #{mask_generator.1} parent=99 // pred_check
          %p2890 = pneg %p313
        $region102: #{mask_generator.1} parent=99 // pred_check_branch
          %2892 = sbr.rel (%p2890) target = $region104
        $region103: #{mask_generator.1} parent=99 // pred_region
          %s2893 = sand.u32 %s298, 1
          %s2894 = scalar_lea.sflag [#allocation4], %s2893
          %s2895 = sand.u32 %s298, 1
          %s2896 = smul.addr %s2895, 8
          %s2897 = scalar_lea.vmem [#allocation13], %s2896
          %2898 = dma.done %s2894, 128
        $region104: #{mask_generator.1} parent=99 // pred_fallthru
          _
      $region100: #{mask_generator.1} parent=5 // pred_fallthru
        _
    $region6: #{mask_generator.1} parent=1 // loop_footer
      %s31 = sadd.s32 1, %s27
    $region7: #{mask_generator.1} parent=1 // loop_footer_branch
      %26 = sbr.rel target = $region3
    $region8: #{mask_generator.1} parent=1 // loop_exit
      _
    %2899 = vsyncpa [#allocation3], 1
    %s2900 = scalar_lea.sflag [#allocation3], 1
    %2901 = vsyncpa %s2900, 1
    %2902 = vsyncpa [#allocation6], 1
    %2903 = vsyncpa [#allocation9], 1
    %2904 = vsyncpa [#allocation12], 1
    %2905 = vsyncpa [#allocation4], 1
    %s2906 = scalar_lea.sflag [#allocation4], 1
    %2907 = vsyncpa %s2906, 1

</llo_original>
